<compile_context>
chip_gen: v5e
topology: v5e:2x2
jax: 0.10.0
libtpu: 0.0.40
codegen_flags: <defaults>
</compile_context>

<pallas_src>
import jax
import jax.numpy as jnp
import numpy as np
from jax.experimental import pallas as pl
from jax.experimental.pallas import tpu as pltpu

CH = 32            # channels (reduction=16 -> hidden=2, as in the module)
REDUCTION = 16
HIDDEN = CH // REDUCTION
KSIZE = 7          # spatial-attention conv kernel size
PAD = KSIZE // 2
H = 16
W = 16
HW = H * W         # 256 -> lane-dense (multiple of 128)


def _make_cbam_kernel(bb: int):
    """Kernel factory; `bb` is the (static) number of images per grid step."""
    inv_hw = 1.0 / float(HW)
    inv_c = 1.0 / float(CH)

    def kernel(x_ref, w1t_ref, w2t_ref, wconv_ref, o_ref):
        x = x_ref[...].astype(jnp.float32)                  # (bb, C, HW)

        # ---------- channel attention: batched MLP (2 MXU matmuls/step) ----
        avg_p = jnp.sum(x, axis=2) * inv_hw                 # (bb, C)
        max_p = jnp.max(x, axis=2)                          # (bb, C)
        pooled = jnp.concatenate([avg_p, max_p], axis=0)    # (2*bb, C)
        h = jnp.maximum(
            jnp.dot(pooled, w1t_ref[...],
                    precision=jax.lax.Precision.HIGHEST,
                    preferred_element_type=jnp.float32), 0.0)        # (2*bb, HID)
        mlp = jnp.dot(h, w2t_ref[...],
                      precision=jax.lax.Precision.HIGHEST,
                      preferred_element_type=jnp.float32)            # (2*bb, C)
        ch_gate = jax.nn.sigmoid(mlp[:bb] + mlp[bb:])        # (bb, C)
        xg = x * ch_gate[:, :, None]                         # (bb, C, HW)

        # ---------- spatial attention: 7x7 conv as ONE Toeplitz matmul -----
        avg_s = jnp.sum(xg, axis=1) * inv_c                  # (bb, HW)
        max_s = jnp.max(xg, axis=1)                          # (bb, HW)
        s_in = jnp.concatenate([avg_s, max_s], axis=1)       # (bb, 2*HW)
        conv = jnp.dot(s_in, wconv_ref[...],
                       precision=jax.lax.Precision.HIGHEST,
                       preferred_element_type=jnp.float32)   # (bb, HW)
        sp_gate = jax.nn.sigmoid(conv)                       # (bb, HW)

        o_ref[...] = (xg * sp_gate[:, None, :]).astype(o_ref.dtype)

    return kernel


def _build_conv_matrix(wc):
    """Banded (Toeplitz) matrix M of shape (2*HW, HW).

    out_flat = s_in_flat @ M reproduces the 7x7 'same'-padded conv over the
    2-channel (avg, max) spatial map. Conv weights, zero padding and all edge
    handling are baked into M, so the kernel needs no masks / rolls / pads.
    Index tables are static numpy; the weight gather stays jittable.
    """
    rows = np.arange(2 * HW)
    c_in = rows // HW
    yi = (rows % HW) // W
    xi = rows % W
    cols = np.arange(HW)
    yo = cols // W
    xo = cols % W
    dy = yi[:, None] - yo[None, :] + PAD                 # (2*HW, HW)
    dx = xi[:, None] - xo[None, :] + PAD
    valid = (dy >= 0) & (dy < KSIZE) & (dx >= 0) & (dx < KSIZE)
    tap = (c_in[:, None] * (KSIZE * KSIZE)
           + np.clip(dy, 0, KSIZE - 1) * KSIZE + np.clip(dx, 0, KSIZE - 1))
    wc_flat = jnp.reshape(wc, (-1,)).astype(jnp.float32)  # (2*K*K,)
    return jnp.where(jnp.asarray(valid), wc_flat[jnp.asarray(tap)],
                     jnp.float32(0.0))                     # (2*HW, HW)


def _default_batch_block(B: int) -> int:
    """Largest block (<=8 images) that still leaves >=4 pipelined grid steps;
    falls back to 1 image/step for small batches (still a multi-step grid).
    Same policy on every TPU generation."""
    best = 1
    for cand in range(1, min(8, B) + 1):
        if B % cand == 0 and B // cand >= 4:
            best = cand
    return best


def cbam_forward(x, w1, w2, wc, *, batch_block=None):
    B, C, Hx, Wx = x.shape
    assert C == CH and Hx == H and Wx == W
    if batch_block is None:
        batch_block = _default_batch_block(B)
    assert B % batch_block == 0
    grid = (B // batch_block,)

    x_flat = x.reshape(B, C, HW)                     # pure layout plumbing
    w1t = jnp.asarray(w1, jnp.float32).T             # (C, HIDDEN)
    w2t = jnp.asarray(w2, jnp.float32).T             # (HIDDEN, C)
    wconv = _build_conv_matrix(wc)                   # (2*HW, HW) = 512 KiB f32

    cost = pl.CostEstimate(
        flops=int(B * (2 * (2 * HW) * HW + 8 * CH * HIDDEN + 8 * CH * HW)),
        transcendentals=int(B * (CH + HW)),
        bytes_accessed=int(2 * B * CH * HW * 4 + 2 * HW * HW * 4),
    )

    out_flat = pl.pallas_call(
        _make_cbam_kernel(batch_block),
        out_shape=jax.ShapeDtypeStruct((B, C, HW), x.dtype),
        grid=grid,
        in_specs=[
            pl.BlockSpec((batch_block, C, HW), lambda i: (i, 0, 0)),
            pl.BlockSpec((C, HIDDEN), lambda i: (0, 0)),      # fetched once
            pl.BlockSpec((HIDDEN, C), lambda i: (0, 0)),      # fetched once
            pl.BlockSpec((2 * HW, HW), lambda i: (0, 0)),     # fetched once
        ],
        out_specs=pl.BlockSpec((batch_block, C, HW), lambda i: (i, 0, 0)),
        compiler_params=pltpu.CompilerParams(
            dimension_semantics=("parallel",)),
        cost_estimate=cost,
        # TODO(synk): if H,W are ever scaled to real image sizes, re-derive
        # the block sizes against v7x's 64 MiB VMEM and set vmem_limit_bytes.
    )(x_flat, w1t, w2t, wconv)
    return out_flat.reshape(B, C, H, W)


def cbam_ref(x, w1, w2, wc):
    """Pure-JAX reference replicating the PyTorch forward pass (NCHW)."""
    avg_p = x.mean(axis=(2, 3))
    max_p = x.max(axis=(2, 3))

    def mlp(v):
        hp = jnp.maximum(jnp.dot(v, w1.T, precision=jax.lax.Precision.HIGHEST), 0.0)
        return jnp.dot(hp, w2.T, precision=jax.lax.Precision.HIGHEST)

    ch = jax.nn.sigmoid(mlp(avg_p) + mlp(max_p))
    x = x * ch[:, :, None, None]
    avg_s = x.mean(axis=1, keepdims=True)
    max_s = x.max(axis=1, keepdims=True)
    s_in = jnp.concatenate([avg_s, max_s], axis=1)
    conv = jax.lax.conv_general_dilated(
        s_in, wc, window_strides=(1, 1), padding=[(PAD, PAD), (PAD, PAD)],
        dimension_numbers=("NCHW", "OIHW", "NCHW"),
        precision=jax.lax.Precision.HIGHEST)
    return x * jax.nn.sigmoid(conv)


if __name__ == "__main__":
    key = jax.random.PRNGKey(0)
    kx, k1, k2, kc = jax.random.split(key, 4)
    B = 2

    x = jax.random.normal(kx, (B, CH, H, W), jnp.float32)
    # Deterministic synthetic weights (shapes match the nn.Conv2d params, bias=False).
    w1 = jax.random.normal(k1, (HIDDEN, CH), jnp.float32) * (1.0 / np.sqrt(CH))
    w2 = jax.random.normal(k2, (CH, HIDDEN), jnp.float32) * (1.0 / np.sqrt(HIDDEN))
    wc = jax.random.normal(kc, (1, 2, KSIZE, KSIZE), jnp.float32) * (
        1.0 / np.sqrt(2 * KSIZE * KSIZE))

    out = jax.block_until_ready(cbam_forward(x, w1, w2, wc))
    ref = jax.block_until_ready(cbam_ref(x, w1, w2, wc))
    np.testing.assert_allclose(np.asarray(out), np.asarray(ref), atol=1e-5, rtol=1e-5)
    print("KERNEL_OK")
</pallas_src>

<mosaic_0001>
module attributes {stable_mosaic.version = 11 : i64} {
  func.func @kernel(%arg0: i32, %arg1: memref<1x32x256xf32, #tpu.memory_space<vmem>>, %arg2: memref<32x2xf32, #tpu.memory_space<vmem>>, %arg3: memref<2x32xf32, #tpu.memory_space<vmem>>, %arg4: memref<512x256xf32, #tpu.memory_space<vmem>>, %arg5: memref<1x32x256xf32, #tpu.memory_space<vmem>>) attributes {dimension_semantics = [#tpu.dimension_semantics<parallel>], iteration_bounds = array<i64: 2>, scalar_prefetch = 0 : i64, scratch_operands = 0 : i64, tpu.core_type = #tpu.core_type<tc>, window_params = [{transform_indices = @transform_0, window_bounds = array<i64: 1, 32, 256>}, {pipeline_mode = #tpu.pipeline_mode<synchronous>, transform_indices = @transform_1, window_bounds = array<i64: 32, 2>}, {pipeline_mode = #tpu.pipeline_mode<synchronous>, transform_indices = @transform_2, window_bounds = array<i64: 2, 32>}, {pipeline_mode = #tpu.pipeline_mode<synchronous>, transform_indices = @transform_3, window_bounds = array<i64: 512, 256>}, {transform_indices = @transform_4, window_bounds = array<i64: 1, 32, 256>}]} {
    %c0 = arith.constant 0 : index
    %c0_0 = arith.constant 0 : index
    %c0_1 = arith.constant 0 : index
    %0 = vector.load %arg1[%c0, %c0_0, %c0_1] : memref<1x32x256xf32, #tpu.memory_space<vmem>>, vector<1x32x256xf32>
    %cst = arith.constant dense<0.000000e+00> : vector<1x32xf32>
    %1 = vector.multi_reduction <add>, %0, %cst [2] : vector<1x32x256xf32> to vector<1x32xf32>
    %cst_2 = arith.constant 3.906250e-03 : f32
    %2 = vector.broadcast %cst_2 : f32 to vector<1x32xf32>
    %3 = arith.mulf %1, %2 : vector<1x32xf32>
    %cst_3 = arith.constant dense<0xFF800000> : vector<1x32xf32>
    %4 = vector.multi_reduction <maximumf>, %0, %cst_3 [2] : vector<1x32x256xf32> to vector<1x32xf32>
    %5 = tpu.concatenate %3, %4 in 0 : vector<1x32xf32>, vector<1x32xf32> -> vector<2x32xf32>
    %c0_4 = arith.constant 0 : index
    %c0_5 = arith.constant 0 : index
    %6 = vector.load %arg2[%c0_4, %c0_5] : memref<32x2xf32, #tpu.memory_space<vmem>>, vector<32x2xf32>
    %cst_6 = arith.constant dense<0.000000e+00> : vector<2x2xf32>
    %7 = tpu.matmul %5, %6, %cst_6 {dimension_numbers = #tpu.dot_dimension_numbers<[1], [0], [0], [1], [0, 0, 1, 1], [], []>, precision = #tpu.contract_precision<fp32>} : vector<2x32xf32>, vector<32x2xf32>, vector<2x2xf32> -> vector<2x2xf32>
    %cst_7 = arith.constant 0.000000e+00 : f32
    %8 = vector.broadcast %cst_7 : f32 to vector<2x2xf32>
    %9 = arith.maximumf %7, %8 : vector<2x2xf32>
    %c0_8 = arith.constant 0 : index
    %c0_9 = arith.constant 0 : index
    %10 = vector.load %arg3[%c0_8, %c0_9] : memref<2x32xf32, #tpu.memory_space<vmem>>, vector<2x32xf32>
    %cst_10 = arith.constant dense<0.000000e+00> : vector<2x32xf32>
    %11 = tpu.matmul %9, %10, %cst_10 {dimension_numbers = #tpu.dot_dimension_numbers<[1], [0], [0], [1], [0, 0, 1, 1], [], []>, precision = #tpu.contract_precision<fp32>} : vector<2x2xf32>, vector<2x32xf32>, vector<2x32xf32> -> vector<2x32xf32>
    %12 = vector.extract_strided_slice %11 {offsets = [0, 0], sizes = [1, 32], strides = [1, 1]} : vector<2x32xf32> to vector<1x32xf32>
    %13 = vector.extract_strided_slice %11 {offsets = [1, 0], sizes = [1, 32], strides = [1, 1]} : vector<2x32xf32> to vector<1x32xf32>
    %14 = arith.addf %12, %13 : vector<1x32xf32>
    %15 = arith.negf %14 : vector<1x32xf32>
    %16 = math.exp %15 : vector<1x32xf32>
    %cst_11 = arith.constant 1.000000e+00 : f32
    %17 = vector.broadcast %cst_11 : f32 to vector<1x32xf32>
    %18 = arith.addf %17, %16 : vector<1x32xf32>
    %19 = arith.divf %17, %18 : vector<1x32xf32>
    %20 = vector.shape_cast %19 : vector<1x32xf32> to vector<1x32x1xf32>
    %21 = vector.broadcast %20 : vector<1x32x1xf32> to vector<1x32x256xf32>
    %22 = arith.mulf %0, %21 : vector<1x32x256xf32>
    %cst_12 = arith.constant dense<0.000000e+00> : vector<1x256xf32>
    %23 = vector.multi_reduction <add>, %22, %cst_12 [1] : vector<1x32x256xf32> to vector<1x256xf32>
    %cst_13 = arith.constant 3.125000e-02 : f32
    %24 = vector.broadcast %cst_13 : f32 to vector<1x256xf32>
    %25 = arith.mulf %23, %24 : vector<1x256xf32>
    %cst_14 = arith.constant dense<0xFF800000> : vector<1x256xf32>
    %26 = vector.multi_reduction <maximumf>, %22, %cst_14 [1] : vector<1x32x256xf32> to vector<1x256xf32>
    %27 = tpu.concatenate %25, %26 in 1 : vector<1x256xf32>, vector<1x256xf32> -> vector<1x512xf32>
    %c0_15 = arith.constant 0 : index
    %c0_16 = arith.constant 0 : index
    %28 = vector.load %arg4[%c0_15, %c0_16] : memref<512x256xf32, #tpu.memory_space<vmem>>, vector<512x256xf32>
    %cst_17 = arith.constant dense<0.000000e+00> : vector<1x256xf32>
    %29 = tpu.matmul %27, %28, %cst_17 {dimension_numbers = #tpu.dot_dimension_numbers<[1], [0], [0], [1], [0, 0, 1, 1], [], []>, precision = #tpu.contract_precision<fp32>} : vector<1x512xf32>, vector<512x256xf32>, vector<1x256xf32> -> vector<1x256xf32>
    %30 = arith.negf %29 : vector<1x256xf32>
    %31 = math.exp %30 : vector<1x256xf32>
    %cst_18 = arith.constant 1.000000e+00 : f32
    %32 = vector.broadcast %cst_18 : f32 to vector<1x256xf32>
    %33 = arith.addf %32, %31 : vector<1x256xf32>
    %34 = arith.divf %32, %33 : vector<1x256xf32>
    %35 = vector.shape_cast %34 : vector<1x256xf32> to vector<1x1x256xf32>
    %36 = vector.broadcast %35 : vector<1x1x256xf32> to vector<1x32x256xf32>
    %37 = arith.mulf %22, %36 : vector<1x32x256xf32>
    %c0_19 = arith.constant 0 : index
    %c0_20 = arith.constant 0 : index
    %c0_21 = arith.constant 0 : index
    %38 = vector.load %arg5[%c0_19, %c0_20, %c0_21] : memref<1x32x256xf32, #tpu.memory_space<vmem>>, vector<1x32x256xf32>
    tpu.vector_store %arg5[%c0_19, %c0_20, %c0_21], %37 {strides = array<i32>} : memref<1x32x256xf32, #tpu.memory_space<vmem>>, vector<1x32x256xf32>,
    return
  }
  func.func @transform_0(%arg0: i32) -> (i32, i32, i32) {
    %c0_i32 = arith.constant 0 : i32
    %c0_i32_0 = arith.constant 0 : i32
    %c0_i32_1 = arith.constant 0 : i32
    return %arg0, %c0_i32, %c0_i32_0 : i32, i32, i32
  }
  func.func @transform_1(%arg0: i32) -> (i32, i32) {
    %c0_i32 = arith.constant 0 : i32
    %c0_i32_0 = arith.constant 0 : i32
    %c0_i32_1 = arith.constant 0 : i32
    return %c0_i32, %c0_i32_0 : i32, i32
  }
  func.func @transform_2(%arg0: i32) -> (i32, i32) {
    %c0_i32 = arith.constant 0 : i32
    %c0_i32_0 = arith.constant 0 : i32
    %c0_i32_1 = arith.constant 0 : i32
    return %c0_i32, %c0_i32_0 : i32, i32
  }
  func.func @transform_3(%arg0: i32) -> (i32, i32) {
    %c0_i32 = arith.constant 0 : i32
    %c0_i32_0 = arith.constant 0 : i32
    %c0_i32_1 = arith.constant 0 : i32
    return %c0_i32, %c0_i32_0 : i32, i32
  }
  func.func @transform_4(%arg0: i32) -> (i32, i32, i32) {
    %c0_i32 = arith.constant 0 : i32
    %c0_i32_0 = arith.constant 0 : i32
    %c0_i32_1 = arith.constant 0 : i32
    return %arg0, %c0_i32, %c0_i32_0 : i32, i32, i32
  }
}

</mosaic_0001>

<llo_original>
// kernel: tpu_custom_call.1
$region0: #{tpu_custom_call.1}
  #allocation0 [shape = 'u32[]', space=smem, size = 0x4, offset = 0x4, fixed_abs, tag = 'smem constant byte address 0x4 - core index']
  #allocation1 [shape = 'u32[72,128]{1,0:T(1,128)}', space=vmem, size = 0x9000, scoped, tag = 'internal scratch']
  %s0 = inlined_call_operand.hbm [shape: f32[2,32,256], index: 0, kind: input, shape index: {}]
  %s1 = inlined_call_operand.vmem [shape: f32[32,2], index: 1, kind: input, shape index: {}]
  %s2 = inlined_call_operand.vmem [shape: f32[2,32], index: 2, kind: input, shape index: {}]
  %s3 = inlined_call_operand.hbm [shape: f32[512,256], index: 3, kind: input, shape index: {}]
  %s4 = inlined_call_operand.hbm [shape: f32[2,32,256], index: 4, kind: output, shape index: {}]
  %s5 = sld [smem:[#allocation0]]
  $region57: #{tpu_custom_call.1} parent=0
    _
  %s7 = ssub.s32 1, %s5
  %s8 = scalar_select 0, %s7, %s5
  $region1: #{tpu_custom_call.1} parent=0
    #allocation2 [shape = 'u8[65536]{0}', space=vmem, size = 0x10000, scoped, tag = 'input window, operand 0']
    #allocation3 [shape = 's32[2]{0}', space=sflag, size = 0x8, scoped, tag = 'scoped memory for tpu_custom_call.1']
    #allocation4 [shape = 's32[2]{0}', space=sflag, size = 0x8, scoped, tag = 'scoped memory for tpu_custom_call.1']
    #allocation5 [shape = 'u8[524288]{0}', space=vmem, size = 0x80000, scoped, tag = 'input window, operand 3, single buffered']
    #allocation6 [shape = 's32[1]{0}', space=sflag, size = 0x4, scoped, tag = 'scoped memory for tpu_custom_call.1']
    #allocation7 [shape = 'u8[65536]{0}', space=vmem, size = 0x10000, scoped, tag = 'output window, operand 0']
    %9 = vsyncpa [#allocation3], 0
    %s10 = scalar_lea.sflag [#allocation3], 1
    %11 = vsyncpa %s10, 0
    %12 = vsyncpa [#allocation6], 0
    %13 = vsyncpa [#allocation4], 0
    %s14 = scalar_lea.sflag [#allocation4], 1
    %15 = vsyncpa %s14, 0
    loop: start=0, step=1, limit=4
    $region2: #{tpu_custom_call.1} parent=1 // loop_pre_header
      _
    $region3: #{tpu_custom_call.1} parent=1 // loop_header
      %s17 = sphi 0, %s21
      %p18 = scmp.ge.s32.totalorder %s17, 4
      %s27 = sphi 0, %s29
      %s30 = sphi 0, %s27
      %s31 = sphi 0, %s30
      %s47 = sphi 0, %s31
      %s51 = sphi 0, %s51
      %s53 = sphi 0, %s51
      %s54 = sphi 0, %s53
      %s68 = sphi 0, %s54
      %s72 = sphi 0, %s72
      %s74 = sphi 0, %s72
      %s75 = sphi 0, %s74
      %s89 = sphi 0, %s75
      %s93 = sphi 0, %s93
      %s95 = sphi 0, %s93
      %s96 = sphi 0, %s95
      %s110 = sphi 0, %s96
      %s116 = sphi 0, %s118
      %s119 = sphi 0, %s116
      %s120 = sphi 0, %s119
      %s136 = sphi 0, %s120
    $region4: #{tpu_custom_call.1} parent=1 // loop_header_branch
      %20 = sbr.rel (%p18) target = $region8
    $region5: #{tpu_custom_call.1} parent=1 // loop_body
      %s22 = ssub.s32 %s17, 1
      %s23 = ssub.s32 %s17, 2
      %s24 = sadd.s32 %s17, 1
      %s25 = ssub.s32 %s17, %s24
      %p26 = scmp.eq.s32.totalorder %s25, 0
      %s28 = sadd.s32 %s27, 1
      %s29 = scalar_select %p26, %s27, %s28
      %p32 = pneg %p26
      %p33 = scmp.eq.s32.totalorder %s17, 1
      %p34 = por %p32, %p33
      %p35 = scmp.ne.s32.totalorder %s27, %s30
      %p36 = scmp.eq.s32.totalorder %s17, 0
      %p37 = por %p35, %p36
      %p38 = scmp.ne.s32.totalorder %s27, %s30
      %p39 = scmp.eq.s32.totalorder %s22, 1
      %p40 = por %p38, %p39
      %p41 = scmp.ne.s32.totalorder %s30, %s31
      %p42 = scmp.eq.s32.totalorder %s22, 0
      %p43 = por %p41, %p42
      %p44 = scmp.ne.s32.totalorder %s30, %s31
      %p45 = scmp.eq.s32.totalorder %s23, 1
      %p46 = por %p44, %p45
      %p48 = scmp.ne.s32.totalorder %s31, %s47
      %p49 = scmp.eq.s32.totalorder %s23, 0
      %p50 = por %p48, %p49
      %s52 = sadd.s32 %s51, 1
      %p55 = scmp.eq.s32.totalorder %s17, 1
      %p56 = scmp.ne.s32.totalorder %s51, %s53
      %p57 = scmp.eq.s32.totalorder %s17, 0
      %p58 = por %p56, %p57
      %p59 = scmp.ne.s32.totalorder %s51, %s53
      %p60 = scmp.eq.s32.totalorder %s22, 1
      %p61 = por %p59, %p60
      %p62 = scmp.ne.s32.totalorder %s53, %s54
      %p63 = scmp.eq.s32.totalorder %s22, 0
      %p64 = por %p62, %p63
      %p65 = scmp.ne.s32.totalorder %s53, %s54
      %p66 = scmp.eq.s32.totalorder %s23, 1
      %p67 = por %p65, %p66
      %p69 = scmp.ne.s32.totalorder %s54, %s68
      %p70 = scmp.eq.s32.totalorder %s23, 0
      %p71 = por %p69, %p70
      %s73 = sadd.s32 %s72, 1
      %p76 = scmp.eq.s32.totalorder %s17, 1
      %p77 = scmp.ne.s32.totalorder %s72, %s74
      %p78 = scmp.eq.s32.totalorder %s17, 0
      %p79 = por %p77, %p78
      %p80 = scmp.ne.s32.totalorder %s72, %s74
      %p81 = scmp.eq.s32.totalorder %s22, 1
      %p82 = por %p80, %p81
      %p83 = scmp.ne.s32.totalorder %s74, %s75
      %p84 = scmp.eq.s32.totalorder %s22, 0
      %p85 = por %p83, %p84
      %p86 = scmp.ne.s32.totalorder %s74, %s75
      %p87 = scmp.eq.s32.totalorder %s23, 1
      %p88 = por %p86, %p87
      %p90 = scmp.ne.s32.totalorder %s75, %s89
      %p91 = scmp.eq.s32.totalorder %s23, 0
      %p92 = por %p90, %p91
      %s94 = sadd.s32 %s93, 1
      %p97 = scmp.eq.s32.totalorder %s17, 1
      %p98 = scmp.ne.s32.totalorder %s93, %s95
      %p99 = scmp.eq.s32.totalorder %s17, 0
      %p100 = por %p98, %p99
      %p101 = scmp.ne.s32.totalorder %s93, %s95
      %p102 = scmp.eq.s32.totalorder %s22, 1
      %p103 = por %p101, %p102
      %p104 = scmp.ne.s32.totalorder %s95, %s96
      %p105 = scmp.eq.s32.totalorder %s22, 0
      %p106 = por %p104, %p105
      %p107 = scmp.ne.s32.totalorder %s95, %s96
      %p108 = scmp.eq.s32.totalorder %s23, 1
      %p109 = por %p107, %p108
      %p111 = scmp.ne.s32.totalorder %s96, %s110
      %p112 = scmp.eq.s32.totalorder %s23, 0
      %p113 = por %p111, %p112
      %s114 = ssub.s32 %s17, %s24
      %p115 = scmp.eq.s32.totalorder %s114, 0
      %s117 = sadd.s32 %s116, 1
      %s118 = scalar_select %p115, %s116, %s117
      %p121 = pneg %p115
      %p122 = scmp.eq.s32.totalorder %s17, 1
      %p123 = por %p121, %p122
      %p124 = scmp.ne.s32.totalorder %s116, %s119
      %p125 = scmp.eq.s32.totalorder %s17, 0
      %p126 = por %p124, %p125
      %p127 = scmp.ne.s32.totalorder %s116, %s119
      %p128 = scmp.eq.s32.totalorder %s22, 1
      %p129 = por %p127, %p128
      %p130 = scmp.ne.s32.totalorder %s119, %s120
      %p131 = scmp.eq.s32.totalorder %s22, 0
      %p132 = por %p130, %p131
      %p133 = scmp.ne.s32.totalorder %s119, %s120
      %p134 = scmp.eq.s32.totalorder %s23, 1
      %p135 = por %p133, %p134
      %p137 = scmp.ne.s32.totalorder %s120, %s136
      %p138 = scmp.eq.s32.totalorder %s23, 0
      %p139 = por %p137, %p138
      %p140 = scmp.le.s32.totalorder 1, %s17
      %p141 = scmp.lt.s32.totalorder %s17, 3
      %p142 = pnand %p140, %p141
      %p143 = pneg %p142
      // Predicated region
      $region9: #{tpu_custom_call.1} parent=5 // pred_check
        _
      $region10: #{tpu_custom_call.1} parent=5 // pred_check_branch
        %145 = sbr.rel (%p142) target = $region12
      $region11: #{tpu_custom_call.1} parent=5 // pred_region
        %s146 = ssub.s32 %s17, 1
        // Predicated region
        $region13: #{tpu_custom_call.1} parent=11 // pred_check
          %p147 = pneg %p64
        $region14: #{tpu_custom_call.1} parent=11 // pred_check_branch
          %149 = sbr.rel (%p147) target = $region16
        $region15: #{tpu_custom_call.1} parent=11 // pred_region
          _
        $region16: #{tpu_custom_call.1} parent=11 // pred_fallthru
          _
        // Predicated region
        $region17: #{tpu_custom_call.1} parent=11 // pred_check
          %p150 = pneg %p85
        $region18: #{tpu_custom_call.1} parent=11 // pred_check_branch
          %152 = sbr.rel (%p150) target = $region20
        $region19: #{tpu_custom_call.1} parent=11 // pred_region
          _
        $region20: #{tpu_custom_call.1} parent=11 // pred_fallthru
          _
        // Predicated region
        $region21: #{tpu_custom_call.1} parent=11 // pred_check
          %p153 = pneg %p106
        $region22: #{tpu_custom_call.1} parent=11 // pred_check_branch
          %155 = sbr.rel (%p153) target = $region24
        $region23: #{tpu_custom_call.1} parent=11 // pred_region
          %157 = vsyncadd [#allocation6], 0
          %s158 = sshll.u32 %s3, 4
          %s159 = int_to_ptr.hbm [resolvable:$true] %s158
          %s160 = sshll.u32 [#allocation5], 4
          %s161 = int_to_ptr.vmem [resolvable:$true] %s160
          %166 = dma.hbm_to_vmem [thread:$0]  %s159, 16384, %s161, [#allocation6], 256, 256, 16
        $region24: #{tpu_custom_call.1} parent=11 // pred_fallthru
          _
      $region12: #{tpu_custom_call.1} parent=5 // pred_fallthru
        _
      %p167 = scmp.lt.s32.totalorder %s17, 2
      // Predicated region
      $region25: #{tpu_custom_call.1} parent=5 // pred_check
        %p168 = pneg %p167
      $region26: #{tpu_custom_call.1} parent=5 // pred_check_branch
        %170 = sbr.rel (%p168) target = $region28
      $region27: #{tpu_custom_call.1} parent=5 // pred_region
        // Predicated region
        $region29: #{tpu_custom_call.1} parent=27 // pred_check
          %p171 = pneg %p37
        $region30: #{tpu_custom_call.1} parent=27 // pred_check_branch
          %173 = sbr.rel (%p171) target = $region32
        $region31: #{tpu_custom_call.1} parent=27 // pred_region
          %s174 = sand.u32 %s27, 1
          %s175 = scalar_lea.sflag [#allocation3], %s174
          %s176 = sand.u32 %s27, 1
          %s177 = smul.addr %s176, 64
          %s178 = scalar_lea.vmem [#allocation2], %s177
          %180 = vsyncadd %s175, 0
          %s181 = smul.addr %s17, 8
          %s182 = smul.addr %s181, 8
          %s183 = scalar_lea.hbm %s0, %s182
          %s184 = sshll.u32 %s183, 4
          %s185 = int_to_ptr.hbm [resolvable:$true] %s184
          %s186 = sshll.u32 %s178, 4
          %s187 = int_to_ptr.vmem [resolvable:$true] %s186
          %192 = dma.hbm_to_vmem [thread:$0]  %s185, 1024, %s187, %s175, 256, 256, 16
        $region32: #{tpu_custom_call.1} parent=27 // pred_fallthru
          _
      $region28: #{tpu_custom_call.1} parent=5 // pred_fallthru
        _
      %p193 = scmp.le.s32.totalorder 1, %s17
      %p194 = scmp.lt.s32.totalorder %s17, 3
      %p195 = pnand %p193, %p194
      %p196 = pneg %p195
      // Predicated region
      $region33: #{tpu_custom_call.1} parent=5 // pred_check
        _
      $region34: #{tpu_custom_call.1} parent=5 // pred_check_branch
        %198 = sbr.rel (%p195) target = $region36
      $region35: #{tpu_custom_call.1} parent=5 // pred_region
        %s199 = ssub.s32 %s17, 1
        %s200 = sand.u32 %s30, 1
        %s201 = scalar_lea.sflag [#allocation3], %s200
        %s202 = sand.u32 %s30, 1
        %s203 = smul.addr %s202, 64
        %s204 = scalar_lea.vmem [#allocation2], %s203
        // Predicated region
        $region37: #{tpu_custom_call.1} parent=35 // pred_check
          %p205 = pneg %p43
        $region38: #{tpu_custom_call.1} parent=35 // pred_check_branch
          %207 = sbr.rel (%p205) target = $region40
        $region39: #{tpu_custom_call.1} parent=35 // pred_region
          %209 = dma.done %s201, 1024
        $region40: #{tpu_custom_call.1} parent=35 // pred_fallthru
          _
        // Predicated region
        $region41: #{tpu_custom_call.1} parent=35 // pred_check
          %p210 = pneg %p106
        $region42: #{tpu_custom_call.1} parent=35 // pred_check_branch
          %212 = sbr.rel (%p210) target = $region44
        $region43: #{tpu_custom_call.1} parent=35 // pred_region
          %214 = dma.done [#allocation6], 16384
        $region44: #{tpu_custom_call.1} parent=35 // pred_fallthru
          _
        %s215 = sand.u32 %s30, 1
        %s216 = scalar_lea.sflag [#allocation3], %s215
        %s217 = sand.u32 %s30, 1
        %s218 = smul.addr %s217, 64
        %s219 = scalar_lea.vmem [#allocation2], %s218
        %p220 = pneg %p43
        %p221 = pneg %p40
        %p222 = pneg %p64
        %p223 = pneg %p61
        %p224 = pneg %p85
        %p225 = pneg %p82
        %p226 = pneg %p106
        %p227 = pneg %p103
        %p228 = pneg %p132
        %p229 = pneg %p129
        %s230 = sand.u32 %s119, 1
        %s231 = scalar_lea.sflag [#allocation4], %s230
        %s232 = sand.u32 %s119, 1
        %s233 = smul.addr %s232, 64
        %s234 = scalar_lea.vmem [#allocation7], %s233
        %v235 = vld [vmem:[%s204] sm:$0xff]
        %v236 = vld [vmem:[%s204 + $0x8] sm:$0xff]
        %v237 = vld [vmem:[%s204 + $0x10] sm:$0xff]
        %v238 = vld [vmem:[%s204 + $0x18] sm:$0xff]
        %v239 = vld [vmem:[%s204 + $0x20] sm:$0xff]
        %v240 = vld [vmem:[%s204 + $0x28] sm:$0xff]
        %v241 = vld [vmem:[%s204 + $0x30] sm:$0xff]
        %v242 = vld [vmem:[%s204 + $0x38] sm:$0xff]
        %v243 = vadd.f32 %v235, %v236
        %244 = vadd.xlane.f32.xlu0 %v243
        %v245 = vpop.xlane.xlu0 %244
        %v246 = vadd.f32 %v237, %v238
        %247 = vadd.xlane.f32.xlu0 %v246
        %v248 = vpop.xlane.xlu0 %247
        %v249 = vadd.f32 %v239, %v240
        %250 = vadd.xlane.f32.xlu0 %v249
        %v251 = vpop.xlane.xlu0 %250
        %v252 = vadd.f32 %v241, %v242
        %253 = vadd.xlane.f32.xlu0 %v252
        %v254 = vpop.xlane.xlu0 %253
        %v255 = vmul.f32 %v245, 0.00390625
        %v256 = vmul.f32 %v248, 0.00390625
        %v257 = vmul.f32 %v251, 0.00390625
        %v258 = vmul.f32 %v254, 0.00390625
        %v259 = vmax.f32 %v235, %v236
        %260 = vmax.xlane.f32.xlu0 %v259
        %v261 = vpop.xlane.xlu0 %260
        %v262 = vmax.f32 %v237, %v238
        %263 = vmax.xlane.f32.xlu0 %v262
        %v264 = vpop.xlane.xlu0 %263
        %v265 = vmax.f32 %v239, %v240
        %266 = vmax.xlane.f32.xlu0 %v265
        %v267 = vpop.xlane.xlu0 %266
        %v268 = vmax.f32 %v241, %v242
        %269 = vmax.xlane.f32.xlu0 %v268
        %v270 = vpop.xlane.xlu0 %269
        %v275 = vlaneseq
        %v276 = vand.u32 %v275, 127
        %v277 = vperm.slane %v255, %v276
        %v278 = vadd.s32 %v276, 4294967288
        %v279 = vperm.slane %v256, %v278
        %vm280 = vcmask 130112
        %v281 = vsel %vm280, %v279, %v277
        %v282 = vadd.s32 %v276, 4294967280
        %v283 = vperm.slane %v257, %v282
        %vm284 = vcmask 195712
        %v285 = vsel %vm284, %v283, %v281
        %v286 = vadd.s32 %v276, 4294967272
        %v287 = vperm.slane %v258, %v286
        %vm288 = vcmask 261312
        %v289 = vsel %vm288, %v287, %v285
        %v295 = vperm.slane %v261, %v276
        %v296 = vperm.slane %v264, %v278
        %v297 = vsel %vm280, %v296, %v295
        %v298 = vperm.slane %v267, %v282
        %v299 = vsel %vm284, %v298, %v297
        %v300 = vperm.slane %v270, %v286
        %v301 = vsel %vm288, %v300, %v299
        %vm303 = vcmask 1040384
        %v304 = vsel %vm303, %v289, %v301
        %v305 = vld [vmem:[%s1] sm:$0xff]
        %v306 = vld [vmem:[%s1 + $0x8] sm:$0xff]
        %v307 = vld [vmem:[%s1 + $0x10] sm:$0xff]
        %v308 = vld [vmem:[%s1 + $0x18] sm:$0xff]
        %vm309 = vcmask 261120
        %v311 = vsel %vm309, %v304, 0
        %313 = vmatpush.msra.mxu0 0.0
        %314 = vmatpush.msra.mxu0 0.0
        %315 = vmatpush.msra.mxu0 0.0
        %316 = vmatpush.msra.mxu0 0.0
        %317 = vmatpush.msra.mxu0 0.0
        %318 = vmatpush.msra.mxu0 0.0
        %319 = vmatpush.msra.mxu0 0.0
        %320 = vmatpush.msra.mxu0 0.0
        %321 = vmatpush.msra.mxu0 0.0
        %322 = vmatpush.msra.mxu0 0.0
        %323 = vmatpush.msra.mxu0 0.0
        %324 = vmatpush.msra.mxu0 0.0
        %v325 = vand.u32 %v308, 4294901760
        %326 = vmatpush.msra.mxu0 %v325
        %v327 = vand.u32 %v307, 4294901760
        %328 = vmatpush.msra.mxu0 %v327
        %v329 = vand.u32 %v306, 4294901760
        %330 = vmatpush.msra.mxu0 %v329
        %v331 = vand.u32 %v305, 4294901760
        %332 = vmatpush.msra.mxu0 %v331
        %v333 = vand.u32 %v311, 4294901760
        %v334 = vsub.f32 %v311, %v333
        %v335 = vand.u32 %v334, 4294901760
        %v336 = vsub.f32 %v334, %v335
        %v337 = vand.u32 %v336, 4294901760
        %338 = vmatmul.f32.gmra.mxu0 %v337
        %v339 = vpop.f32.mrf.mxu0
        %v340 = vadd.f32 0.0, %v339
        %341 = vdwg.mxu0
        %342 = vmatpush.msra.mxu0 0.0
        %343 = vmatpush.msra.mxu0 0.0
        %344 = vmatpush.msra.mxu0 0.0
        %345 = vmatpush.msra.mxu0 0.0
        %346 = vmatpush.msra.mxu0 0.0
        %347 = vmatpush.msra.mxu0 0.0
        %348 = vmatpush.msra.mxu0 0.0
        %349 = vmatpush.msra.mxu0 0.0
        %350 = vmatpush.msra.mxu0 0.0
        %351 = vmatpush.msra.mxu0 0.0
        %352 = vmatpush.msra.mxu0 0.0
        %353 = vmatpush.msra.mxu0 0.0
        %v354 = vand.u32 %v308, 4294901760
        %v355 = vsub.f32 %v308, %v354
        %v356 = vand.u32 %v355, 4294901760
        %v357 = vsub.f32 %v355, %v356
        %v358 = vand.u32 %v357, 4294901760
        %359 = vmatpush.msra.mxu0 %v358
        %v360 = vand.u32 %v307, 4294901760
        %v361 = vsub.f32 %v307, %v360
        %v362 = vand.u32 %v361, 4294901760
        %v363 = vsub.f32 %v361, %v362
        %v364 = vand.u32 %v363, 4294901760
        %365 = vmatpush.msra.mxu0 %v364
        %v366 = vand.u32 %v306, 4294901760
        %v367 = vsub.f32 %v306, %v366
        %v368 = vand.u32 %v367, 4294901760
        %v369 = vsub.f32 %v367, %v368
        %v370 = vand.u32 %v369, 4294901760
        %371 = vmatpush.msra.mxu0 %v370
        %v372 = vand.u32 %v305, 4294901760
        %v373 = vsub.f32 %v305, %v372
        %v374 = vand.u32 %v373, 4294901760
        %v375 = vsub.f32 %v373, %v374
        %v376 = vand.u32 %v375, 4294901760
        %377 = vmatpush.msra.mxu0 %v376
        %v378 = vand.u32 %v311, 4294901760
        %379 = vmatmul.f32.gmra.mxu0 %v378
        %v380 = vpop.f32.mrf.mxu0
        %v381 = vadd.f32 %v340, %v380
        %382 = vdwg.mxu0
        %383 = vmatpush.msra.mxu0 0.0
        %384 = vmatpush.msra.mxu0 0.0
        %385 = vmatpush.msra.mxu0 0.0
        %386 = vmatpush.msra.mxu0 0.0
        %387 = vmatpush.msra.mxu0 0.0
        %388 = vmatpush.msra.mxu0 0.0
        %389 = vmatpush.msra.mxu0 0.0
        %390 = vmatpush.msra.mxu0 0.0
        %391 = vmatpush.msra.mxu0 0.0
        %392 = vmatpush.msra.mxu0 0.0
        %393 = vmatpush.msra.mxu0 0.0
        %394 = vmatpush.msra.mxu0 0.0
        %v395 = vand.u32 %v308, 4294901760
        %v396 = vsub.f32 %v308, %v395
        %397 = vmatpush.msra.mxu0 %v396
        %v398 = vand.u32 %v307, 4294901760
        %v399 = vsub.f32 %v307, %v398
        %400 = vmatpush.msra.mxu0 %v399
        %v401 = vand.u32 %v306, 4294901760
        %v402 = vsub.f32 %v306, %v401
        %403 = vmatpush.msra.mxu0 %v402
        %v404 = vand.u32 %v305, 4294901760
        %v405 = vsub.f32 %v305, %v404
        %406 = vmatpush.msra.mxu0 %v405
        %v407 = vand.u32 %v311, 4294901760
        %v408 = vsub.f32 %v311, %v407
        %409 = vmatmul.f32.gmra.mxu0 %v408
        %v410 = vpop.f32.mrf.mxu0
        %v411 = vadd.f32 %v381, %v410
        %412 = vdwg.mxu0
        %413 = vmatpush.msra.mxu0 0.0
        %414 = vmatpush.msra.mxu0 0.0
        %415 = vmatpush.msra.mxu0 0.0
        %416 = vmatpush.msra.mxu0 0.0
        %417 = vmatpush.msra.mxu0 0.0
        %418 = vmatpush.msra.mxu0 0.0
        %419 = vmatpush.msra.mxu0 0.0
        %420 = vmatpush.msra.mxu0 0.0
        %421 = vmatpush.msra.mxu0 0.0
        %422 = vmatpush.msra.mxu0 0.0
        %423 = vmatpush.msra.mxu0 0.0
        %424 = vmatpush.msra.mxu0 0.0
        %v425 = vand.u32 %v308, 4294901760
        %426 = vmatpush.msra.mxu0 %v425
        %v427 = vand.u32 %v307, 4294901760
        %428 = vmatpush.msra.mxu0 %v427
        %v429 = vand.u32 %v306, 4294901760
        %430 = vmatpush.msra.mxu0 %v429
        %v431 = vand.u32 %v305, 4294901760
        %432 = vmatpush.msra.mxu0 %v431
        %v433 = vand.u32 %v311, 4294901760
        %v434 = vsub.f32 %v311, %v433
        %v435 = vand.u32 %v434, 4294901760
        %436 = vmatmul.f32.gmra.mxu0 %v435
        %v437 = vpop.f32.mrf.mxu0
        %v438 = vadd.f32 %v411, %v437
        %439 = vdwg.mxu0
        %440 = vmatpush.msra.mxu0 0.0
        %441 = vmatpush.msra.mxu0 0.0
        %442 = vmatpush.msra.mxu0 0.0
        %443 = vmatpush.msra.mxu0 0.0
        %444 = vmatpush.msra.mxu0 0.0
        %445 = vmatpush.msra.mxu0 0.0
        %446 = vmatpush.msra.mxu0 0.0
        %447 = vmatpush.msra.mxu0 0.0
        %448 = vmatpush.msra.mxu0 0.0
        %449 = vmatpush.msra.mxu0 0.0
        %450 = vmatpush.msra.mxu0 0.0
        %451 = vmatpush.msra.mxu0 0.0
        %v452 = vand.u32 %v308, 4294901760
        %v453 = vsub.f32 %v308, %v452
        %v454 = vand.u32 %v453, 4294901760
        %455 = vmatpush.msra.mxu0 %v454
        %v456 = vand.u32 %v307, 4294901760
        %v457 = vsub.f32 %v307, %v456
        %v458 = vand.u32 %v457, 4294901760
        %459 = vmatpush.msra.mxu0 %v458
        %v460 = vand.u32 %v306, 4294901760
        %v461 = vsub.f32 %v306, %v460
        %v462 = vand.u32 %v461, 4294901760
        %463 = vmatpush.msra.mxu0 %v462
        %v464 = vand.u32 %v305, 4294901760
        %v465 = vsub.f32 %v305, %v464
        %v466 = vand.u32 %v465, 4294901760
        %467 = vmatpush.msra.mxu0 %v466
        %v468 = vand.u32 %v311, 4294901760
        %469 = vmatmul.f32.gmra.mxu0 %v468
        %v470 = vpop.f32.mrf.mxu0
        %v471 = vadd.f32 %v438, %v470
        %472 = vdwg.mxu0
        %473 = vmatpush.msra.mxu0 0.0
        %474 = vmatpush.msra.mxu0 0.0
        %475 = vmatpush.msra.mxu0 0.0
        %476 = vmatpush.msra.mxu0 0.0
        %477 = vmatpush.msra.mxu0 0.0
        %478 = vmatpush.msra.mxu0 0.0
        %479 = vmatpush.msra.mxu0 0.0
        %480 = vmatpush.msra.mxu0 0.0
        %481 = vmatpush.msra.mxu0 0.0
        %482 = vmatpush.msra.mxu0 0.0
        %483 = vmatpush.msra.mxu0 0.0
        %484 = vmatpush.msra.mxu0 0.0
        %v485 = vand.u32 %v308, 4294901760
        %486 = vmatpush.msra.mxu0 %v485
        %v487 = vand.u32 %v307, 4294901760
        %488 = vmatpush.msra.mxu0 %v487
        %v489 = vand.u32 %v306, 4294901760
        %490 = vmatpush.msra.mxu0 %v489
        %v491 = vand.u32 %v305, 4294901760
        %492 = vmatpush.msra.mxu0 %v491
        %v493 = vand.u32 %v311, 4294901760
        %494 = vmatmul.f32.gmra.mxu0 %v493
        %v495 = vpop.f32.mrf.mxu0
        %v496 = vadd.f32 %v471, %v495
        %497 = vdwg.mxu0
        %v498 = vmax.f32 %v496, 0.0
        %v499 = vld [vmem:[%s2] sm:$0x3]
        %vm500 = vcmask 15360
        %v502 = vsel %vm500, %v498, 0
        %vm504 = vcmask 1041408
        %v506 = vsel %vm504, %v499, 0
        %508 = vmatpush.msra.mxu0 0.0
        %509 = vmatpush.msra.mxu0 0.0
        %510 = vmatpush.msra.mxu0 0.0
        %511 = vmatpush.msra.mxu0 0.0
        %512 = vmatpush.msra.mxu0 0.0
        %513 = vmatpush.msra.mxu0 0.0
        %514 = vmatpush.msra.mxu0 0.0
        %515 = vmatpush.msra.mxu0 0.0
        %516 = vmatpush.msra.mxu0 0.0
        %517 = vmatpush.msra.mxu0 0.0
        %518 = vmatpush.msra.mxu0 0.0
        %519 = vmatpush.msra.mxu0 0.0
        %520 = vmatpush.msra.mxu0 0.0
        %521 = vmatpush.msra.mxu0 0.0
        %522 = vmatpush.msra.mxu0 0.0
        %v523 = vand.u32 %v506, 4294901760
        %524 = vmatpush.msra.mxu0 %v523
        %v525 = vand.u32 %v502, 4294901760
        %v526 = vsub.f32 %v502, %v525
        %v527 = vand.u32 %v526, 4294901760
        %v528 = vsub.f32 %v526, %v527
        %v529 = vand.u32 %v528, 4294901760
        %530 = vmatmul.f32.gmra.mxu0 %v529
        %v531 = vpop.f32.mrf.mxu0
        %v532 = vadd.f32 0.0, %v531
        %533 = vdwg.mxu0
        %534 = vmatpush.msra.mxu0 0.0
        %535 = vmatpush.msra.mxu0 0.0
        %536 = vmatpush.msra.mxu0 0.0
        %537 = vmatpush.msra.mxu0 0.0
        %538 = vmatpush.msra.mxu0 0.0
        %539 = vmatpush.msra.mxu0 0.0
        %540 = vmatpush.msra.mxu0 0.0
        %541 = vmatpush.msra.mxu0 0.0
        %542 = vmatpush.msra.mxu0 0.0
        %543 = vmatpush.msra.mxu0 0.0
        %544 = vmatpush.msra.mxu0 0.0
        %545 = vmatpush.msra.mxu0 0.0
        %546 = vmatpush.msra.mxu0 0.0
        %547 = vmatpush.msra.mxu0 0.0
        %548 = vmatpush.msra.mxu0 0.0
        %v549 = vand.u32 %v506, 4294901760
        %v550 = vsub.f32 %v506, %v549
        %v551 = vand.u32 %v550, 4294901760
        %v552 = vsub.f32 %v550, %v551
        %v553 = vand.u32 %v552, 4294901760
        %554 = vmatpush.msra.mxu0 %v553
        %v555 = vand.u32 %v502, 4294901760
        %556 = vmatmul.f32.gmra.mxu0 %v555
        %v557 = vpop.f32.mrf.mxu0
        %v558 = vadd.f32 %v532, %v557
        %559 = vdwg.mxu0
        %560 = vmatpush.msra.mxu0 0.0
        %561 = vmatpush.msra.mxu0 0.0
        %562 = vmatpush.msra.mxu0 0.0
        %563 = vmatpush.msra.mxu0 0.0
        %564 = vmatpush.msra.mxu0 0.0
        %565 = vmatpush.msra.mxu0 0.0
        %566 = vmatpush.msra.mxu0 0.0
        %567 = vmatpush.msra.mxu0 0.0
        %568 = vmatpush.msra.mxu0 0.0
        %569 = vmatpush.msra.mxu0 0.0
        %570 = vmatpush.msra.mxu0 0.0
        %571 = vmatpush.msra.mxu0 0.0
        %572 = vmatpush.msra.mxu0 0.0
        %573 = vmatpush.msra.mxu0 0.0
        %574 = vmatpush.msra.mxu0 0.0
        %v575 = vand.u32 %v506, 4294901760
        %v576 = vsub.f32 %v506, %v575
        %577 = vmatpush.msra.mxu0 %v576
        %v578 = vand.u32 %v502, 4294901760
        %v579 = vsub.f32 %v502, %v578
        %580 = vmatmul.f32.gmra.mxu0 %v579
        %v581 = vpop.f32.mrf.mxu0
        %v582 = vadd.f32 %v558, %v581
        %583 = vdwg.mxu0
        %584 = vmatpush.msra.mxu0 0.0
        %585 = vmatpush.msra.mxu0 0.0
        %586 = vmatpush.msra.mxu0 0.0
        %587 = vmatpush.msra.mxu0 0.0
        %588 = vmatpush.msra.mxu0 0.0
        %589 = vmatpush.msra.mxu0 0.0
        %590 = vmatpush.msra.mxu0 0.0
        %591 = vmatpush.msra.mxu0 0.0
        %592 = vmatpush.msra.mxu0 0.0
        %593 = vmatpush.msra.mxu0 0.0
        %594 = vmatpush.msra.mxu0 0.0
        %595 = vmatpush.msra.mxu0 0.0
        %596 = vmatpush.msra.mxu0 0.0
        %597 = vmatpush.msra.mxu0 0.0
        %598 = vmatpush.msra.mxu0 0.0
        %v599 = vand.u32 %v506, 4294901760
        %600 = vmatpush.msra.mxu0 %v599
        %v601 = vand.u32 %v502, 4294901760
        %v602 = vsub.f32 %v502, %v601
        %v603 = vand.u32 %v602, 4294901760
        %604 = vmatmul.f32.gmra.mxu0 %v603
        %v605 = vpop.f32.mrf.mxu0
        %v606 = vadd.f32 %v582, %v605
        %607 = vdwg.mxu0
        %608 = vmatpush.msra.mxu0 0.0
        %609 = vmatpush.msra.mxu0 0.0
        %610 = vmatpush.msra.mxu0 0.0
        %611 = vmatpush.msra.mxu0 0.0
        %612 = vmatpush.msra.mxu0 0.0
        %613 = vmatpush.msra.mxu0 0.0
        %614 = vmatpush.msra.mxu0 0.0
        %615 = vmatpush.msra.mxu0 0.0
        %616 = vmatpush.msra.mxu0 0.0
        %617 = vmatpush.msra.mxu0 0.0
        %618 = vmatpush.msra.mxu0 0.0
        %619 = vmatpush.msra.mxu0 0.0
        %620 = vmatpush.msra.mxu0 0.0
        %621 = vmatpush.msra.mxu0 0.0
        %622 = vmatpush.msra.mxu0 0.0
        %v623 = vand.u32 %v506, 4294901760
        %v624 = vsub.f32 %v506, %v623
        %v625 = vand.u32 %v624, 4294901760
        %626 = vmatpush.msra.mxu0 %v625
        %v627 = vand.u32 %v502, 4294901760
        %628 = vmatmul.f32.gmra.mxu0 %v627
        %v629 = vpop.f32.mrf.mxu0
        %v630 = vadd.f32 %v606, %v629
        %631 = vdwg.mxu0
        %632 = vmatpush.msra.mxu0 0.0
        %633 = vmatpush.msra.mxu0 0.0
        %634 = vmatpush.msra.mxu0 0.0
        %635 = vmatpush.msra.mxu0 0.0
        %636 = vmatpush.msra.mxu0 0.0
        %637 = vmatpush.msra.mxu0 0.0
        %638 = vmatpush.msra.mxu0 0.0
        %639 = vmatpush.msra.mxu0 0.0
        %640 = vmatpush.msra.mxu0 0.0
        %641 = vmatpush.msra.mxu0 0.0
        %642 = vmatpush.msra.mxu0 0.0
        %643 = vmatpush.msra.mxu0 0.0
        %644 = vmatpush.msra.mxu0 0.0
        %645 = vmatpush.msra.mxu0 0.0
        %646 = vmatpush.msra.mxu0 0.0
        %v647 = vand.u32 %v506, 4294901760
        %648 = vmatpush.msra.mxu0 %v647
        %v649 = vand.u32 %v502, 4294901760
        %650 = vmatmul.f32.gmra.mxu0 %v649
        %v651 = vpop.f32.mrf.mxu0
        %v652 = vadd.f32 %v630, %v651
        %653 = vdwg.mxu0
        %v655 = vrot.slane %v652, 1
        %v657 = vadd.f32 %v652, %v655
        %v658 = vxor.u32 %v657, 2147483648
        %v659 = vmul.f32 %v658, 1.442695
        %v660 = vpow.pop %v659
        %v661 = vadd.f32 %v660, 1.0
        %v662 = vrcp.pop %v661
        %v663 = vmul.f32 %v661, %v662
        %v664 = vsub.f32 1.0, %v663
        %v665 = vmul.f32 %v662, %v664
        %v666 = vadd.f32 %v662, %v665
        %vm667 = vweird.f32 %v661
        %vm668 = vweird.f32 %v662
        %vm669 = vmor %vm667, %vm668
        %v670 = vsel %vm669, %v662, %v666
        %v671 = vand.u32 2147483647, %v661
        %vm672 = vcmp.eq.f32.partialorder %v671, 8.507059e+37
        %v673 = vand.u32 %v661, 2147483648
        %v674 = vor.u32 1.1754944e-38, %v673
        %v675 = vsel %vm672, %v674, %v670
        %v676 = vmul.f32 1.0, %v675
        %v677 = vperm.slane %v676, 0
        %v678 = vlaneseq
        %v679 = vshrl.u32 %v678, 7
        %681 = vset.pattern.permute.xlu0 %v679
        %682 = vperm.xlu0 %681, %v677
        %v683 = vpop.permute.xlu0 %682
        %v684 = vlaneseq
        %v685 = vshrl.u32 %v684, 7
        %v686 = vadd.s32 %v685, 8
        %687 = vset.pattern.permute.xlu0 %v686
        %688 = vperm.xlu0 %687, %v677
        %v689 = vpop.permute.xlu0 %688
        %v690 = vlaneseq
        %v691 = vshrl.u32 %v690, 7
        %v692 = vadd.s32 %v691, 16
        %693 = vset.pattern.permute.xlu0 %v692
        %694 = vperm.xlu0 %693, %v677
        %v695 = vpop.permute.xlu0 %694
        %v696 = vlaneseq
        %v697 = vshrl.u32 %v696, 7
        %v698 = vadd.s32 %v697, 24
        %699 = vset.pattern.permute.xlu0 %v698
        %700 = vperm.xlu0 %699, %v677
        %v701 = vpop.permute.xlu0 %700
        %v702 = vmul.f32 %v235, %v683
        %v703 = vmul.f32 %v236, %v683
        %v704 = vmul.f32 %v237, %v689
        %v705 = vmul.f32 %v238, %v689
        %v706 = vmul.f32 %v239, %v695
        %v707 = vmul.f32 %v240, %v695
        %v708 = vmul.f32 %v241, %v701
        %v709 = vmul.f32 %v242, %v701
        %v710 = vadd.f32 %v702, %v704
        %v711 = vadd.f32 %v710, %v706
        %v712 = vadd.f32 %v711, %v708
        %v713 = vrot.slane %v712, 4
        %v714 = vadd.f32 %v712, %v713
        %v715 = vrot.slane %v714, 2
        %v716 = vadd.f32 %v714, %v715
        %v717 = vrot.slane %v716, 1
        %v718 = vadd.f32 %v716, %v717
        %v719 = vadd.f32 %v703, %v705
        %v720 = vadd.f32 %v719, %v707
        %v721 = vadd.f32 %v720, %v709
        %v722 = vrot.slane %v721, 4
        %v723 = vadd.f32 %v721, %v722
        %v724 = vrot.slane %v723, 2
        %v725 = vadd.f32 %v723, %v724
        %v726 = vrot.slane %v725, 1
        %v727 = vadd.f32 %v725, %v726
        %v728 = vmul.f32 %v718, 0.03125
        %v729 = vmul.f32 %v727, 0.03125
        %v730 = vmax.f32 %v702, %v706
        %v731 = vmax.f32 %v704, %v708
        %v732 = vmax.f32 %v730, %v731
        %v733 = vrot.slane %v732, 4
        %v734 = vmax.f32 %v732, %v733
        %v735 = vrot.slane %v734, 2
        %v736 = vmax.f32 %v734, %v735
        %v737 = vrot.slane %v736, 1
        %v738 = vmax.f32 %v736, %v737
        %v739 = vmax.f32 %v703, %v707
        %v740 = vmax.f32 %v705, %v709
        %v741 = vmax.f32 %v739, %v740
        %v742 = vrot.slane %v741, 4
        %v743 = vmax.f32 %v741, %v742
        %v744 = vrot.slane %v743, 2
        %v745 = vmax.f32 %v743, %v744
        %v746 = vrot.slane %v745, 1
        %v747 = vmax.f32 %v745, %v746
        %v748 = vld [vmem:[#allocation5] sm:$0xff]
        %v749 = vld [vmem:[#allocation5 + $0x8] sm:$0xff]
        %v750 = vld [vmem:[#allocation5 + $0x10] sm:$0xff]
        %v751 = vld [vmem:[#allocation5 + $0x18] sm:$0xff]
        %v752 = vld [vmem:[#allocation5 + $0x20] sm:$0xff]
        %v753 = vld [vmem:[#allocation5 + $0x28] sm:$0xff]
        %v754 = vld [vmem:[#allocation5 + $0x30] sm:$0xff]
        %v755 = vld [vmem:[#allocation5 + $0x38] sm:$0xff]
        %v756 = vld [vmem:[#allocation5 + $0x40] sm:$0xff]
        %v757 = vld [vmem:[#allocation5 + $0x48] sm:$0xff]
        %v758 = vld [vmem:[#allocation5 + $0x50] sm:$0xff]
        %v759 = vld [vmem:[#allocation5 + $0x58] sm:$0xff]
        %v760 = vld [vmem:[#allocation5 + $0x60] sm:$0xff]
        %v761 = vld [vmem:[#allocation5 + $0x68] sm:$0xff]
        %v762 = vld [vmem:[#allocation5 + $0x70] sm:$0xff]
        %v763 = vld [vmem:[#allocation5 + $0x78] sm:$0xff]
        %v764 = vld [vmem:[#allocation5 + $0x80] sm:$0xff]
        %v765 = vld [vmem:[#allocation5 + $0x88] sm:$0xff]
        %v766 = vld [vmem:[#allocation5 + $0x90] sm:$0xff]
        %v767 = vld [vmem:[#allocation5 + $0x98] sm:$0xff]
        %v768 = vld [vmem:[#allocation5 + $0xa0] sm:$0xff]
        %v769 = vld [vmem:[#allocation5 + $0xa8] sm:$0xff]
        %v770 = vld [vmem:[#allocation5 + $0xb0] sm:$0xff]
        %v771 = vld [vmem:[#allocation5 + $0xb8] sm:$0xff]
        %v772 = vld [vmem:[#allocation5 + $0xc0] sm:$0xff]
        %v773 = vld [vmem:[#allocation5 + $0xc8] sm:$0xff]
        %v774 = vld [vmem:[#allocation5 + $0xd0] sm:$0xff]
        %v775 = vld [vmem:[#allocation5 + $0xd8] sm:$0xff]
        %v776 = vld [vmem:[#allocation5 + $0xe0] sm:$0xff]
        %v777 = vld [vmem:[#allocation5 + $0xe8] sm:$0xff]
        %v778 = vld [vmem:[#allocation5 + $0xf0] sm:$0xff]
        %v779 = vld [vmem:[#allocation5 + $0xf8] sm:$0xff]
        %v780 = vld [vmem:[#allocation5 + $0x100] sm:$0xff]
        %v781 = vld [vmem:[#allocation5 + $0x108] sm:$0xff]
        %v782 = vld [vmem:[#allocation5 + $0x110] sm:$0xff]
        %v783 = vld [vmem:[#allocation5 + $0x118] sm:$0xff]
        %v784 = vld [vmem:[#allocation5 + $0x120] sm:$0xff]
        %v785 = vld [vmem:[#allocation5 + $0x128] sm:$0xff]
        %v786 = vld [vmem:[#allocation5 + $0x130] sm:$0xff]
        %v787 = vld [vmem:[#allocation5 + $0x138] sm:$0xff]
        %v788 = vld [vmem:[#allocation5 + $0x140] sm:$0xff]
        %v789 = vld [vmem:[#allocation5 + $0x148] sm:$0xff]
        %v790 = vld [vmem:[#allocation5 + $0x150] sm:$0xff]
        %v791 = vld [vmem:[#allocation5 + $0x158] sm:$0xff]
        %v792 = vld [vmem:[#allocation5 + $0x160] sm:$0xff]
        %v793 = vld [vmem:[#allocation5 + $0x168] sm:$0xff]
        %v794 = vld [vmem:[#allocation5 + $0x170] sm:$0xff]
        %v795 = vld [vmem:[#allocation5 + $0x178] sm:$0xff]
        %v796 = vld [vmem:[#allocation5 + $0x180] sm:$0xff]
        %v797 = vld [vmem:[#allocation5 + $0x188] sm:$0xff]
        %v798 = vld [vmem:[#allocation5 + $0x190] sm:$0xff]
        %v799 = vld [vmem:[#allocation5 + $0x198] sm:$0xff]
        %v800 = vld [vmem:[#allocation5 + $0x1a0] sm:$0xff]
        %v801 = vld [vmem:[#allocation5 + $0x1a8] sm:$0xff]
        %v802 = vld [vmem:[#allocation5 + $0x1b0] sm:$0xff]
        %v803 = vld [vmem:[#allocation5 + $0x1b8] sm:$0xff]
        %v804 = vld [vmem:[#allocation5 + $0x1c0] sm:$0xff]
        %v805 = vld [vmem:[#allocation5 + $0x1c8] sm:$0xff]
        %v806 = vld [vmem:[#allocation5 + $0x1d0] sm:$0xff]
        %v807 = vld [vmem:[#allocation5 + $0x1d8] sm:$0xff]
        %v808 = vld [vmem:[#allocation5 + $0x1e0] sm:$0xff]
        %v809 = vld [vmem:[#allocation5 + $0x1e8] sm:$0xff]
        %v810 = vld [vmem:[#allocation5 + $0x1f0] sm:$0xff]
        %v811 = vld [vmem:[#allocation5 + $0x1f8] sm:$0xff]
        %v812 = vld [vmem:[#allocation5 + $0x200] sm:$0xff]
        %v813 = vld [vmem:[#allocation5 + $0x208] sm:$0xff]
        %v814 = vld [vmem:[#allocation5 + $0x210] sm:$0xff]
        %v815 = vld [vmem:[#allocation5 + $0x218] sm:$0xff]
        %v816 = vld [vmem:[#allocation5 + $0x220] sm:$0xff]
        %v817 = vld [vmem:[#allocation5 + $0x228] sm:$0xff]
        %v818 = vld [vmem:[#allocation5 + $0x230] sm:$0xff]
        %v819 = vld [vmem:[#allocation5 + $0x238] sm:$0xff]
        %v820 = vld [vmem:[#allocation5 + $0x240] sm:$0xff]
        %v821 = vld [vmem:[#allocation5 + $0x248] sm:$0xff]
        %v822 = vld [vmem:[#allocation5 + $0x250] sm:$0xff]
        %v823 = vld [vmem:[#allocation5 + $0x258] sm:$0xff]
        %v824 = vld [vmem:[#allocation5 + $0x260] sm:$0xff]
        %v825 = vld [vmem:[#allocation5 + $0x268] sm:$0xff]
        %v826 = vld [vmem:[#allocation5 + $0x270] sm:$0xff]
        %v827 = vld [vmem:[#allocation5 + $0x278] sm:$0xff]
        %v828 = vld [vmem:[#allocation5 + $0x280] sm:$0xff]
        %v829 = vld [vmem:[#allocation5 + $0x288] sm:$0xff]
        %v830 = vld [vmem:[#allocation5 + $0x290] sm:$0xff]
        %v831 = vld [vmem:[#allocation5 + $0x298] sm:$0xff]
        %v832 = vld [vmem:[#allocation5 + $0x2a0] sm:$0xff]
        %v833 = vld [vmem:[#allocation5 + $0x2a8] sm:$0xff]
        %v834 = vld [vmem:[#allocation5 + $0x2b0] sm:$0xff]
        %v835 = vld [vmem:[#allocation5 + $0x2b8] sm:$0xff]
        %v836 = vld [vmem:[#allocation5 + $0x2c0] sm:$0xff]
        %v837 = vld [vmem:[#allocation5 + $0x2c8] sm:$0xff]
        %v838 = vld [vmem:[#allocation5 + $0x2d0] sm:$0xff]
        %v839 = vld [vmem:[#allocation5 + $0x2d8] sm:$0xff]
        %v840 = vld [vmem:[#allocation5 + $0x2e0] sm:$0xff]
        %v841 = vld [vmem:[#allocation5 + $0x2e8] sm:$0xff]
        %v842 = vld [vmem:[#allocation5 + $0x2f0] sm:$0xff]
        %v843 = vld [vmem:[#allocation5 + $0x2f8] sm:$0xff]
        %v844 = vld [vmem:[#allocation5 + $0x300] sm:$0xff]
        %v845 = vld [vmem:[#allocation5 + $0x308] sm:$0xff]
        %v846 = vld [vmem:[#allocation5 + $0x310] sm:$0xff]
        %v847 = vld [vmem:[#allocation5 + $0x318] sm:$0xff]
        %v848 = vld [vmem:[#allocation5 + $0x320] sm:$0xff]
        %v849 = vld [vmem:[#allocation5 + $0x328] sm:$0xff]
        %v850 = vld [vmem:[#allocation5 + $0x330] sm:$0xff]
        %v851 = vld [vmem:[#allocation5 + $0x338] sm:$0xff]
        %v852 = vld [vmem:[#allocation5 + $0x340] sm:$0xff]
        %v853 = vld [vmem:[#allocation5 + $0x348] sm:$0xff]
        %v854 = vld [vmem:[#allocation5 + $0x350] sm:$0xff]
        %v855 = vld [vmem:[#allocation5 + $0x358] sm:$0xff]
        %v856 = vld [vmem:[#allocation5 + $0x360] sm:$0xff]
        %v857 = vld [vmem:[#allocation5 + $0x368] sm:$0xff]
        %v858 = vld [vmem:[#allocation5 + $0x370] sm:$0xff]
        %v859 = vld [vmem:[#allocation5 + $0x378] sm:$0xff]
        %v860 = vld [vmem:[#allocation5 + $0x380] sm:$0xff]
        %v861 = vld [vmem:[#allocation5 + $0x388] sm:$0xff]
        %v862 = vld [vmem:[#allocation5 + $0x390] sm:$0xff]
        %v863 = vld [vmem:[#allocation5 + $0x398] sm:$0xff]
        %v864 = vld [vmem:[#allocation5 + $0x3a0] sm:$0xff]
        %v865 = vld [vmem:[#allocation5 + $0x3a8] sm:$0xff]
        %v866 = vld [vmem:[#allocation5 + $0x3b0] sm:$0xff]
        %v867 = vld [vmem:[#allocation5 + $0x3b8] sm:$0xff]
        %v868 = vld [vmem:[#allocation5 + $0x3c0] sm:$0xff]
        %v869 = vld [vmem:[#allocation5 + $0x3c8] sm:$0xff]
        %v870 = vld [vmem:[#allocation5 + $0x3d0] sm:$0xff]
        %v871 = vld [vmem:[#allocation5 + $0x3d8] sm:$0xff]
        %v872 = vld [vmem:[#allocation5 + $0x3e0] sm:$0xff]
        %v873 = vld [vmem:[#allocation5 + $0x3e8] sm:$0xff]
        %v874 = vld [vmem:[#allocation5 + $0x3f0] sm:$0xff]
        %v875 = vld [vmem:[#allocation5 + $0x3f8] sm:$0xff]
        %v876 = vand.u32 %v778, 4294901760
        %877 = vmatpush.msra.mxu0 %v876
        %v878 = vand.u32 %v776, 4294901760
        %879 = vmatpush.msra.mxu0 %v878
        %v880 = vand.u32 %v774, 4294901760
        %881 = vmatpush.msra.mxu0 %v880
        %v882 = vand.u32 %v772, 4294901760
        %883 = vmatpush.msra.mxu0 %v882
        %v884 = vand.u32 %v770, 4294901760
        %885 = vmatpush.msra.mxu0 %v884
        %v886 = vand.u32 %v768, 4294901760
        %887 = vmatpush.msra.mxu0 %v886
        %v888 = vand.u32 %v766, 4294901760
        %889 = vmatpush.msra.mxu0 %v888
        %v890 = vand.u32 %v764, 4294901760
        %891 = vmatpush.msra.mxu0 %v890
        %v892 = vand.u32 %v762, 4294901760
        %893 = vmatpush.msra.mxu0 %v892
        %v894 = vand.u32 %v760, 4294901760
        %895 = vmatpush.msra.mxu0 %v894
        %v896 = vand.u32 %v758, 4294901760
        %897 = vmatpush.msra.mxu0 %v896
        %v898 = vand.u32 %v756, 4294901760
        %899 = vmatpush.msra.mxu0 %v898
        %v900 = vand.u32 %v754, 4294901760
        %901 = vmatpush.msra.mxu0 %v900
        %v902 = vand.u32 %v752, 4294901760
        %903 = vmatpush.msra.mxu0 %v902
        %v904 = vand.u32 %v750, 4294901760
        %905 = vmatpush.msra.mxu0 %v904
        %v906 = vand.u32 %v748, 4294901760
        %907 = vmatpush.msra.mxu0 %v906
        %v908 = vand.u32 %v728, 4294901760
        %v909 = vsub.f32 %v728, %v908
        %v910 = vand.u32 %v909, 4294901760
        %v911 = vsub.f32 %v909, %v910
        %v912 = vand.u32 %v911, 4294901760
        %913 = vmatmul.f32.gmra.mxu0 %v912
        %v914 = vpop.f32.mrf.mxu0
        %v915 = vadd.f32 0.0, %v914
        %916 = vdwg.mxu0
        %v917 = vand.u32 %v778, 4294901760
        %v918 = vsub.f32 %v778, %v917
        %v919 = vand.u32 %v918, 4294901760
        %v920 = vsub.f32 %v918, %v919
        %v921 = vand.u32 %v920, 4294901760
        %922 = vmatpush.msra.mxu0 %v921
        %v923 = vand.u32 %v776, 4294901760
        %v924 = vsub.f32 %v776, %v923
        %v925 = vand.u32 %v924, 4294901760
        %v926 = vsub.f32 %v924, %v925
        %v927 = vand.u32 %v926, 4294901760
        %928 = vmatpush.msra.mxu0 %v927
        %v929 = vand.u32 %v774, 4294901760
        %v930 = vsub.f32 %v774, %v929
        %v931 = vand.u32 %v930, 4294901760
        %v932 = vsub.f32 %v930, %v931
        %v933 = vand.u32 %v932, 4294901760
        %934 = vmatpush.msra.mxu0 %v933
        %v935 = vand.u32 %v772, 4294901760
        %v936 = vsub.f32 %v772, %v935
        %v937 = vand.u32 %v936, 4294901760
        %v938 = vsub.f32 %v936, %v937
        %v939 = vand.u32 %v938, 4294901760
        %940 = vmatpush.msra.mxu0 %v939
        %v941 = vand.u32 %v770, 4294901760
        %v942 = vsub.f32 %v770, %v941
        %v943 = vand.u32 %v942, 4294901760
        %v944 = vsub.f32 %v942, %v943
        %v945 = vand.u32 %v944, 4294901760
        %946 = vmatpush.msra.mxu0 %v945
        %v947 = vand.u32 %v768, 4294901760
        %v948 = vsub.f32 %v768, %v947
        %v949 = vand.u32 %v948, 4294901760
        %v950 = vsub.f32 %v948, %v949
        %v951 = vand.u32 %v950, 4294901760
        %952 = vmatpush.msra.mxu0 %v951
        %v953 = vand.u32 %v766, 4294901760
        %v954 = vsub.f32 %v766, %v953
        %v955 = vand.u32 %v954, 4294901760
        %v956 = vsub.f32 %v954, %v955
        %v957 = vand.u32 %v956, 4294901760
        %958 = vmatpush.msra.mxu0 %v957
        %v959 = vand.u32 %v764, 4294901760
        %v960 = vsub.f32 %v764, %v959
        %v961 = vand.u32 %v960, 4294901760
        %v962 = vsub.f32 %v960, %v961
        %v963 = vand.u32 %v962, 4294901760
        %964 = vmatpush.msra.mxu0 %v963
        %v965 = vand.u32 %v762, 4294901760
        %v966 = vsub.f32 %v762, %v965
        %v967 = vand.u32 %v966, 4294901760
        %v968 = vsub.f32 %v966, %v967
        %v969 = vand.u32 %v968, 4294901760
        %970 = vmatpush.msra.mxu0 %v969
        %v971 = vand.u32 %v760, 4294901760
        %v972 = vsub.f32 %v760, %v971
        %v973 = vand.u32 %v972, 4294901760
        %v974 = vsub.f32 %v972, %v973
        %v975 = vand.u32 %v974, 4294901760
        %976 = vmatpush.msra.mxu0 %v975
        %v977 = vand.u32 %v758, 4294901760
        %v978 = vsub.f32 %v758, %v977
        %v979 = vand.u32 %v978, 4294901760
        %v980 = vsub.f32 %v978, %v979
        %v981 = vand.u32 %v980, 4294901760
        %982 = vmatpush.msra.mxu0 %v981
        %v983 = vand.u32 %v756, 4294901760
        %v984 = vsub.f32 %v756, %v983
        %v985 = vand.u32 %v984, 4294901760
        %v986 = vsub.f32 %v984, %v985
        %v987 = vand.u32 %v986, 4294901760
        %988 = vmatpush.msra.mxu0 %v987
        %v989 = vand.u32 %v754, 4294901760
        %v990 = vsub.f32 %v754, %v989
        %v991 = vand.u32 %v990, 4294901760
        %v992 = vsub.f32 %v990, %v991
        %v993 = vand.u32 %v992, 4294901760
        %994 = vmatpush.msra.mxu0 %v993
        %v995 = vand.u32 %v752, 4294901760
        %v996 = vsub.f32 %v752, %v995
        %v997 = vand.u32 %v996, 4294901760
        %v998 = vsub.f32 %v996, %v997
        %v999 = vand.u32 %v998, 4294901760
        %1000 = vmatpush.msra.mxu0 %v999
        %v1001 = vand.u32 %v750, 4294901760
        %v1002 = vsub.f32 %v750, %v1001
        %v1003 = vand.u32 %v1002, 4294901760
        %v1004 = vsub.f32 %v1002, %v1003
        %v1005 = vand.u32 %v1004, 4294901760
        %1006 = vmatpush.msra.mxu0 %v1005
        %v1007 = vand.u32 %v748, 4294901760
        %v1008 = vsub.f32 %v748, %v1007
        %v1009 = vand.u32 %v1008, 4294901760
        %v1010 = vsub.f32 %v1008, %v1009
        %v1011 = vand.u32 %v1010, 4294901760
        %1012 = vmatpush.msra.mxu0 %v1011
        %v1013 = vand.u32 %v728, 4294901760
        %1014 = vmatmul.f32.gmra.mxu0 %v1013
        %v1015 = vpop.f32.mrf.mxu0
        %v1016 = vadd.f32 %v915, %v1015
        %1017 = vdwg.mxu0
        %v1018 = vand.u32 %v778, 4294901760
        %v1019 = vsub.f32 %v778, %v1018
        %1020 = vmatpush.msra.mxu0 %v1019
        %v1021 = vand.u32 %v776, 4294901760
        %v1022 = vsub.f32 %v776, %v1021
        %1023 = vmatpush.msra.mxu0 %v1022
        %v1024 = vand.u32 %v774, 4294901760
        %v1025 = vsub.f32 %v774, %v1024
        %1026 = vmatpush.msra.mxu0 %v1025
        %v1027 = vand.u32 %v772, 4294901760
        %v1028 = vsub.f32 %v772, %v1027
        %1029 = vmatpush.msra.mxu0 %v1028
        %v1030 = vand.u32 %v770, 4294901760
        %v1031 = vsub.f32 %v770, %v1030
        %1032 = vmatpush.msra.mxu0 %v1031
        %v1033 = vand.u32 %v768, 4294901760
        %v1034 = vsub.f32 %v768, %v1033
        %1035 = vmatpush.msra.mxu0 %v1034
        %v1036 = vand.u32 %v766, 4294901760
        %v1037 = vsub.f32 %v766, %v1036
        %1038 = vmatpush.msra.mxu0 %v1037
        %v1039 = vand.u32 %v764, 4294901760
        %v1040 = vsub.f32 %v764, %v1039
        %1041 = vmatpush.msra.mxu0 %v1040
        %v1042 = vand.u32 %v762, 4294901760
        %v1043 = vsub.f32 %v762, %v1042
        %1044 = vmatpush.msra.mxu0 %v1043
        %v1045 = vand.u32 %v760, 4294901760
        %v1046 = vsub.f32 %v760, %v1045
        %1047 = vmatpush.msra.mxu0 %v1046
        %v1048 = vand.u32 %v758, 4294901760
        %v1049 = vsub.f32 %v758, %v1048
        %1050 = vmatpush.msra.mxu0 %v1049
        %v1051 = vand.u32 %v756, 4294901760
        %v1052 = vsub.f32 %v756, %v1051
        %1053 = vmatpush.msra.mxu0 %v1052
        %v1054 = vand.u32 %v754, 4294901760
        %v1055 = vsub.f32 %v754, %v1054
        %1056 = vmatpush.msra.mxu0 %v1055
        %v1057 = vand.u32 %v752, 4294901760
        %v1058 = vsub.f32 %v752, %v1057
        %1059 = vmatpush.msra.mxu0 %v1058
        %v1060 = vand.u32 %v750, 4294901760
        %v1061 = vsub.f32 %v750, %v1060
        %1062 = vmatpush.msra.mxu0 %v1061
        %v1063 = vand.u32 %v748, 4294901760
        %v1064 = vsub.f32 %v748, %v1063
        %1065 = vmatpush.msra.mxu0 %v1064
        %v1066 = vand.u32 %v728, 4294901760
        %v1067 = vsub.f32 %v728, %v1066
        %1068 = vmatmul.f32.gmra.mxu0 %v1067
        %v1069 = vpop.f32.mrf.mxu0
        %v1070 = vadd.f32 %v1016, %v1069
        %1071 = vdwg.mxu0
        %v1072 = vand.u32 %v778, 4294901760
        %1073 = vmatpush.msra.mxu0 %v1072
        %v1074 = vand.u32 %v776, 4294901760
        %1075 = vmatpush.msra.mxu0 %v1074
        %v1076 = vand.u32 %v774, 4294901760
        %1077 = vmatpush.msra.mxu0 %v1076
        %v1078 = vand.u32 %v772, 4294901760
        %1079 = vmatpush.msra.mxu0 %v1078
        %v1080 = vand.u32 %v770, 4294901760
        %1081 = vmatpush.msra.mxu0 %v1080
        %v1082 = vand.u32 %v768, 4294901760
        %1083 = vmatpush.msra.mxu0 %v1082
        %v1084 = vand.u32 %v766, 4294901760
        %1085 = vmatpush.msra.mxu0 %v1084
        %v1086 = vand.u32 %v764, 4294901760
        %1087 = vmatpush.msra.mxu0 %v1086
        %v1088 = vand.u32 %v762, 4294901760
        %1089 = vmatpush.msra.mxu0 %v1088
        %v1090 = vand.u32 %v760, 4294901760
        %1091 = vmatpush.msra.mxu0 %v1090
        %v1092 = vand.u32 %v758, 4294901760
        %1093 = vmatpush.msra.mxu0 %v1092
        %v1094 = vand.u32 %v756, 4294901760
        %1095 = vmatpush.msra.mxu0 %v1094
        %v1096 = vand.u32 %v754, 4294901760
        %1097 = vmatpush.msra.mxu0 %v1096
        %v1098 = vand.u32 %v752, 4294901760
        %1099 = vmatpush.msra.mxu0 %v1098
        %v1100 = vand.u32 %v750, 4294901760
        %1101 = vmatpush.msra.mxu0 %v1100
        %v1102 = vand.u32 %v748, 4294901760
        %1103 = vmatpush.msra.mxu0 %v1102
        %v1104 = vand.u32 %v728, 4294901760
        %v1105 = vsub.f32 %v728, %v1104
        %v1106 = vand.u32 %v1105, 4294901760
        %1107 = vmatmul.f32.gmra.mxu0 %v1106
        %v1108 = vpop.f32.mrf.mxu0
        %v1109 = vadd.f32 %v1070, %v1108
        %1110 = vdwg.mxu0
        %v1111 = vand.u32 %v778, 4294901760
        %v1112 = vsub.f32 %v778, %v1111
        %v1113 = vand.u32 %v1112, 4294901760
        %1114 = vmatpush.msra.mxu0 %v1113
        %v1115 = vand.u32 %v776, 4294901760
        %v1116 = vsub.f32 %v776, %v1115
        %v1117 = vand.u32 %v1116, 4294901760
        %1118 = vmatpush.msra.mxu0 %v1117
        %v1119 = vand.u32 %v774, 4294901760
        %v1120 = vsub.f32 %v774, %v1119
        %v1121 = vand.u32 %v1120, 4294901760
        %1122 = vmatpush.msra.mxu0 %v1121
        %v1123 = vand.u32 %v772, 4294901760
        %v1124 = vsub.f32 %v772, %v1123
        %v1125 = vand.u32 %v1124, 4294901760
        %1126 = vmatpush.msra.mxu0 %v1125
        %v1127 = vand.u32 %v770, 4294901760
        %v1128 = vsub.f32 %v770, %v1127
        %v1129 = vand.u32 %v1128, 4294901760
        %1130 = vmatpush.msra.mxu0 %v1129
        %v1131 = vand.u32 %v768, 4294901760
        %v1132 = vsub.f32 %v768, %v1131
        %v1133 = vand.u32 %v1132, 4294901760
        %1134 = vmatpush.msra.mxu0 %v1133
        %v1135 = vand.u32 %v766, 4294901760
        %v1136 = vsub.f32 %v766, %v1135
        %v1137 = vand.u32 %v1136, 4294901760
        %1138 = vmatpush.msra.mxu0 %v1137
        %v1139 = vand.u32 %v764, 4294901760
        %v1140 = vsub.f32 %v764, %v1139
        %v1141 = vand.u32 %v1140, 4294901760
        %1142 = vmatpush.msra.mxu0 %v1141
        %v1143 = vand.u32 %v762, 4294901760
        %v1144 = vsub.f32 %v762, %v1143
        %v1145 = vand.u32 %v1144, 4294901760
        %1146 = vmatpush.msra.mxu0 %v1145
        %v1147 = vand.u32 %v760, 4294901760
        %v1148 = vsub.f32 %v760, %v1147
        %v1149 = vand.u32 %v1148, 4294901760
        %1150 = vmatpush.msra.mxu0 %v1149
        %v1151 = vand.u32 %v758, 4294901760
        %v1152 = vsub.f32 %v758, %v1151
        %v1153 = vand.u32 %v1152, 4294901760
        %1154 = vmatpush.msra.mxu0 %v1153
        %v1155 = vand.u32 %v756, 4294901760
        %v1156 = vsub.f32 %v756, %v1155
        %v1157 = vand.u32 %v1156, 4294901760
        %1158 = vmatpush.msra.mxu0 %v1157
        %v1159 = vand.u32 %v754, 4294901760
        %v1160 = vsub.f32 %v754, %v1159
        %v1161 = vand.u32 %v1160, 4294901760
        %1162 = vmatpush.msra.mxu0 %v1161
        %v1163 = vand.u32 %v752, 4294901760
        %v1164 = vsub.f32 %v752, %v1163
        %v1165 = vand.u32 %v1164, 4294901760
        %1166 = vmatpush.msra.mxu0 %v1165
        %v1167 = vand.u32 %v750, 4294901760
        %v1168 = vsub.f32 %v750, %v1167
        %v1169 = vand.u32 %v1168, 4294901760
        %1170 = vmatpush.msra.mxu0 %v1169
        %v1171 = vand.u32 %v748, 4294901760
        %v1172 = vsub.f32 %v748, %v1171
        %v1173 = vand.u32 %v1172, 4294901760
        %1174 = vmatpush.msra.mxu0 %v1173
        %v1175 = vand.u32 %v728, 4294901760
        %1176 = vmatmul.f32.gmra.mxu0 %v1175
        %v1177 = vpop.f32.mrf.mxu0
        %v1178 = vadd.f32 %v1109, %v1177
        %1179 = vdwg.mxu0
        %v1180 = vand.u32 %v778, 4294901760
        %1181 = vmatpush.msra.mxu0 %v1180
        %v1182 = vand.u32 %v776, 4294901760
        %1183 = vmatpush.msra.mxu0 %v1182
        %v1184 = vand.u32 %v774, 4294901760
        %1185 = vmatpush.msra.mxu0 %v1184
        %v1186 = vand.u32 %v772, 4294901760
        %1187 = vmatpush.msra.mxu0 %v1186
        %v1188 = vand.u32 %v770, 4294901760
        %1189 = vmatpush.msra.mxu0 %v1188
        %v1190 = vand.u32 %v768, 4294901760
        %1191 = vmatpush.msra.mxu0 %v1190
        %v1192 = vand.u32 %v766, 4294901760
        %1193 = vmatpush.msra.mxu0 %v1192
        %v1194 = vand.u32 %v764, 4294901760
        %1195 = vmatpush.msra.mxu0 %v1194
        %v1196 = vand.u32 %v762, 4294901760
        %1197 = vmatpush.msra.mxu0 %v1196
        %v1198 = vand.u32 %v760, 4294901760
        %1199 = vmatpush.msra.mxu0 %v1198
        %v1200 = vand.u32 %v758, 4294901760
        %1201 = vmatpush.msra.mxu0 %v1200
        %v1202 = vand.u32 %v756, 4294901760
        %1203 = vmatpush.msra.mxu0 %v1202
        %v1204 = vand.u32 %v754, 4294901760
        %1205 = vmatpush.msra.mxu0 %v1204
        %v1206 = vand.u32 %v752, 4294901760
        %1207 = vmatpush.msra.mxu0 %v1206
        %v1208 = vand.u32 %v750, 4294901760
        %1209 = vmatpush.msra.mxu0 %v1208
        %v1210 = vand.u32 %v748, 4294901760
        %1211 = vmatpush.msra.mxu0 %v1210
        %v1212 = vand.u32 %v728, 4294901760
        %1213 = vmatmul.f32.gmra.mxu0 %v1212
        %v1214 = vpop.f32.mrf.mxu0
        %v1215 = vadd.f32 %v1178, %v1214
        %1216 = vdwg.mxu0
        %v1217 = vand.u32 %v810, 4294901760
        %1218 = vmatpush.msra.mxu0 %v1217
        %v1219 = vand.u32 %v808, 4294901760
        %1220 = vmatpush.msra.mxu0 %v1219
        %v1221 = vand.u32 %v806, 4294901760
        %1222 = vmatpush.msra.mxu0 %v1221
        %v1223 = vand.u32 %v804, 4294901760
        %1224 = vmatpush.msra.mxu0 %v1223
        %v1225 = vand.u32 %v802, 4294901760
        %1226 = vmatpush.msra.mxu0 %v1225
        %v1227 = vand.u32 %v800, 4294901760
        %1228 = vmatpush.msra.mxu0 %v1227
        %v1229 = vand.u32 %v798, 4294901760
        %1230 = vmatpush.msra.mxu0 %v1229
        %v1231 = vand.u32 %v796, 4294901760
        %1232 = vmatpush.msra.mxu0 %v1231
        %v1233 = vand.u32 %v794, 4294901760
        %1234 = vmatpush.msra.mxu0 %v1233
        %v1235 = vand.u32 %v792, 4294901760
        %1236 = vmatpush.msra.mxu0 %v1235
        %v1237 = vand.u32 %v790, 4294901760
        %1238 = vmatpush.msra.mxu0 %v1237
        %v1239 = vand.u32 %v788, 4294901760
        %1240 = vmatpush.msra.mxu0 %v1239
        %v1241 = vand.u32 %v786, 4294901760
        %1242 = vmatpush.msra.mxu0 %v1241
        %v1243 = vand.u32 %v784, 4294901760
        %1244 = vmatpush.msra.mxu0 %v1243
        %v1245 = vand.u32 %v782, 4294901760
        %1246 = vmatpush.msra.mxu0 %v1245
        %v1247 = vand.u32 %v780, 4294901760
        %1248 = vmatpush.msra.mxu0 %v1247
        %v1249 = vand.u32 %v729, 4294901760
        %v1250 = vsub.f32 %v729, %v1249
        %v1251 = vand.u32 %v1250, 4294901760
        %v1252 = vsub.f32 %v1250, %v1251
        %v1253 = vand.u32 %v1252, 4294901760
        %1254 = vmatmul.f32.gmra.mxu0 %v1253
        %v1255 = vpop.f32.mrf.mxu0
        %v1256 = vadd.f32 %v1215, %v1255
        %1257 = vdwg.mxu0
        %v1258 = vand.u32 %v810, 4294901760
        %v1259 = vsub.f32 %v810, %v1258
        %v1260 = vand.u32 %v1259, 4294901760
        %v1261 = vsub.f32 %v1259, %v1260
        %v1262 = vand.u32 %v1261, 4294901760
        %1263 = vmatpush.msra.mxu0 %v1262
        %v1264 = vand.u32 %v808, 4294901760
        %v1265 = vsub.f32 %v808, %v1264
        %v1266 = vand.u32 %v1265, 4294901760
        %v1267 = vsub.f32 %v1265, %v1266
        %v1268 = vand.u32 %v1267, 4294901760
        %1269 = vmatpush.msra.mxu0 %v1268
        %v1270 = vand.u32 %v806, 4294901760
        %v1271 = vsub.f32 %v806, %v1270
        %v1272 = vand.u32 %v1271, 4294901760
        %v1273 = vsub.f32 %v1271, %v1272
        %v1274 = vand.u32 %v1273, 4294901760
        %1275 = vmatpush.msra.mxu0 %v1274
        %v1276 = vand.u32 %v804, 4294901760
        %v1277 = vsub.f32 %v804, %v1276
        %v1278 = vand.u32 %v1277, 4294901760
        %v1279 = vsub.f32 %v1277, %v1278
        %v1280 = vand.u32 %v1279, 4294901760
        %1281 = vmatpush.msra.mxu0 %v1280
        %v1282 = vand.u32 %v802, 4294901760
        %v1283 = vsub.f32 %v802, %v1282
        %v1284 = vand.u32 %v1283, 4294901760
        %v1285 = vsub.f32 %v1283, %v1284
        %v1286 = vand.u32 %v1285, 4294901760
        %1287 = vmatpush.msra.mxu0 %v1286
        %v1288 = vand.u32 %v800, 4294901760
        %v1289 = vsub.f32 %v800, %v1288
        %v1290 = vand.u32 %v1289, 4294901760
        %v1291 = vsub.f32 %v1289, %v1290
        %v1292 = vand.u32 %v1291, 4294901760
        %1293 = vmatpush.msra.mxu0 %v1292
        %v1294 = vand.u32 %v798, 4294901760
        %v1295 = vsub.f32 %v798, %v1294
        %v1296 = vand.u32 %v1295, 4294901760
        %v1297 = vsub.f32 %v1295, %v1296
        %v1298 = vand.u32 %v1297, 4294901760
        %1299 = vmatpush.msra.mxu0 %v1298
        %v1300 = vand.u32 %v796, 4294901760
        %v1301 = vsub.f32 %v796, %v1300
        %v1302 = vand.u32 %v1301, 4294901760
        %v1303 = vsub.f32 %v1301, %v1302
        %v1304 = vand.u32 %v1303, 4294901760
        %1305 = vmatpush.msra.mxu0 %v1304
        %v1306 = vand.u32 %v794, 4294901760
        %v1307 = vsub.f32 %v794, %v1306
        %v1308 = vand.u32 %v1307, 4294901760
        %v1309 = vsub.f32 %v1307, %v1308
        %v1310 = vand.u32 %v1309, 4294901760
        %1311 = vmatpush.msra.mxu0 %v1310
        %v1312 = vand.u32 %v792, 4294901760
        %v1313 = vsub.f32 %v792, %v1312
        %v1314 = vand.u32 %v1313, 4294901760
        %v1315 = vsub.f32 %v1313, %v1314
        %v1316 = vand.u32 %v1315, 4294901760
        %1317 = vmatpush.msra.mxu0 %v1316
        %v1318 = vand.u32 %v790, 4294901760
        %v1319 = vsub.f32 %v790, %v1318
        %v1320 = vand.u32 %v1319, 4294901760
        %v1321 = vsub.f32 %v1319, %v1320
        %v1322 = vand.u32 %v1321, 4294901760
        %1323 = vmatpush.msra.mxu0 %v1322
        %v1324 = vand.u32 %v788, 4294901760
        %v1325 = vsub.f32 %v788, %v1324
        %v1326 = vand.u32 %v1325, 4294901760
        %v1327 = vsub.f32 %v1325, %v1326
        %v1328 = vand.u32 %v1327, 4294901760
        %1329 = vmatpush.msra.mxu0 %v1328
        %v1330 = vand.u32 %v786, 4294901760
        %v1331 = vsub.f32 %v786, %v1330
        %v1332 = vand.u32 %v1331, 4294901760
        %v1333 = vsub.f32 %v1331, %v1332
        %v1334 = vand.u32 %v1333, 4294901760
        %1335 = vmatpush.msra.mxu0 %v1334
        %v1336 = vand.u32 %v784, 4294901760
        %v1337 = vsub.f32 %v784, %v1336
        %v1338 = vand.u32 %v1337, 4294901760
        %v1339 = vsub.f32 %v1337, %v1338
        %v1340 = vand.u32 %v1339, 4294901760
        %1341 = vmatpush.msra.mxu0 %v1340
        %v1342 = vand.u32 %v782, 4294901760
        %v1343 = vsub.f32 %v782, %v1342
        %v1344 = vand.u32 %v1343, 4294901760
        %v1345 = vsub.f32 %v1343, %v1344
        %v1346 = vand.u32 %v1345, 4294901760
        %1347 = vmatpush.msra.mxu0 %v1346
        %v1348 = vand.u32 %v780, 4294901760
        %v1349 = vsub.f32 %v780, %v1348
        %v1350 = vand.u32 %v1349, 4294901760
        %v1351 = vsub.f32 %v1349, %v1350
        %v1352 = vand.u32 %v1351, 4294901760
        %1353 = vmatpush.msra.mxu0 %v1352
        %v1354 = vand.u32 %v729, 4294901760
        %1355 = vmatmul.f32.gmra.mxu0 %v1354
        %v1356 = vpop.f32.mrf.mxu0
        %v1357 = vadd.f32 %v1256, %v1356
        %1358 = vdwg.mxu0
        %v1359 = vand.u32 %v810, 4294901760
        %v1360 = vsub.f32 %v810, %v1359
        %1361 = vmatpush.msra.mxu0 %v1360
        %v1362 = vand.u32 %v808, 4294901760
        %v1363 = vsub.f32 %v808, %v1362
        %1364 = vmatpush.msra.mxu0 %v1363
        %v1365 = vand.u32 %v806, 4294901760
        %v1366 = vsub.f32 %v806, %v1365
        %1367 = vmatpush.msra.mxu0 %v1366
        %v1368 = vand.u32 %v804, 4294901760
        %v1369 = vsub.f32 %v804, %v1368
        %1370 = vmatpush.msra.mxu0 %v1369
        %v1371 = vand.u32 %v802, 4294901760
        %v1372 = vsub.f32 %v802, %v1371
        %1373 = vmatpush.msra.mxu0 %v1372
        %v1374 = vand.u32 %v800, 4294901760
        %v1375 = vsub.f32 %v800, %v1374
        %1376 = vmatpush.msra.mxu0 %v1375
        %v1377 = vand.u32 %v798, 4294901760
        %v1378 = vsub.f32 %v798, %v1377
        %1379 = vmatpush.msra.mxu0 %v1378
        %v1380 = vand.u32 %v796, 4294901760
        %v1381 = vsub.f32 %v796, %v1380
        %1382 = vmatpush.msra.mxu0 %v1381
        %v1383 = vand.u32 %v794, 4294901760
        %v1384 = vsub.f32 %v794, %v1383
        %1385 = vmatpush.msra.mxu0 %v1384
        %v1386 = vand.u32 %v792, 4294901760
        %v1387 = vsub.f32 %v792, %v1386
        %1388 = vmatpush.msra.mxu0 %v1387
        %v1389 = vand.u32 %v790, 4294901760
        %v1390 = vsub.f32 %v790, %v1389
        %1391 = vmatpush.msra.mxu0 %v1390
        %v1392 = vand.u32 %v788, 4294901760
        %v1393 = vsub.f32 %v788, %v1392
        %1394 = vmatpush.msra.mxu0 %v1393
        %v1395 = vand.u32 %v786, 4294901760
        %v1396 = vsub.f32 %v786, %v1395
        %1397 = vmatpush.msra.mxu0 %v1396
        %v1398 = vand.u32 %v784, 4294901760
        %v1399 = vsub.f32 %v784, %v1398
        %1400 = vmatpush.msra.mxu0 %v1399
        %v1401 = vand.u32 %v782, 4294901760
        %v1402 = vsub.f32 %v782, %v1401
        %1403 = vmatpush.msra.mxu0 %v1402
        %v1404 = vand.u32 %v780, 4294901760
        %v1405 = vsub.f32 %v780, %v1404
        %1406 = vmatpush.msra.mxu0 %v1405
        %v1407 = vand.u32 %v729, 4294901760
        %v1408 = vsub.f32 %v729, %v1407
        %1409 = vmatmul.f32.gmra.mxu0 %v1408
        %v1410 = vpop.f32.mrf.mxu0
        %v1411 = vadd.f32 %v1357, %v1410
        %1412 = vdwg.mxu0
        %v1413 = vand.u32 %v810, 4294901760
        %1414 = vmatpush.msra.mxu0 %v1413
        %v1415 = vand.u32 %v808, 4294901760
        %1416 = vmatpush.msra.mxu0 %v1415
        %v1417 = vand.u32 %v806, 4294901760
        %1418 = vmatpush.msra.mxu0 %v1417
        %v1419 = vand.u32 %v804, 4294901760
        %1420 = vmatpush.msra.mxu0 %v1419
        %v1421 = vand.u32 %v802, 4294901760
        %1422 = vmatpush.msra.mxu0 %v1421
        %v1423 = vand.u32 %v800, 4294901760
        %1424 = vmatpush.msra.mxu0 %v1423
        %v1425 = vand.u32 %v798, 4294901760
        %1426 = vmatpush.msra.mxu0 %v1425
        %v1427 = vand.u32 %v796, 4294901760
        %1428 = vmatpush.msra.mxu0 %v1427
        %v1429 = vand.u32 %v794, 4294901760
        %1430 = vmatpush.msra.mxu0 %v1429
        %v1431 = vand.u32 %v792, 4294901760
        %1432 = vmatpush.msra.mxu0 %v1431
        %v1433 = vand.u32 %v790, 4294901760
        %1434 = vmatpush.msra.mxu0 %v1433
        %v1435 = vand.u32 %v788, 4294901760
        %1436 = vmatpush.msra.mxu0 %v1435
        %v1437 = vand.u32 %v786, 4294901760
        %1438 = vmatpush.msra.mxu0 %v1437
        %v1439 = vand.u32 %v784, 4294901760
        %1440 = vmatpush.msra.mxu0 %v1439
        %v1441 = vand.u32 %v782, 4294901760
        %1442 = vmatpush.msra.mxu0 %v1441
        %v1443 = vand.u32 %v780, 4294901760
        %1444 = vmatpush.msra.mxu0 %v1443
        %v1445 = vand.u32 %v729, 4294901760
        %v1446 = vsub.f32 %v729, %v1445
        %v1447 = vand.u32 %v1446, 4294901760
        %1448 = vmatmul.f32.gmra.mxu0 %v1447
        %v1449 = vpop.f32.mrf.mxu0
        %v1450 = vadd.f32 %v1411, %v1449
        %1451 = vdwg.mxu0
        %v1452 = vand.u32 %v810, 4294901760
        %v1453 = vsub.f32 %v810, %v1452
        %v1454 = vand.u32 %v1453, 4294901760
        %1455 = vmatpush.msra.mxu0 %v1454
        %v1456 = vand.u32 %v808, 4294901760
        %v1457 = vsub.f32 %v808, %v1456
        %v1458 = vand.u32 %v1457, 4294901760
        %1459 = vmatpush.msra.mxu0 %v1458
        %v1460 = vand.u32 %v806, 4294901760
        %v1461 = vsub.f32 %v806, %v1460
        %v1462 = vand.u32 %v1461, 4294901760
        %1463 = vmatpush.msra.mxu0 %v1462
        %v1464 = vand.u32 %v804, 4294901760
        %v1465 = vsub.f32 %v804, %v1464
        %v1466 = vand.u32 %v1465, 4294901760
        %1467 = vmatpush.msra.mxu0 %v1466
        %v1468 = vand.u32 %v802, 4294901760
        %v1469 = vsub.f32 %v802, %v1468
        %v1470 = vand.u32 %v1469, 4294901760
        %1471 = vmatpush.msra.mxu0 %v1470
        %v1472 = vand.u32 %v800, 4294901760
        %v1473 = vsub.f32 %v800, %v1472
        %v1474 = vand.u32 %v1473, 4294901760
        %1475 = vmatpush.msra.mxu0 %v1474
        %v1476 = vand.u32 %v798, 4294901760
        %v1477 = vsub.f32 %v798, %v1476
        %v1478 = vand.u32 %v1477, 4294901760
        %1479 = vmatpush.msra.mxu0 %v1478
        %v1480 = vand.u32 %v796, 4294901760
        %v1481 = vsub.f32 %v796, %v1480
        %v1482 = vand.u32 %v1481, 4294901760
        %1483 = vmatpush.msra.mxu0 %v1482
        %v1484 = vand.u32 %v794, 4294901760
        %v1485 = vsub.f32 %v794, %v1484
        %v1486 = vand.u32 %v1485, 4294901760
        %1487 = vmatpush.msra.mxu0 %v1486
        %v1488 = vand.u32 %v792, 4294901760
        %v1489 = vsub.f32 %v792, %v1488
        %v1490 = vand.u32 %v1489, 4294901760
        %1491 = vmatpush.msra.mxu0 %v1490
        %v1492 = vand.u32 %v790, 4294901760
        %v1493 = vsub.f32 %v790, %v1492
        %v1494 = vand.u32 %v1493, 4294901760
        %1495 = vmatpush.msra.mxu0 %v1494
        %v1496 = vand.u32 %v788, 4294901760
        %v1497 = vsub.f32 %v788, %v1496
        %v1498 = vand.u32 %v1497, 4294901760
        %1499 = vmatpush.msra.mxu0 %v1498
        %v1500 = vand.u32 %v786, 4294901760
        %v1501 = vsub.f32 %v786, %v1500
        %v1502 = vand.u32 %v1501, 4294901760
        %1503 = vmatpush.msra.mxu0 %v1502
        %v1504 = vand.u32 %v784, 4294901760
        %v1505 = vsub.f32 %v784, %v1504
        %v1506 = vand.u32 %v1505, 4294901760
        %1507 = vmatpush.msra.mxu0 %v1506
        %v1508 = vand.u32 %v782, 4294901760
        %v1509 = vsub.f32 %v782, %v1508
        %v1510 = vand.u32 %v1509, 4294901760
        %1511 = vmatpush.msra.mxu0 %v1510
        %v1512 = vand.u32 %v780, 4294901760
        %v1513 = vsub.f32 %v780, %v1512
        %v1514 = vand.u32 %v1513, 4294901760
        %1515 = vmatpush.msra.mxu0 %v1514
        %v1516 = vand.u32 %v729, 4294901760
        %1517 = vmatmul.f32.gmra.mxu0 %v1516
        %v1518 = vpop.f32.mrf.mxu0
        %v1519 = vadd.f32 %v1450, %v1518
        %1520 = vdwg.mxu0
        %v1521 = vand.u32 %v810, 4294901760
        %1522 = vmatpush.msra.mxu0 %v1521
        %v1523 = vand.u32 %v808, 4294901760
        %1524 = vmatpush.msra.mxu0 %v1523
        %v1525 = vand.u32 %v806, 4294901760
        %1526 = vmatpush.msra.mxu0 %v1525
        %v1527 = vand.u32 %v804, 4294901760
        %1528 = vmatpush.msra.mxu0 %v1527
        %v1529 = vand.u32 %v802, 4294901760
        %1530 = vmatpush.msra.mxu0 %v1529
        %v1531 = vand.u32 %v800, 4294901760
        %1532 = vmatpush.msra.mxu0 %v1531
        %v1533 = vand.u32 %v798, 4294901760
        %1534 = vmatpush.msra.mxu0 %v1533
        %v1535 = vand.u32 %v796, 4294901760
        %1536 = vmatpush.msra.mxu0 %v1535
        %v1537 = vand.u32 %v794, 4294901760
        %1538 = vmatpush.msra.mxu0 %v1537
        %v1539 = vand.u32 %v792, 4294901760
        %1540 = vmatpush.msra.mxu0 %v1539
        %v1541 = vand.u32 %v790, 4294901760
        %1542 = vmatpush.msra.mxu0 %v1541
        %v1543 = vand.u32 %v788, 4294901760
        %1544 = vmatpush.msra.mxu0 %v1543
        %v1545 = vand.u32 %v786, 4294901760
        %1546 = vmatpush.msra.mxu0 %v1545
        %v1547 = vand.u32 %v784, 4294901760
        %1548 = vmatpush.msra.mxu0 %v1547
        %v1549 = vand.u32 %v782, 4294901760
        %1550 = vmatpush.msra.mxu0 %v1549
        %v1551 = vand.u32 %v780, 4294901760
        %1552 = vmatpush.msra.mxu0 %v1551
        %v1553 = vand.u32 %v729, 4294901760
        %1554 = vmatmul.f32.gmra.mxu0 %v1553
        %v1555 = vpop.f32.mrf.mxu0
        %v1556 = vadd.f32 %v1519, %v1555
        %1557 = vdwg.mxu0
        %v1558 = vand.u32 %v842, 4294901760
        %1559 = vmatpush.msra.mxu0 %v1558
        %v1560 = vand.u32 %v840, 4294901760
        %1561 = vmatpush.msra.mxu0 %v1560
        %v1562 = vand.u32 %v838, 4294901760
        %1563 = vmatpush.msra.mxu0 %v1562
        %v1564 = vand.u32 %v836, 4294901760
        %1565 = vmatpush.msra.mxu0 %v1564
        %v1566 = vand.u32 %v834, 4294901760
        %1567 = vmatpush.msra.mxu0 %v1566
        %v1568 = vand.u32 %v832, 4294901760
        %1569 = vmatpush.msra.mxu0 %v1568
        %v1570 = vand.u32 %v830, 4294901760
        %1571 = vmatpush.msra.mxu0 %v1570
        %v1572 = vand.u32 %v828, 4294901760
        %1573 = vmatpush.msra.mxu0 %v1572
        %v1574 = vand.u32 %v826, 4294901760
        %1575 = vmatpush.msra.mxu0 %v1574
        %v1576 = vand.u32 %v824, 4294901760
        %1577 = vmatpush.msra.mxu0 %v1576
        %v1578 = vand.u32 %v822, 4294901760
        %1579 = vmatpush.msra.mxu0 %v1578
        %v1580 = vand.u32 %v820, 4294901760
        %1581 = vmatpush.msra.mxu0 %v1580
        %v1582 = vand.u32 %v818, 4294901760
        %1583 = vmatpush.msra.mxu0 %v1582
        %v1584 = vand.u32 %v816, 4294901760
        %1585 = vmatpush.msra.mxu0 %v1584
        %v1586 = vand.u32 %v814, 4294901760
        %1587 = vmatpush.msra.mxu0 %v1586
        %v1588 = vand.u32 %v812, 4294901760
        %1589 = vmatpush.msra.mxu0 %v1588
        %v1590 = vand.u32 %v738, 4294901760
        %v1591 = vsub.f32 %v738, %v1590
        %v1592 = vand.u32 %v1591, 4294901760
        %v1593 = vsub.f32 %v1591, %v1592
        %v1594 = vand.u32 %v1593, 4294901760
        %1595 = vmatmul.f32.gmra.mxu0 %v1594
        %v1596 = vpop.f32.mrf.mxu0
        %v1597 = vadd.f32 %v1556, %v1596
        %1598 = vdwg.mxu0
        %v1599 = vand.u32 %v842, 4294901760
        %v1600 = vsub.f32 %v842, %v1599
        %v1601 = vand.u32 %v1600, 4294901760
        %v1602 = vsub.f32 %v1600, %v1601
        %v1603 = vand.u32 %v1602, 4294901760
        %1604 = vmatpush.msra.mxu0 %v1603
        %v1605 = vand.u32 %v840, 4294901760
        %v1606 = vsub.f32 %v840, %v1605
        %v1607 = vand.u32 %v1606, 4294901760
        %v1608 = vsub.f32 %v1606, %v1607
        %v1609 = vand.u32 %v1608, 4294901760
        %1610 = vmatpush.msra.mxu0 %v1609
        %v1611 = vand.u32 %v838, 4294901760
        %v1612 = vsub.f32 %v838, %v1611
        %v1613 = vand.u32 %v1612, 4294901760
        %v1614 = vsub.f32 %v1612, %v1613
        %v1615 = vand.u32 %v1614, 4294901760
        %1616 = vmatpush.msra.mxu0 %v1615
        %v1617 = vand.u32 %v836, 4294901760
        %v1618 = vsub.f32 %v836, %v1617
        %v1619 = vand.u32 %v1618, 4294901760
        %v1620 = vsub.f32 %v1618, %v1619
        %v1621 = vand.u32 %v1620, 4294901760
        %1622 = vmatpush.msra.mxu0 %v1621
        %v1623 = vand.u32 %v834, 4294901760
        %v1624 = vsub.f32 %v834, %v1623
        %v1625 = vand.u32 %v1624, 4294901760
        %v1626 = vsub.f32 %v1624, %v1625
        %v1627 = vand.u32 %v1626, 4294901760
        %1628 = vmatpush.msra.mxu0 %v1627
        %v1629 = vand.u32 %v832, 4294901760
        %v1630 = vsub.f32 %v832, %v1629
        %v1631 = vand.u32 %v1630, 4294901760
        %v1632 = vsub.f32 %v1630, %v1631
        %v1633 = vand.u32 %v1632, 4294901760
        %1634 = vmatpush.msra.mxu0 %v1633
        %v1635 = vand.u32 %v830, 4294901760
        %v1636 = vsub.f32 %v830, %v1635
        %v1637 = vand.u32 %v1636, 4294901760
        %v1638 = vsub.f32 %v1636, %v1637
        %v1639 = vand.u32 %v1638, 4294901760
        %1640 = vmatpush.msra.mxu0 %v1639
        %v1641 = vand.u32 %v828, 4294901760
        %v1642 = vsub.f32 %v828, %v1641
        %v1643 = vand.u32 %v1642, 4294901760
        %v1644 = vsub.f32 %v1642, %v1643
        %v1645 = vand.u32 %v1644, 4294901760
        %1646 = vmatpush.msra.mxu0 %v1645
        %v1647 = vand.u32 %v826, 4294901760
        %v1648 = vsub.f32 %v826, %v1647
        %v1649 = vand.u32 %v1648, 4294901760
        %v1650 = vsub.f32 %v1648, %v1649
        %v1651 = vand.u32 %v1650, 4294901760
        %1652 = vmatpush.msra.mxu0 %v1651
        %v1653 = vand.u32 %v824, 4294901760
        %v1654 = vsub.f32 %v824, %v1653
        %v1655 = vand.u32 %v1654, 4294901760
        %v1656 = vsub.f32 %v1654, %v1655
        %v1657 = vand.u32 %v1656, 4294901760
        %1658 = vmatpush.msra.mxu0 %v1657
        %v1659 = vand.u32 %v822, 4294901760
        %v1660 = vsub.f32 %v822, %v1659
        %v1661 = vand.u32 %v1660, 4294901760
        %v1662 = vsub.f32 %v1660, %v1661
        %v1663 = vand.u32 %v1662, 4294901760
        %1664 = vmatpush.msra.mxu0 %v1663
        %v1665 = vand.u32 %v820, 4294901760
        %v1666 = vsub.f32 %v820, %v1665
        %v1667 = vand.u32 %v1666, 4294901760
        %v1668 = vsub.f32 %v1666, %v1667
        %v1669 = vand.u32 %v1668, 4294901760
        %1670 = vmatpush.msra.mxu0 %v1669
        %v1671 = vand.u32 %v818, 4294901760
        %v1672 = vsub.f32 %v818, %v1671
        %v1673 = vand.u32 %v1672, 4294901760
        %v1674 = vsub.f32 %v1672, %v1673
        %v1675 = vand.u32 %v1674, 4294901760
        %1676 = vmatpush.msra.mxu0 %v1675
        %v1677 = vand.u32 %v816, 4294901760
        %v1678 = vsub.f32 %v816, %v1677
        %v1679 = vand.u32 %v1678, 4294901760
        %v1680 = vsub.f32 %v1678, %v1679
        %v1681 = vand.u32 %v1680, 4294901760
        %1682 = vmatpush.msra.mxu0 %v1681
        %v1683 = vand.u32 %v814, 4294901760
        %v1684 = vsub.f32 %v814, %v1683
        %v1685 = vand.u32 %v1684, 4294901760
        %v1686 = vsub.f32 %v1684, %v1685
        %v1687 = vand.u32 %v1686, 4294901760
        %1688 = vmatpush.msra.mxu0 %v1687
        %v1689 = vand.u32 %v812, 4294901760
        %v1690 = vsub.f32 %v812, %v1689
        %v1691 = vand.u32 %v1690, 4294901760
        %v1692 = vsub.f32 %v1690, %v1691
        %v1693 = vand.u32 %v1692, 4294901760
        %1694 = vmatpush.msra.mxu0 %v1693
        %v1695 = vand.u32 %v738, 4294901760
        %1696 = vmatmul.f32.gmra.mxu0 %v1695
        %v1697 = vpop.f32.mrf.mxu0
        %v1698 = vadd.f32 %v1597, %v1697
        %1699 = vdwg.mxu0
        %v1700 = vand.u32 %v842, 4294901760
        %v1701 = vsub.f32 %v842, %v1700
        %1702 = vmatpush.msra.mxu0 %v1701
        %v1703 = vand.u32 %v840, 4294901760
        %v1704 = vsub.f32 %v840, %v1703
        %1705 = vmatpush.msra.mxu0 %v1704
        %v1706 = vand.u32 %v838, 4294901760
        %v1707 = vsub.f32 %v838, %v1706
        %1708 = vmatpush.msra.mxu0 %v1707
        %v1709 = vand.u32 %v836, 4294901760
        %v1710 = vsub.f32 %v836, %v1709
        %1711 = vmatpush.msra.mxu0 %v1710
        %v1712 = vand.u32 %v834, 4294901760
        %v1713 = vsub.f32 %v834, %v1712
        %1714 = vmatpush.msra.mxu0 %v1713
        %v1715 = vand.u32 %v832, 4294901760
        %v1716 = vsub.f32 %v832, %v1715
        %1717 = vmatpush.msra.mxu0 %v1716
        %v1718 = vand.u32 %v830, 4294901760
        %v1719 = vsub.f32 %v830, %v1718
        %1720 = vmatpush.msra.mxu0 %v1719
        %v1721 = vand.u32 %v828, 4294901760
        %v1722 = vsub.f32 %v828, %v1721
        %1723 = vmatpush.msra.mxu0 %v1722
        %v1724 = vand.u32 %v826, 4294901760
        %v1725 = vsub.f32 %v826, %v1724
        %1726 = vmatpush.msra.mxu0 %v1725
        %v1727 = vand.u32 %v824, 4294901760
        %v1728 = vsub.f32 %v824, %v1727
        %1729 = vmatpush.msra.mxu0 %v1728
        %v1730 = vand.u32 %v822, 4294901760
        %v1731 = vsub.f32 %v822, %v1730
        %1732 = vmatpush.msra.mxu0 %v1731
        %v1733 = vand.u32 %v820, 4294901760
        %v1734 = vsub.f32 %v820, %v1733
        %1735 = vmatpush.msra.mxu0 %v1734
        %v1736 = vand.u32 %v818, 4294901760
        %v1737 = vsub.f32 %v818, %v1736
        %1738 = vmatpush.msra.mxu0 %v1737
        %v1739 = vand.u32 %v816, 4294901760
        %v1740 = vsub.f32 %v816, %v1739
        %1741 = vmatpush.msra.mxu0 %v1740
        %v1742 = vand.u32 %v814, 4294901760
        %v1743 = vsub.f32 %v814, %v1742
        %1744 = vmatpush.msra.mxu0 %v1743
        %v1745 = vand.u32 %v812, 4294901760
        %v1746 = vsub.f32 %v812, %v1745
        %1747 = vmatpush.msra.mxu0 %v1746
        %v1748 = vand.u32 %v738, 4294901760
        %v1749 = vsub.f32 %v738, %v1748
        %1750 = vmatmul.f32.gmra.mxu0 %v1749
        %v1751 = vpop.f32.mrf.mxu0
        %v1752 = vadd.f32 %v1698, %v1751
        %1753 = vdwg.mxu0
        %v1754 = vand.u32 %v842, 4294901760
        %1755 = vmatpush.msra.mxu0 %v1754
        %v1756 = vand.u32 %v840, 4294901760
        %1757 = vmatpush.msra.mxu0 %v1756
        %v1758 = vand.u32 %v838, 4294901760
        %1759 = vmatpush.msra.mxu0 %v1758
        %v1760 = vand.u32 %v836, 4294901760
        %1761 = vmatpush.msra.mxu0 %v1760
        %v1762 = vand.u32 %v834, 4294901760
        %1763 = vmatpush.msra.mxu0 %v1762
        %v1764 = vand.u32 %v832, 4294901760
        %1765 = vmatpush.msra.mxu0 %v1764
        %v1766 = vand.u32 %v830, 4294901760
        %1767 = vmatpush.msra.mxu0 %v1766
        %v1768 = vand.u32 %v828, 4294901760
        %1769 = vmatpush.msra.mxu0 %v1768
        %v1770 = vand.u32 %v826, 4294901760
        %1771 = vmatpush.msra.mxu0 %v1770
        %v1772 = vand.u32 %v824, 4294901760
        %1773 = vmatpush.msra.mxu0 %v1772
        %v1774 = vand.u32 %v822, 4294901760
        %1775 = vmatpush.msra.mxu0 %v1774
        %v1776 = vand.u32 %v820, 4294901760
        %1777 = vmatpush.msra.mxu0 %v1776
        %v1778 = vand.u32 %v818, 4294901760
        %1779 = vmatpush.msra.mxu0 %v1778
        %v1780 = vand.u32 %v816, 4294901760
        %1781 = vmatpush.msra.mxu0 %v1780
        %v1782 = vand.u32 %v814, 4294901760
        %1783 = vmatpush.msra.mxu0 %v1782
        %v1784 = vand.u32 %v812, 4294901760
        %1785 = vmatpush.msra.mxu0 %v1784
        %v1786 = vand.u32 %v738, 4294901760
        %v1787 = vsub.f32 %v738, %v1786
        %v1788 = vand.u32 %v1787, 4294901760
        %1789 = vmatmul.f32.gmra.mxu0 %v1788
        %v1790 = vpop.f32.mrf.mxu0
        %v1791 = vadd.f32 %v1752, %v1790
        %1792 = vdwg.mxu0
        %v1793 = vand.u32 %v842, 4294901760
        %v1794 = vsub.f32 %v842, %v1793
        %v1795 = vand.u32 %v1794, 4294901760
        %1796 = vmatpush.msra.mxu0 %v1795
        %v1797 = vand.u32 %v840, 4294901760
        %v1798 = vsub.f32 %v840, %v1797
        %v1799 = vand.u32 %v1798, 4294901760
        %1800 = vmatpush.msra.mxu0 %v1799
        %v1801 = vand.u32 %v838, 4294901760
        %v1802 = vsub.f32 %v838, %v1801
        %v1803 = vand.u32 %v1802, 4294901760
        %1804 = vmatpush.msra.mxu0 %v1803
        %v1805 = vand.u32 %v836, 4294901760
        %v1806 = vsub.f32 %v836, %v1805
        %v1807 = vand.u32 %v1806, 4294901760
        %1808 = vmatpush.msra.mxu0 %v1807
        %v1809 = vand.u32 %v834, 4294901760
        %v1810 = vsub.f32 %v834, %v1809
        %v1811 = vand.u32 %v1810, 4294901760
        %1812 = vmatpush.msra.mxu0 %v1811
        %v1813 = vand.u32 %v832, 4294901760
        %v1814 = vsub.f32 %v832, %v1813
        %v1815 = vand.u32 %v1814, 4294901760
        %1816 = vmatpush.msra.mxu0 %v1815
        %v1817 = vand.u32 %v830, 4294901760
        %v1818 = vsub.f32 %v830, %v1817
        %v1819 = vand.u32 %v1818, 4294901760
        %1820 = vmatpush.msra.mxu0 %v1819
        %v1821 = vand.u32 %v828, 4294901760
        %v1822 = vsub.f32 %v828, %v1821
        %v1823 = vand.u32 %v1822, 4294901760
        %1824 = vmatpush.msra.mxu0 %v1823
        %v1825 = vand.u32 %v826, 4294901760
        %v1826 = vsub.f32 %v826, %v1825
        %v1827 = vand.u32 %v1826, 4294901760
        %1828 = vmatpush.msra.mxu0 %v1827
        %v1829 = vand.u32 %v824, 4294901760
        %v1830 = vsub.f32 %v824, %v1829
        %v1831 = vand.u32 %v1830, 4294901760
        %1832 = vmatpush.msra.mxu0 %v1831
        %v1833 = vand.u32 %v822, 4294901760
        %v1834 = vsub.f32 %v822, %v1833
        %v1835 = vand.u32 %v1834, 4294901760
        %1836 = vmatpush.msra.mxu0 %v1835
        %v1837 = vand.u32 %v820, 4294901760
        %v1838 = vsub.f32 %v820, %v1837
        %v1839 = vand.u32 %v1838, 4294901760
        %1840 = vmatpush.msra.mxu0 %v1839
        %v1841 = vand.u32 %v818, 4294901760
        %v1842 = vsub.f32 %v818, %v1841
        %v1843 = vand.u32 %v1842, 4294901760
        %1844 = vmatpush.msra.mxu0 %v1843
        %v1845 = vand.u32 %v816, 4294901760
        %v1846 = vsub.f32 %v816, %v1845
        %v1847 = vand.u32 %v1846, 4294901760
        %1848 = vmatpush.msra.mxu0 %v1847
        %v1849 = vand.u32 %v814, 4294901760
        %v1850 = vsub.f32 %v814, %v1849
        %v1851 = vand.u32 %v1850, 4294901760
        %1852 = vmatpush.msra.mxu0 %v1851
        %v1853 = vand.u32 %v812, 4294901760
        %v1854 = vsub.f32 %v812, %v1853
        %v1855 = vand.u32 %v1854, 4294901760
        %1856 = vmatpush.msra.mxu0 %v1855
        %v1857 = vand.u32 %v738, 4294901760
        %1858 = vmatmul.f32.gmra.mxu0 %v1857
        %v1859 = vpop.f32.mrf.mxu0
        %v1860 = vadd.f32 %v1791, %v1859
        %1861 = vdwg.mxu0
        %v1862 = vand.u32 %v842, 4294901760
        %1863 = vmatpush.msra.mxu0 %v1862
        %v1864 = vand.u32 %v840, 4294901760
        %1865 = vmatpush.msra.mxu0 %v1864
        %v1866 = vand.u32 %v838, 4294901760
        %1867 = vmatpush.msra.mxu0 %v1866
        %v1868 = vand.u32 %v836, 4294901760
        %1869 = vmatpush.msra.mxu0 %v1868
        %v1870 = vand.u32 %v834, 4294901760
        %1871 = vmatpush.msra.mxu0 %v1870
        %v1872 = vand.u32 %v832, 4294901760
        %1873 = vmatpush.msra.mxu0 %v1872
        %v1874 = vand.u32 %v830, 4294901760
        %1875 = vmatpush.msra.mxu0 %v1874
        %v1876 = vand.u32 %v828, 4294901760
        %1877 = vmatpush.msra.mxu0 %v1876
        %v1878 = vand.u32 %v826, 4294901760
        %1879 = vmatpush.msra.mxu0 %v1878
        %v1880 = vand.u32 %v824, 4294901760
        %1881 = vmatpush.msra.mxu0 %v1880
        %v1882 = vand.u32 %v822, 4294901760
        %1883 = vmatpush.msra.mxu0 %v1882
        %v1884 = vand.u32 %v820, 4294901760
        %1885 = vmatpush.msra.mxu0 %v1884
        %v1886 = vand.u32 %v818, 4294901760
        %1887 = vmatpush.msra.mxu0 %v1886
        %v1888 = vand.u32 %v816, 4294901760
        %1889 = vmatpush.msra.mxu0 %v1888
        %v1890 = vand.u32 %v814, 4294901760
        %1891 = vmatpush.msra.mxu0 %v1890
        %v1892 = vand.u32 %v812, 4294901760
        %1893 = vmatpush.msra.mxu0 %v1892
        %v1894 = vand.u32 %v738, 4294901760
        %1895 = vmatmul.f32.gmra.mxu0 %v1894
        %v1896 = vpop.f32.mrf.mxu0
        %v1897 = vadd.f32 %v1860, %v1896
        %1898 = vdwg.mxu0
        %v1899 = vand.u32 %v874, 4294901760
        %1900 = vmatpush.msra.mxu0 %v1899
        %v1901 = vand.u32 %v872, 4294901760
        %1902 = vmatpush.msra.mxu0 %v1901
        %v1903 = vand.u32 %v870, 4294901760
        %1904 = vmatpush.msra.mxu0 %v1903
        %v1905 = vand.u32 %v868, 4294901760
        %1906 = vmatpush.msra.mxu0 %v1905
        %v1907 = vand.u32 %v866, 4294901760
        %1908 = vmatpush.msra.mxu0 %v1907
        %v1909 = vand.u32 %v864, 4294901760
        %1910 = vmatpush.msra.mxu0 %v1909
        %v1911 = vand.u32 %v862, 4294901760
        %1912 = vmatpush.msra.mxu0 %v1911
        %v1913 = vand.u32 %v860, 4294901760
        %1914 = vmatpush.msra.mxu0 %v1913
        %v1915 = vand.u32 %v858, 4294901760
        %1916 = vmatpush.msra.mxu0 %v1915
        %v1917 = vand.u32 %v856, 4294901760
        %1918 = vmatpush.msra.mxu0 %v1917
        %v1919 = vand.u32 %v854, 4294901760
        %1920 = vmatpush.msra.mxu0 %v1919
        %v1921 = vand.u32 %v852, 4294901760
        %1922 = vmatpush.msra.mxu0 %v1921
        %v1923 = vand.u32 %v850, 4294901760
        %1924 = vmatpush.msra.mxu0 %v1923
        %v1925 = vand.u32 %v848, 4294901760
        %1926 = vmatpush.msra.mxu0 %v1925
        %v1927 = vand.u32 %v846, 4294901760
        %1928 = vmatpush.msra.mxu0 %v1927
        %v1929 = vand.u32 %v844, 4294901760
        %1930 = vmatpush.msra.mxu0 %v1929
        %v1931 = vand.u32 %v747, 4294901760
        %v1932 = vsub.f32 %v747, %v1931
        %v1933 = vand.u32 %v1932, 4294901760
        %v1934 = vsub.f32 %v1932, %v1933
        %v1935 = vand.u32 %v1934, 4294901760
        %1936 = vmatmul.f32.gmra.mxu0 %v1935
        %v1937 = vpop.f32.mrf.mxu0
        %v1938 = vadd.f32 %v1897, %v1937
        %1939 = vdwg.mxu0
        %v1940 = vand.u32 %v874, 4294901760
        %v1941 = vsub.f32 %v874, %v1940
        %v1942 = vand.u32 %v1941, 4294901760
        %v1943 = vsub.f32 %v1941, %v1942
        %v1944 = vand.u32 %v1943, 4294901760
        %1945 = vmatpush.msra.mxu0 %v1944
        %v1946 = vand.u32 %v872, 4294901760
        %v1947 = vsub.f32 %v872, %v1946
        %v1948 = vand.u32 %v1947, 4294901760
        %v1949 = vsub.f32 %v1947, %v1948
        %v1950 = vand.u32 %v1949, 4294901760
        %1951 = vmatpush.msra.mxu0 %v1950
        %v1952 = vand.u32 %v870, 4294901760
        %v1953 = vsub.f32 %v870, %v1952
        %v1954 = vand.u32 %v1953, 4294901760
        %v1955 = vsub.f32 %v1953, %v1954
        %v1956 = vand.u32 %v1955, 4294901760
        %1957 = vmatpush.msra.mxu0 %v1956
        %v1958 = vand.u32 %v868, 4294901760
        %v1959 = vsub.f32 %v868, %v1958
        %v1960 = vand.u32 %v1959, 4294901760
        %v1961 = vsub.f32 %v1959, %v1960
        %v1962 = vand.u32 %v1961, 4294901760
        %1963 = vmatpush.msra.mxu0 %v1962
        %v1964 = vand.u32 %v866, 4294901760
        %v1965 = vsub.f32 %v866, %v1964
        %v1966 = vand.u32 %v1965, 4294901760
        %v1967 = vsub.f32 %v1965, %v1966
        %v1968 = vand.u32 %v1967, 4294901760
        %1969 = vmatpush.msra.mxu0 %v1968
        %v1970 = vand.u32 %v864, 4294901760
        %v1971 = vsub.f32 %v864, %v1970
        %v1972 = vand.u32 %v1971, 4294901760
        %v1973 = vsub.f32 %v1971, %v1972
        %v1974 = vand.u32 %v1973, 4294901760
        %1975 = vmatpush.msra.mxu0 %v1974
        %v1976 = vand.u32 %v862, 4294901760
        %v1977 = vsub.f32 %v862, %v1976
        %v1978 = vand.u32 %v1977, 4294901760
        %v1979 = vsub.f32 %v1977, %v1978
        %v1980 = vand.u32 %v1979, 4294901760
        %1981 = vmatpush.msra.mxu0 %v1980
        %v1982 = vand.u32 %v860, 4294901760
        %v1983 = vsub.f32 %v860, %v1982
        %v1984 = vand.u32 %v1983, 4294901760
        %v1985 = vsub.f32 %v1983, %v1984
        %v1986 = vand.u32 %v1985, 4294901760
        %1987 = vmatpush.msra.mxu0 %v1986
        %v1988 = vand.u32 %v858, 4294901760
        %v1989 = vsub.f32 %v858, %v1988
        %v1990 = vand.u32 %v1989, 4294901760
        %v1991 = vsub.f32 %v1989, %v1990
        %v1992 = vand.u32 %v1991, 4294901760
        %1993 = vmatpush.msra.mxu0 %v1992
        %v1994 = vand.u32 %v856, 4294901760
        %v1995 = vsub.f32 %v856, %v1994
        %v1996 = vand.u32 %v1995, 4294901760
        %v1997 = vsub.f32 %v1995, %v1996
        %v1998 = vand.u32 %v1997, 4294901760
        %1999 = vmatpush.msra.mxu0 %v1998
        %v2000 = vand.u32 %v854, 4294901760
        %v2001 = vsub.f32 %v854, %v2000
        %v2002 = vand.u32 %v2001, 4294901760
        %v2003 = vsub.f32 %v2001, %v2002
        %v2004 = vand.u32 %v2003, 4294901760
        %2005 = vmatpush.msra.mxu0 %v2004
        %v2006 = vand.u32 %v852, 4294901760
        %v2007 = vsub.f32 %v852, %v2006
        %v2008 = vand.u32 %v2007, 4294901760
        %v2009 = vsub.f32 %v2007, %v2008
        %v2010 = vand.u32 %v2009, 4294901760
        %2011 = vmatpush.msra.mxu0 %v2010
        %v2012 = vand.u32 %v850, 4294901760
        %v2013 = vsub.f32 %v850, %v2012
        %v2014 = vand.u32 %v2013, 4294901760
        %v2015 = vsub.f32 %v2013, %v2014
        %v2016 = vand.u32 %v2015, 4294901760
        %2017 = vmatpush.msra.mxu0 %v2016
        %v2018 = vand.u32 %v848, 4294901760
        %v2019 = vsub.f32 %v848, %v2018
        %v2020 = vand.u32 %v2019, 4294901760
        %v2021 = vsub.f32 %v2019, %v2020
        %v2022 = vand.u32 %v2021, 4294901760
        %2023 = vmatpush.msra.mxu0 %v2022
        %v2024 = vand.u32 %v846, 4294901760
        %v2025 = vsub.f32 %v846, %v2024
        %v2026 = vand.u32 %v2025, 4294901760
        %v2027 = vsub.f32 %v2025, %v2026
        %v2028 = vand.u32 %v2027, 4294901760
        %2029 = vmatpush.msra.mxu0 %v2028
        %v2030 = vand.u32 %v844, 4294901760
        %v2031 = vsub.f32 %v844, %v2030
        %v2032 = vand.u32 %v2031, 4294901760
        %v2033 = vsub.f32 %v2031, %v2032
        %v2034 = vand.u32 %v2033, 4294901760
        %2035 = vmatpush.msra.mxu0 %v2034
        %v2036 = vand.u32 %v747, 4294901760
        %2037 = vmatmul.f32.gmra.mxu0 %v2036
        %v2038 = vpop.f32.mrf.mxu0
        %v2039 = vadd.f32 %v1938, %v2038
        %2040 = vdwg.mxu0
        %v2041 = vand.u32 %v874, 4294901760
        %v2042 = vsub.f32 %v874, %v2041
        %2043 = vmatpush.msra.mxu0 %v2042
        %v2044 = vand.u32 %v872, 4294901760
        %v2045 = vsub.f32 %v872, %v2044
        %2046 = vmatpush.msra.mxu0 %v2045
        %v2047 = vand.u32 %v870, 4294901760
        %v2048 = vsub.f32 %v870, %v2047
        %2049 = vmatpush.msra.mxu0 %v2048
        %v2050 = vand.u32 %v868, 4294901760
        %v2051 = vsub.f32 %v868, %v2050
        %2052 = vmatpush.msra.mxu0 %v2051
        %v2053 = vand.u32 %v866, 4294901760
        %v2054 = vsub.f32 %v866, %v2053
        %2055 = vmatpush.msra.mxu0 %v2054
        %v2056 = vand.u32 %v864, 4294901760
        %v2057 = vsub.f32 %v864, %v2056
        %2058 = vmatpush.msra.mxu0 %v2057
        %v2059 = vand.u32 %v862, 4294901760
        %v2060 = vsub.f32 %v862, %v2059
        %2061 = vmatpush.msra.mxu0 %v2060
        %v2062 = vand.u32 %v860, 4294901760
        %v2063 = vsub.f32 %v860, %v2062
        %2064 = vmatpush.msra.mxu0 %v2063
        %v2065 = vand.u32 %v858, 4294901760
        %v2066 = vsub.f32 %v858, %v2065
        %2067 = vmatpush.msra.mxu0 %v2066
        %v2068 = vand.u32 %v856, 4294901760
        %v2069 = vsub.f32 %v856, %v2068
        %2070 = vmatpush.msra.mxu0 %v2069
        %v2071 = vand.u32 %v854, 4294901760
        %v2072 = vsub.f32 %v854, %v2071
        %2073 = vmatpush.msra.mxu0 %v2072
        %v2074 = vand.u32 %v852, 4294901760
        %v2075 = vsub.f32 %v852, %v2074
        %2076 = vmatpush.msra.mxu0 %v2075
        %v2077 = vand.u32 %v850, 4294901760
        %v2078 = vsub.f32 %v850, %v2077
        %2079 = vmatpush.msra.mxu0 %v2078
        %v2080 = vand.u32 %v848, 4294901760
        %v2081 = vsub.f32 %v848, %v2080
        %2082 = vmatpush.msra.mxu0 %v2081
        %v2083 = vand.u32 %v846, 4294901760
        %v2084 = vsub.f32 %v846, %v2083
        %2085 = vmatpush.msra.mxu0 %v2084
        %v2086 = vand.u32 %v844, 4294901760
        %v2087 = vsub.f32 %v844, %v2086
        %2088 = vmatpush.msra.mxu0 %v2087
        %v2089 = vand.u32 %v747, 4294901760
        %v2090 = vsub.f32 %v747, %v2089
        %2091 = vmatmul.f32.gmra.mxu0 %v2090
        %v2092 = vpop.f32.mrf.mxu0
        %v2093 = vadd.f32 %v2039, %v2092
        %2094 = vdwg.mxu0
        %v2095 = vand.u32 %v874, 4294901760
        %2096 = vmatpush.msra.mxu0 %v2095
        %v2097 = vand.u32 %v872, 4294901760
        %2098 = vmatpush.msra.mxu0 %v2097
        %v2099 = vand.u32 %v870, 4294901760
        %2100 = vmatpush.msra.mxu0 %v2099
        %v2101 = vand.u32 %v868, 4294901760
        %2102 = vmatpush.msra.mxu0 %v2101
        %v2103 = vand.u32 %v866, 4294901760
        %2104 = vmatpush.msra.mxu0 %v2103
        %v2105 = vand.u32 %v864, 4294901760
        %2106 = vmatpush.msra.mxu0 %v2105
        %v2107 = vand.u32 %v862, 4294901760
        %2108 = vmatpush.msra.mxu0 %v2107
        %v2109 = vand.u32 %v860, 4294901760
        %2110 = vmatpush.msra.mxu0 %v2109
        %v2111 = vand.u32 %v858, 4294901760
        %2112 = vmatpush.msra.mxu0 %v2111
        %v2113 = vand.u32 %v856, 4294901760
        %2114 = vmatpush.msra.mxu0 %v2113
        %v2115 = vand.u32 %v854, 4294901760
        %2116 = vmatpush.msra.mxu0 %v2115
        %v2117 = vand.u32 %v852, 4294901760
        %2118 = vmatpush.msra.mxu0 %v2117
        %v2119 = vand.u32 %v850, 4294901760
        %2120 = vmatpush.msra.mxu0 %v2119
        %v2121 = vand.u32 %v848, 4294901760
        %2122 = vmatpush.msra.mxu0 %v2121
        %v2123 = vand.u32 %v846, 4294901760
        %2124 = vmatpush.msra.mxu0 %v2123
        %v2125 = vand.u32 %v844, 4294901760
        %2126 = vmatpush.msra.mxu0 %v2125
        %v2127 = vand.u32 %v747, 4294901760
        %v2128 = vsub.f32 %v747, %v2127
        %v2129 = vand.u32 %v2128, 4294901760
        %2130 = vmatmul.f32.gmra.mxu0 %v2129
        %v2131 = vpop.f32.mrf.mxu0
        %v2132 = vadd.f32 %v2093, %v2131
        %2133 = vdwg.mxu0
        %v2134 = vand.u32 %v874, 4294901760
        %v2135 = vsub.f32 %v874, %v2134
        %v2136 = vand.u32 %v2135, 4294901760
        %2137 = vmatpush.msra.mxu0 %v2136
        %v2138 = vand.u32 %v872, 4294901760
        %v2139 = vsub.f32 %v872, %v2138
        %v2140 = vand.u32 %v2139, 4294901760
        %2141 = vmatpush.msra.mxu0 %v2140
        %v2142 = vand.u32 %v870, 4294901760
        %v2143 = vsub.f32 %v870, %v2142
        %v2144 = vand.u32 %v2143, 4294901760
        %2145 = vmatpush.msra.mxu0 %v2144
        %v2146 = vand.u32 %v868, 4294901760
        %v2147 = vsub.f32 %v868, %v2146
        %v2148 = vand.u32 %v2147, 4294901760
        %2149 = vmatpush.msra.mxu0 %v2148
        %v2150 = vand.u32 %v866, 4294901760
        %v2151 = vsub.f32 %v866, %v2150
        %v2152 = vand.u32 %v2151, 4294901760
        %2153 = vmatpush.msra.mxu0 %v2152
        %v2154 = vand.u32 %v864, 4294901760
        %v2155 = vsub.f32 %v864, %v2154
        %v2156 = vand.u32 %v2155, 4294901760
        %2157 = vmatpush.msra.mxu0 %v2156
        %v2158 = vand.u32 %v862, 4294901760
        %v2159 = vsub.f32 %v862, %v2158
        %v2160 = vand.u32 %v2159, 4294901760
        %2161 = vmatpush.msra.mxu0 %v2160
        %v2162 = vand.u32 %v860, 4294901760
        %v2163 = vsub.f32 %v860, %v2162
        %v2164 = vand.u32 %v2163, 4294901760
        %2165 = vmatpush.msra.mxu0 %v2164
        %v2166 = vand.u32 %v858, 4294901760
        %v2167 = vsub.f32 %v858, %v2166
        %v2168 = vand.u32 %v2167, 4294901760
        %2169 = vmatpush.msra.mxu0 %v2168
        %v2170 = vand.u32 %v856, 4294901760
        %v2171 = vsub.f32 %v856, %v2170
        %v2172 = vand.u32 %v2171, 4294901760
        %2173 = vmatpush.msra.mxu0 %v2172
        %v2174 = vand.u32 %v854, 4294901760
        %v2175 = vsub.f32 %v854, %v2174
        %v2176 = vand.u32 %v2175, 4294901760
        %2177 = vmatpush.msra.mxu0 %v2176
        %v2178 = vand.u32 %v852, 4294901760
        %v2179 = vsub.f32 %v852, %v2178
        %v2180 = vand.u32 %v2179, 4294901760
        %2181 = vmatpush.msra.mxu0 %v2180
        %v2182 = vand.u32 %v850, 4294901760
        %v2183 = vsub.f32 %v850, %v2182
        %v2184 = vand.u32 %v2183, 4294901760
        %2185 = vmatpush.msra.mxu0 %v2184
        %v2186 = vand.u32 %v848, 4294901760
        %v2187 = vsub.f32 %v848, %v2186
        %v2188 = vand.u32 %v2187, 4294901760
        %2189 = vmatpush.msra.mxu0 %v2188
        %v2190 = vand.u32 %v846, 4294901760
        %v2191 = vsub.f32 %v846, %v2190
        %v2192 = vand.u32 %v2191, 4294901760
        %2193 = vmatpush.msra.mxu0 %v2192
        %v2194 = vand.u32 %v844, 4294901760
        %v2195 = vsub.f32 %v844, %v2194
        %v2196 = vand.u32 %v2195, 4294901760
        %2197 = vmatpush.msra.mxu0 %v2196
        %v2198 = vand.u32 %v747, 4294901760
        %2199 = vmatmul.f32.gmra.mxu0 %v2198
        %v2200 = vpop.f32.mrf.mxu0
        %v2201 = vadd.f32 %v2132, %v2200
        %2202 = vdwg.mxu0
        %v2203 = vand.u32 %v874, 4294901760
        %2204 = vmatpush.msra.mxu0 %v2203
        %v2205 = vand.u32 %v872, 4294901760
        %2206 = vmatpush.msra.mxu0 %v2205
        %v2207 = vand.u32 %v870, 4294901760
        %2208 = vmatpush.msra.mxu0 %v2207
        %v2209 = vand.u32 %v868, 4294901760
        %2210 = vmatpush.msra.mxu0 %v2209
        %v2211 = vand.u32 %v866, 4294901760
        %2212 = vmatpush.msra.mxu0 %v2211
        %v2213 = vand.u32 %v864, 4294901760
        %2214 = vmatpush.msra.mxu0 %v2213
        %v2215 = vand.u32 %v862, 4294901760
        %2216 = vmatpush.msra.mxu0 %v2215
        %v2217 = vand.u32 %v860, 4294901760
        %2218 = vmatpush.msra.mxu0 %v2217
        %v2219 = vand.u32 %v858, 4294901760
        %2220 = vmatpush.msra.mxu0 %v2219
        %v2221 = vand.u32 %v856, 4294901760
        %2222 = vmatpush.msra.mxu0 %v2221
        %v2223 = vand.u32 %v854, 4294901760
        %2224 = vmatpush.msra.mxu0 %v2223
        %v2225 = vand.u32 %v852, 4294901760
        %2226 = vmatpush.msra.mxu0 %v2225
        %v2227 = vand.u32 %v850, 4294901760
        %2228 = vmatpush.msra.mxu0 %v2227
        %v2229 = vand.u32 %v848, 4294901760
        %2230 = vmatpush.msra.mxu0 %v2229
        %v2231 = vand.u32 %v846, 4294901760
        %2232 = vmatpush.msra.mxu0 %v2231
        %v2233 = vand.u32 %v844, 4294901760
        %2234 = vmatpush.msra.mxu0 %v2233
        %v2235 = vand.u32 %v747, 4294901760
        %2236 = vmatmul.f32.gmra.mxu0 %v2235
        %v2237 = vpop.f32.mrf.mxu0
        %v2238 = vadd.f32 %v2201, %v2237
        %2239 = vdwg.mxu0
        %v2240 = vand.u32 %v779, 4294901760
        %2241 = vmatpush.msra.mxu0 %v2240
        %v2242 = vand.u32 %v777, 4294901760
        %2243 = vmatpush.msra.mxu0 %v2242
        %v2244 = vand.u32 %v775, 4294901760
        %2245 = vmatpush.msra.mxu0 %v2244
        %v2246 = vand.u32 %v773, 4294901760
        %2247 = vmatpush.msra.mxu0 %v2246
        %v2248 = vand.u32 %v771, 4294901760
        %2249 = vmatpush.msra.mxu0 %v2248
        %v2250 = vand.u32 %v769, 4294901760
        %2251 = vmatpush.msra.mxu0 %v2250
        %v2252 = vand.u32 %v767, 4294901760
        %2253 = vmatpush.msra.mxu0 %v2252
        %v2254 = vand.u32 %v765, 4294901760
        %2255 = vmatpush.msra.mxu0 %v2254
        %v2256 = vand.u32 %v763, 4294901760
        %2257 = vmatpush.msra.mxu0 %v2256
        %v2258 = vand.u32 %v761, 4294901760
        %2259 = vmatpush.msra.mxu0 %v2258
        %v2260 = vand.u32 %v759, 4294901760
        %2261 = vmatpush.msra.mxu0 %v2260
        %v2262 = vand.u32 %v757, 4294901760
        %2263 = vmatpush.msra.mxu0 %v2262
        %v2264 = vand.u32 %v755, 4294901760
        %2265 = vmatpush.msra.mxu0 %v2264
        %v2266 = vand.u32 %v753, 4294901760
        %2267 = vmatpush.msra.mxu0 %v2266
        %v2268 = vand.u32 %v751, 4294901760
        %2269 = vmatpush.msra.mxu0 %v2268
        %v2270 = vand.u32 %v749, 4294901760
        %2271 = vmatpush.msra.mxu0 %v2270
        %v2272 = vand.u32 %v728, 4294901760
        %v2273 = vsub.f32 %v728, %v2272
        %v2274 = vand.u32 %v2273, 4294901760
        %v2275 = vsub.f32 %v2273, %v2274
        %v2276 = vand.u32 %v2275, 4294901760
        %2277 = vmatmul.f32.gmra.mxu0 %v2276
        %v2278 = vpop.f32.mrf.mxu0
        %v2279 = vadd.f32 0.0, %v2278
        %2280 = vdwg.mxu0
        %v2281 = vand.u32 %v779, 4294901760
        %v2282 = vsub.f32 %v779, %v2281
        %v2283 = vand.u32 %v2282, 4294901760
        %v2284 = vsub.f32 %v2282, %v2283
        %v2285 = vand.u32 %v2284, 4294901760
        %2286 = vmatpush.msra.mxu0 %v2285
        %v2287 = vand.u32 %v777, 4294901760
        %v2288 = vsub.f32 %v777, %v2287
        %v2289 = vand.u32 %v2288, 4294901760
        %v2290 = vsub.f32 %v2288, %v2289
        %v2291 = vand.u32 %v2290, 4294901760
        %2292 = vmatpush.msra.mxu0 %v2291
        %v2293 = vand.u32 %v775, 4294901760
        %v2294 = vsub.f32 %v775, %v2293
        %v2295 = vand.u32 %v2294, 4294901760
        %v2296 = vsub.f32 %v2294, %v2295
        %v2297 = vand.u32 %v2296, 4294901760
        %2298 = vmatpush.msra.mxu0 %v2297
        %v2299 = vand.u32 %v773, 4294901760
        %v2300 = vsub.f32 %v773, %v2299
        %v2301 = vand.u32 %v2300, 4294901760
        %v2302 = vsub.f32 %v2300, %v2301
        %v2303 = vand.u32 %v2302, 4294901760
        %2304 = vmatpush.msra.mxu0 %v2303
        %v2305 = vand.u32 %v771, 4294901760
        %v2306 = vsub.f32 %v771, %v2305
        %v2307 = vand.u32 %v2306, 4294901760
        %v2308 = vsub.f32 %v2306, %v2307
        %v2309 = vand.u32 %v2308, 4294901760
        %2310 = vmatpush.msra.mxu0 %v2309
        %v2311 = vand.u32 %v769, 4294901760
        %v2312 = vsub.f32 %v769, %v2311
        %v2313 = vand.u32 %v2312, 4294901760
        %v2314 = vsub.f32 %v2312, %v2313
        %v2315 = vand.u32 %v2314, 4294901760
        %2316 = vmatpush.msra.mxu0 %v2315
        %v2317 = vand.u32 %v767, 4294901760
        %v2318 = vsub.f32 %v767, %v2317
        %v2319 = vand.u32 %v2318, 4294901760
        %v2320 = vsub.f32 %v2318, %v2319
        %v2321 = vand.u32 %v2320, 4294901760
        %2322 = vmatpush.msra.mxu0 %v2321
        %v2323 = vand.u32 %v765, 4294901760
        %v2324 = vsub.f32 %v765, %v2323
        %v2325 = vand.u32 %v2324, 4294901760
        %v2326 = vsub.f32 %v2324, %v2325
        %v2327 = vand.u32 %v2326, 4294901760
        %2328 = vmatpush.msra.mxu0 %v2327
        %v2329 = vand.u32 %v763, 4294901760
        %v2330 = vsub.f32 %v763, %v2329
        %v2331 = vand.u32 %v2330, 4294901760
        %v2332 = vsub.f32 %v2330, %v2331
        %v2333 = vand.u32 %v2332, 4294901760
        %2334 = vmatpush.msra.mxu0 %v2333
        %v2335 = vand.u32 %v761, 4294901760
        %v2336 = vsub.f32 %v761, %v2335
        %v2337 = vand.u32 %v2336, 4294901760
        %v2338 = vsub.f32 %v2336, %v2337
        %v2339 = vand.u32 %v2338, 4294901760
        %2340 = vmatpush.msra.mxu0 %v2339
        %v2341 = vand.u32 %v759, 4294901760
        %v2342 = vsub.f32 %v759, %v2341
        %v2343 = vand.u32 %v2342, 4294901760
        %v2344 = vsub.f32 %v2342, %v2343
        %v2345 = vand.u32 %v2344, 4294901760
        %2346 = vmatpush.msra.mxu0 %v2345
        %v2347 = vand.u32 %v757, 4294901760
        %v2348 = vsub.f32 %v757, %v2347
        %v2349 = vand.u32 %v2348, 4294901760
        %v2350 = vsub.f32 %v2348, %v2349
        %v2351 = vand.u32 %v2350, 4294901760
        %2352 = vmatpush.msra.mxu0 %v2351
        %v2353 = vand.u32 %v755, 4294901760
        %v2354 = vsub.f32 %v755, %v2353
        %v2355 = vand.u32 %v2354, 4294901760
        %v2356 = vsub.f32 %v2354, %v2355
        %v2357 = vand.u32 %v2356, 4294901760
        %2358 = vmatpush.msra.mxu0 %v2357
        %v2359 = vand.u32 %v753, 4294901760
        %v2360 = vsub.f32 %v753, %v2359
        %v2361 = vand.u32 %v2360, 4294901760
        %v2362 = vsub.f32 %v2360, %v2361
        %v2363 = vand.u32 %v2362, 4294901760
        %2364 = vmatpush.msra.mxu0 %v2363
        %v2365 = vand.u32 %v751, 4294901760
        %v2366 = vsub.f32 %v751, %v2365
        %v2367 = vand.u32 %v2366, 4294901760
        %v2368 = vsub.f32 %v2366, %v2367
        %v2369 = vand.u32 %v2368, 4294901760
        %2370 = vmatpush.msra.mxu0 %v2369
        %v2371 = vand.u32 %v749, 4294901760
        %v2372 = vsub.f32 %v749, %v2371
        %v2373 = vand.u32 %v2372, 4294901760
        %v2374 = vsub.f32 %v2372, %v2373
        %v2375 = vand.u32 %v2374, 4294901760
        %2376 = vmatpush.msra.mxu0 %v2375
        %v2377 = vand.u32 %v728, 4294901760
        %2378 = vmatmul.f32.gmra.mxu0 %v2377
        %v2379 = vpop.f32.mrf.mxu0
        %v2380 = vadd.f32 %v2279, %v2379
        %2381 = vdwg.mxu0
        %v2382 = vand.u32 %v779, 4294901760
        %v2383 = vsub.f32 %v779, %v2382
        %2384 = vmatpush.msra.mxu0 %v2383
        %v2385 = vand.u32 %v777, 4294901760
        %v2386 = vsub.f32 %v777, %v2385
        %2387 = vmatpush.msra.mxu0 %v2386
        %v2388 = vand.u32 %v775, 4294901760
        %v2389 = vsub.f32 %v775, %v2388
        %2390 = vmatpush.msra.mxu0 %v2389
        %v2391 = vand.u32 %v773, 4294901760
        %v2392 = vsub.f32 %v773, %v2391
        %2393 = vmatpush.msra.mxu0 %v2392
        %v2394 = vand.u32 %v771, 4294901760
        %v2395 = vsub.f32 %v771, %v2394
        %2396 = vmatpush.msra.mxu0 %v2395
        %v2397 = vand.u32 %v769, 4294901760
        %v2398 = vsub.f32 %v769, %v2397
        %2399 = vmatpush.msra.mxu0 %v2398
        %v2400 = vand.u32 %v767, 4294901760
        %v2401 = vsub.f32 %v767, %v2400
        %2402 = vmatpush.msra.mxu0 %v2401
        %v2403 = vand.u32 %v765, 4294901760
        %v2404 = vsub.f32 %v765, %v2403
        %2405 = vmatpush.msra.mxu0 %v2404
        %v2406 = vand.u32 %v763, 4294901760
        %v2407 = vsub.f32 %v763, %v2406
        %2408 = vmatpush.msra.mxu0 %v2407
        %v2409 = vand.u32 %v761, 4294901760
        %v2410 = vsub.f32 %v761, %v2409
        %2411 = vmatpush.msra.mxu0 %v2410
        %v2412 = vand.u32 %v759, 4294901760
        %v2413 = vsub.f32 %v759, %v2412
        %2414 = vmatpush.msra.mxu0 %v2413
        %v2415 = vand.u32 %v757, 4294901760
        %v2416 = vsub.f32 %v757, %v2415
        %2417 = vmatpush.msra.mxu0 %v2416
        %v2418 = vand.u32 %v755, 4294901760
        %v2419 = vsub.f32 %v755, %v2418
        %2420 = vmatpush.msra.mxu0 %v2419
        %v2421 = vand.u32 %v753, 4294901760
        %v2422 = vsub.f32 %v753, %v2421
        %2423 = vmatpush.msra.mxu0 %v2422
        %v2424 = vand.u32 %v751, 4294901760
        %v2425 = vsub.f32 %v751, %v2424
        %2426 = vmatpush.msra.mxu0 %v2425
        %v2427 = vand.u32 %v749, 4294901760
        %v2428 = vsub.f32 %v749, %v2427
        %2429 = vmatpush.msra.mxu0 %v2428
        %v2430 = vand.u32 %v728, 4294901760
        %v2431 = vsub.f32 %v728, %v2430
        %2432 = vmatmul.f32.gmra.mxu0 %v2431
        %v2433 = vpop.f32.mrf.mxu0
        %v2434 = vadd.f32 %v2380, %v2433
        %2435 = vdwg.mxu0
        %v2436 = vand.u32 %v779, 4294901760
        %2437 = vmatpush.msra.mxu0 %v2436
        %v2438 = vand.u32 %v777, 4294901760
        %2439 = vmatpush.msra.mxu0 %v2438
        %v2440 = vand.u32 %v775, 4294901760
        %2441 = vmatpush.msra.mxu0 %v2440
        %v2442 = vand.u32 %v773, 4294901760
        %2443 = vmatpush.msra.mxu0 %v2442
        %v2444 = vand.u32 %v771, 4294901760
        %2445 = vmatpush.msra.mxu0 %v2444
        %v2446 = vand.u32 %v769, 4294901760
        %2447 = vmatpush.msra.mxu0 %v2446
        %v2448 = vand.u32 %v767, 4294901760
        %2449 = vmatpush.msra.mxu0 %v2448
        %v2450 = vand.u32 %v765, 4294901760
        %2451 = vmatpush.msra.mxu0 %v2450
        %v2452 = vand.u32 %v763, 4294901760
        %2453 = vmatpush.msra.mxu0 %v2452
        %v2454 = vand.u32 %v761, 4294901760
        %2455 = vmatpush.msra.mxu0 %v2454
        %v2456 = vand.u32 %v759, 4294901760
        %2457 = vmatpush.msra.mxu0 %v2456
        %v2458 = vand.u32 %v757, 4294901760
        %2459 = vmatpush.msra.mxu0 %v2458
        %v2460 = vand.u32 %v755, 4294901760
        %2461 = vmatpush.msra.mxu0 %v2460
        %v2462 = vand.u32 %v753, 4294901760
        %2463 = vmatpush.msra.mxu0 %v2462
        %v2464 = vand.u32 %v751, 4294901760
        %2465 = vmatpush.msra.mxu0 %v2464
        %v2466 = vand.u32 %v749, 4294901760
        %2467 = vmatpush.msra.mxu0 %v2466
        %v2468 = vand.u32 %v728, 4294901760
        %v2469 = vsub.f32 %v728, %v2468
        %v2470 = vand.u32 %v2469, 4294901760
        %2471 = vmatmul.f32.gmra.mxu0 %v2470
        %v2472 = vpop.f32.mrf.mxu0
        %v2473 = vadd.f32 %v2434, %v2472
        %2474 = vdwg.mxu0
        %v2475 = vand.u32 %v779, 4294901760
        %v2476 = vsub.f32 %v779, %v2475
        %v2477 = vand.u32 %v2476, 4294901760
        %2478 = vmatpush.msra.mxu0 %v2477
        %v2479 = vand.u32 %v777, 4294901760
        %v2480 = vsub.f32 %v777, %v2479
        %v2481 = vand.u32 %v2480, 4294901760
        %2482 = vmatpush.msra.mxu0 %v2481
        %v2483 = vand.u32 %v775, 4294901760
        %v2484 = vsub.f32 %v775, %v2483
        %v2485 = vand.u32 %v2484, 4294901760
        %2486 = vmatpush.msra.mxu0 %v2485
        %v2487 = vand.u32 %v773, 4294901760
        %v2488 = vsub.f32 %v773, %v2487
        %v2489 = vand.u32 %v2488, 4294901760
        %2490 = vmatpush.msra.mxu0 %v2489
        %v2491 = vand.u32 %v771, 4294901760
        %v2492 = vsub.f32 %v771, %v2491
        %v2493 = vand.u32 %v2492, 4294901760
        %2494 = vmatpush.msra.mxu0 %v2493
        %v2495 = vand.u32 %v769, 4294901760
        %v2496 = vsub.f32 %v769, %v2495
        %v2497 = vand.u32 %v2496, 4294901760
        %2498 = vmatpush.msra.mxu0 %v2497
        %v2499 = vand.u32 %v767, 4294901760
        %v2500 = vsub.f32 %v767, %v2499
        %v2501 = vand.u32 %v2500, 4294901760
        %2502 = vmatpush.msra.mxu0 %v2501
        %v2503 = vand.u32 %v765, 4294901760
        %v2504 = vsub.f32 %v765, %v2503
        %v2505 = vand.u32 %v2504, 4294901760
        %2506 = vmatpush.msra.mxu0 %v2505
        %v2507 = vand.u32 %v763, 4294901760
        %v2508 = vsub.f32 %v763, %v2507
        %v2509 = vand.u32 %v2508, 4294901760
        %2510 = vmatpush.msra.mxu0 %v2509
        %v2511 = vand.u32 %v761, 4294901760
        %v2512 = vsub.f32 %v761, %v2511
        %v2513 = vand.u32 %v2512, 4294901760
        %2514 = vmatpush.msra.mxu0 %v2513
        %v2515 = vand.u32 %v759, 4294901760
        %v2516 = vsub.f32 %v759, %v2515
        %v2517 = vand.u32 %v2516, 4294901760
        %2518 = vmatpush.msra.mxu0 %v2517
        %v2519 = vand.u32 %v757, 4294901760
        %v2520 = vsub.f32 %v757, %v2519
        %v2521 = vand.u32 %v2520, 4294901760
        %2522 = vmatpush.msra.mxu0 %v2521
        %v2523 = vand.u32 %v755, 4294901760
        %v2524 = vsub.f32 %v755, %v2523
        %v2525 = vand.u32 %v2524, 4294901760
        %2526 = vmatpush.msra.mxu0 %v2525
        %v2527 = vand.u32 %v753, 4294901760
        %v2528 = vsub.f32 %v753, %v2527
        %v2529 = vand.u32 %v2528, 4294901760
        %2530 = vmatpush.msra.mxu0 %v2529
        %v2531 = vand.u32 %v751, 4294901760
        %v2532 = vsub.f32 %v751, %v2531
        %v2533 = vand.u32 %v2532, 4294901760
        %2534 = vmatpush.msra.mxu0 %v2533
        %v2535 = vand.u32 %v749, 4294901760
        %v2536 = vsub.f32 %v749, %v2535
        %v2537 = vand.u32 %v2536, 4294901760
        %2538 = vmatpush.msra.mxu0 %v2537
        %v2539 = vand.u32 %v728, 4294901760
        %2540 = vmatmul.f32.gmra.mxu0 %v2539
        %v2541 = vpop.f32.mrf.mxu0
        %v2542 = vadd.f32 %v2473, %v2541
        %2543 = vdwg.mxu0
        %v2544 = vand.u32 %v779, 4294901760
        %2545 = vmatpush.msra.mxu0 %v2544
        %v2546 = vand.u32 %v777, 4294901760
        %2547 = vmatpush.msra.mxu0 %v2546
        %v2548 = vand.u32 %v775, 4294901760
        %2549 = vmatpush.msra.mxu0 %v2548
        %v2550 = vand.u32 %v773, 4294901760
        %2551 = vmatpush.msra.mxu0 %v2550
        %v2552 = vand.u32 %v771, 4294901760
        %2553 = vmatpush.msra.mxu0 %v2552
        %v2554 = vand.u32 %v769, 4294901760
        %2555 = vmatpush.msra.mxu0 %v2554
        %v2556 = vand.u32 %v767, 4294901760
        %2557 = vmatpush.msra.mxu0 %v2556
        %v2558 = vand.u32 %v765, 4294901760
        %2559 = vmatpush.msra.mxu0 %v2558
        %v2560 = vand.u32 %v763, 4294901760
        %2561 = vmatpush.msra.mxu0 %v2560
        %v2562 = vand.u32 %v761, 4294901760
        %2563 = vmatpush.msra.mxu0 %v2562
        %v2564 = vand.u32 %v759, 4294901760
        %2565 = vmatpush.msra.mxu0 %v2564
        %v2566 = vand.u32 %v757, 4294901760
        %2567 = vmatpush.msra.mxu0 %v2566
        %v2568 = vand.u32 %v755, 4294901760
        %2569 = vmatpush.msra.mxu0 %v2568
        %v2570 = vand.u32 %v753, 4294901760
        %2571 = vmatpush.msra.mxu0 %v2570
        %v2572 = vand.u32 %v751, 4294901760
        %2573 = vmatpush.msra.mxu0 %v2572
        %v2574 = vand.u32 %v749, 4294901760
        %2575 = vmatpush.msra.mxu0 %v2574
        %v2576 = vand.u32 %v728, 4294901760
        %2577 = vmatmul.f32.gmra.mxu0 %v2576
        %v2578 = vpop.f32.mrf.mxu0
        %v2579 = vadd.f32 %v2542, %v2578
        %2580 = vdwg.mxu0
        %v2581 = vand.u32 %v811, 4294901760
        %2582 = vmatpush.msra.mxu0 %v2581
        %v2583 = vand.u32 %v809, 4294901760
        %2584 = vmatpush.msra.mxu0 %v2583
        %v2585 = vand.u32 %v807, 4294901760
        %2586 = vmatpush.msra.mxu0 %v2585
        %v2587 = vand.u32 %v805, 4294901760
        %2588 = vmatpush.msra.mxu0 %v2587
        %v2589 = vand.u32 %v803, 4294901760
        %2590 = vmatpush.msra.mxu0 %v2589
        %v2591 = vand.u32 %v801, 4294901760
        %2592 = vmatpush.msra.mxu0 %v2591
        %v2593 = vand.u32 %v799, 4294901760
        %2594 = vmatpush.msra.mxu0 %v2593
        %v2595 = vand.u32 %v797, 4294901760
        %2596 = vmatpush.msra.mxu0 %v2595
        %v2597 = vand.u32 %v795, 4294901760
        %2598 = vmatpush.msra.mxu0 %v2597
        %v2599 = vand.u32 %v793, 4294901760
        %2600 = vmatpush.msra.mxu0 %v2599
        %v2601 = vand.u32 %v791, 4294901760
        %2602 = vmatpush.msra.mxu0 %v2601
        %v2603 = vand.u32 %v789, 4294901760
        %2604 = vmatpush.msra.mxu0 %v2603
        %v2605 = vand.u32 %v787, 4294901760
        %2606 = vmatpush.msra.mxu0 %v2605
        %v2607 = vand.u32 %v785, 4294901760
        %2608 = vmatpush.msra.mxu0 %v2607
        %v2609 = vand.u32 %v783, 4294901760
        %2610 = vmatpush.msra.mxu0 %v2609
        %v2611 = vand.u32 %v781, 4294901760
        %2612 = vmatpush.msra.mxu0 %v2611
        %v2613 = vand.u32 %v729, 4294901760
        %v2614 = vsub.f32 %v729, %v2613
        %v2615 = vand.u32 %v2614, 4294901760
        %v2616 = vsub.f32 %v2614, %v2615
        %v2617 = vand.u32 %v2616, 4294901760
        %2618 = vmatmul.f32.gmra.mxu0 %v2617
        %v2619 = vpop.f32.mrf.mxu0
        %v2620 = vadd.f32 %v2579, %v2619
        %2621 = vdwg.mxu0
        %v2622 = vand.u32 %v811, 4294901760
        %v2623 = vsub.f32 %v811, %v2622
        %v2624 = vand.u32 %v2623, 4294901760
        %v2625 = vsub.f32 %v2623, %v2624
        %v2626 = vand.u32 %v2625, 4294901760
        %2627 = vmatpush.msra.mxu0 %v2626
        %v2628 = vand.u32 %v809, 4294901760
        %v2629 = vsub.f32 %v809, %v2628
        %v2630 = vand.u32 %v2629, 4294901760
        %v2631 = vsub.f32 %v2629, %v2630
        %v2632 = vand.u32 %v2631, 4294901760
        %2633 = vmatpush.msra.mxu0 %v2632
        %v2634 = vand.u32 %v807, 4294901760
        %v2635 = vsub.f32 %v807, %v2634
        %v2636 = vand.u32 %v2635, 4294901760
        %v2637 = vsub.f32 %v2635, %v2636
        %v2638 = vand.u32 %v2637, 4294901760
        %2639 = vmatpush.msra.mxu0 %v2638
        %v2640 = vand.u32 %v805, 4294901760
        %v2641 = vsub.f32 %v805, %v2640
        %v2642 = vand.u32 %v2641, 4294901760
        %v2643 = vsub.f32 %v2641, %v2642
        %v2644 = vand.u32 %v2643, 4294901760
        %2645 = vmatpush.msra.mxu0 %v2644
        %v2646 = vand.u32 %v803, 4294901760
        %v2647 = vsub.f32 %v803, %v2646
        %v2648 = vand.u32 %v2647, 4294901760
        %v2649 = vsub.f32 %v2647, %v2648
        %v2650 = vand.u32 %v2649, 4294901760
        %2651 = vmatpush.msra.mxu0 %v2650
        %v2652 = vand.u32 %v801, 4294901760
        %v2653 = vsub.f32 %v801, %v2652
        %v2654 = vand.u32 %v2653, 4294901760
        %v2655 = vsub.f32 %v2653, %v2654
        %v2656 = vand.u32 %v2655, 4294901760
        %2657 = vmatpush.msra.mxu0 %v2656
        %v2658 = vand.u32 %v799, 4294901760
        %v2659 = vsub.f32 %v799, %v2658
        %v2660 = vand.u32 %v2659, 4294901760
        %v2661 = vsub.f32 %v2659, %v2660
        %v2662 = vand.u32 %v2661, 4294901760
        %2663 = vmatpush.msra.mxu0 %v2662
        %v2664 = vand.u32 %v797, 4294901760
        %v2665 = vsub.f32 %v797, %v2664
        %v2666 = vand.u32 %v2665, 4294901760
        %v2667 = vsub.f32 %v2665, %v2666
        %v2668 = vand.u32 %v2667, 4294901760
        %2669 = vmatpush.msra.mxu0 %v2668
        %v2670 = vand.u32 %v795, 4294901760
        %v2671 = vsub.f32 %v795, %v2670
        %v2672 = vand.u32 %v2671, 4294901760
        %v2673 = vsub.f32 %v2671, %v2672
        %v2674 = vand.u32 %v2673, 4294901760
        %2675 = vmatpush.msra.mxu0 %v2674
        %v2676 = vand.u32 %v793, 4294901760
        %v2677 = vsub.f32 %v793, %v2676
        %v2678 = vand.u32 %v2677, 4294901760
        %v2679 = vsub.f32 %v2677, %v2678
        %v2680 = vand.u32 %v2679, 4294901760
        %2681 = vmatpush.msra.mxu0 %v2680
        %v2682 = vand.u32 %v791, 4294901760
        %v2683 = vsub.f32 %v791, %v2682
        %v2684 = vand.u32 %v2683, 4294901760
        %v2685 = vsub.f32 %v2683, %v2684
        %v2686 = vand.u32 %v2685, 4294901760
        %2687 = vmatpush.msra.mxu0 %v2686
        %v2688 = vand.u32 %v789, 4294901760
        %v2689 = vsub.f32 %v789, %v2688
        %v2690 = vand.u32 %v2689, 4294901760
        %v2691 = vsub.f32 %v2689, %v2690
        %v2692 = vand.u32 %v2691, 4294901760
        %2693 = vmatpush.msra.mxu0 %v2692
        %v2694 = vand.u32 %v787, 4294901760
        %v2695 = vsub.f32 %v787, %v2694
        %v2696 = vand.u32 %v2695, 4294901760
        %v2697 = vsub.f32 %v2695, %v2696
        %v2698 = vand.u32 %v2697, 4294901760
        %2699 = vmatpush.msra.mxu0 %v2698
        %v2700 = vand.u32 %v785, 4294901760
        %v2701 = vsub.f32 %v785, %v2700
        %v2702 = vand.u32 %v2701, 4294901760
        %v2703 = vsub.f32 %v2701, %v2702
        %v2704 = vand.u32 %v2703, 4294901760
        %2705 = vmatpush.msra.mxu0 %v2704
        %v2706 = vand.u32 %v783, 4294901760
        %v2707 = vsub.f32 %v783, %v2706
        %v2708 = vand.u32 %v2707, 4294901760
        %v2709 = vsub.f32 %v2707, %v2708
        %v2710 = vand.u32 %v2709, 4294901760
        %2711 = vmatpush.msra.mxu0 %v2710
        %v2712 = vand.u32 %v781, 4294901760
        %v2713 = vsub.f32 %v781, %v2712
        %v2714 = vand.u32 %v2713, 4294901760
        %v2715 = vsub.f32 %v2713, %v2714
        %v2716 = vand.u32 %v2715, 4294901760
        %2717 = vmatpush.msra.mxu0 %v2716
        %v2718 = vand.u32 %v729, 4294901760
        %2719 = vmatmul.f32.gmra.mxu0 %v2718
        %v2720 = vpop.f32.mrf.mxu0
        %v2721 = vadd.f32 %v2620, %v2720
        %2722 = vdwg.mxu0
        %v2723 = vand.u32 %v811, 4294901760
        %v2724 = vsub.f32 %v811, %v2723
        %2725 = vmatpush.msra.mxu0 %v2724
        %v2726 = vand.u32 %v809, 4294901760
        %v2727 = vsub.f32 %v809, %v2726
        %2728 = vmatpush.msra.mxu0 %v2727
        %v2729 = vand.u32 %v807, 4294901760
        %v2730 = vsub.f32 %v807, %v2729
        %2731 = vmatpush.msra.mxu0 %v2730
        %v2732 = vand.u32 %v805, 4294901760
        %v2733 = vsub.f32 %v805, %v2732
        %2734 = vmatpush.msra.mxu0 %v2733
        %v2735 = vand.u32 %v803, 4294901760
        %v2736 = vsub.f32 %v803, %v2735
        %2737 = vmatpush.msra.mxu0 %v2736
        %v2738 = vand.u32 %v801, 4294901760
        %v2739 = vsub.f32 %v801, %v2738
        %2740 = vmatpush.msra.mxu0 %v2739
        %v2741 = vand.u32 %v799, 4294901760
        %v2742 = vsub.f32 %v799, %v2741
        %2743 = vmatpush.msra.mxu0 %v2742
        %v2744 = vand.u32 %v797, 4294901760
        %v2745 = vsub.f32 %v797, %v2744
        %2746 = vmatpush.msra.mxu0 %v2745
        %v2747 = vand.u32 %v795, 4294901760
        %v2748 = vsub.f32 %v795, %v2747
        %2749 = vmatpush.msra.mxu0 %v2748
        %v2750 = vand.u32 %v793, 4294901760
        %v2751 = vsub.f32 %v793, %v2750
        %2752 = vmatpush.msra.mxu0 %v2751
        %v2753 = vand.u32 %v791, 4294901760
        %v2754 = vsub.f32 %v791, %v2753
        %2755 = vmatpush.msra.mxu0 %v2754
        %v2756 = vand.u32 %v789, 4294901760
        %v2757 = vsub.f32 %v789, %v2756
        %2758 = vmatpush.msra.mxu0 %v2757
        %v2759 = vand.u32 %v787, 4294901760
        %v2760 = vsub.f32 %v787, %v2759
        %2761 = vmatpush.msra.mxu0 %v2760
        %v2762 = vand.u32 %v785, 4294901760
        %v2763 = vsub.f32 %v785, %v2762
        %2764 = vmatpush.msra.mxu0 %v2763
        %v2765 = vand.u32 %v783, 4294901760
        %v2766 = vsub.f32 %v783, %v2765
        %2767 = vmatpush.msra.mxu0 %v2766
        %v2768 = vand.u32 %v781, 4294901760
        %v2769 = vsub.f32 %v781, %v2768
        %2770 = vmatpush.msra.mxu0 %v2769
        %v2771 = vand.u32 %v729, 4294901760
        %v2772 = vsub.f32 %v729, %v2771
        %2773 = vmatmul.f32.gmra.mxu0 %v2772
        %v2774 = vpop.f32.mrf.mxu0
        %v2775 = vadd.f32 %v2721, %v2774
        %2776 = vdwg.mxu0
        %v2777 = vand.u32 %v811, 4294901760
        %2778 = vmatpush.msra.mxu0 %v2777
        %v2779 = vand.u32 %v809, 4294901760
        %2780 = vmatpush.msra.mxu0 %v2779
        %v2781 = vand.u32 %v807, 4294901760
        %2782 = vmatpush.msra.mxu0 %v2781
        %v2783 = vand.u32 %v805, 4294901760
        %2784 = vmatpush.msra.mxu0 %v2783
        %v2785 = vand.u32 %v803, 4294901760
        %2786 = vmatpush.msra.mxu0 %v2785
        %v2787 = vand.u32 %v801, 4294901760
        %2788 = vmatpush.msra.mxu0 %v2787
        %v2789 = vand.u32 %v799, 4294901760
        %2790 = vmatpush.msra.mxu0 %v2789
        %v2791 = vand.u32 %v797, 4294901760
        %2792 = vmatpush.msra.mxu0 %v2791
        %v2793 = vand.u32 %v795, 4294901760
        %2794 = vmatpush.msra.mxu0 %v2793
        %v2795 = vand.u32 %v793, 4294901760
        %2796 = vmatpush.msra.mxu0 %v2795
        %v2797 = vand.u32 %v791, 4294901760
        %2798 = vmatpush.msra.mxu0 %v2797
        %v2799 = vand.u32 %v789, 4294901760
        %2800 = vmatpush.msra.mxu0 %v2799
        %v2801 = vand.u32 %v787, 4294901760
        %2802 = vmatpush.msra.mxu0 %v2801
        %v2803 = vand.u32 %v785, 4294901760
        %2804 = vmatpush.msra.mxu0 %v2803
        %v2805 = vand.u32 %v783, 4294901760
        %2806 = vmatpush.msra.mxu0 %v2805
        %v2807 = vand.u32 %v781, 4294901760
        %2808 = vmatpush.msra.mxu0 %v2807
        %v2809 = vand.u32 %v729, 4294901760
        %v2810 = vsub.f32 %v729, %v2809
        %v2811 = vand.u32 %v2810, 4294901760
        %2812 = vmatmul.f32.gmra.mxu0 %v2811
        %v2813 = vpop.f32.mrf.mxu0
        %v2814 = vadd.f32 %v2775, %v2813
        %2815 = vdwg.mxu0
        %v2816 = vand.u32 %v811, 4294901760
        %v2817 = vsub.f32 %v811, %v2816
        %v2818 = vand.u32 %v2817, 4294901760
        %2819 = vmatpush.msra.mxu0 %v2818
        %v2820 = vand.u32 %v809, 4294901760
        %v2821 = vsub.f32 %v809, %v2820
        %v2822 = vand.u32 %v2821, 4294901760
        %2823 = vmatpush.msra.mxu0 %v2822
        %v2824 = vand.u32 %v807, 4294901760
        %v2825 = vsub.f32 %v807, %v2824
        %v2826 = vand.u32 %v2825, 4294901760
        %2827 = vmatpush.msra.mxu0 %v2826
        %v2828 = vand.u32 %v805, 4294901760
        %v2829 = vsub.f32 %v805, %v2828
        %v2830 = vand.u32 %v2829, 4294901760
        %2831 = vmatpush.msra.mxu0 %v2830
        %v2832 = vand.u32 %v803, 4294901760
        %v2833 = vsub.f32 %v803, %v2832
        %v2834 = vand.u32 %v2833, 4294901760
        %2835 = vmatpush.msra.mxu0 %v2834
        %v2836 = vand.u32 %v801, 4294901760
        %v2837 = vsub.f32 %v801, %v2836
        %v2838 = vand.u32 %v2837, 4294901760
        %2839 = vmatpush.msra.mxu0 %v2838
        %v2840 = vand.u32 %v799, 4294901760
        %v2841 = vsub.f32 %v799, %v2840
        %v2842 = vand.u32 %v2841, 4294901760
        %2843 = vmatpush.msra.mxu0 %v2842
        %v2844 = vand.u32 %v797, 4294901760
        %v2845 = vsub.f32 %v797, %v2844
        %v2846 = vand.u32 %v2845, 4294901760
        %2847 = vmatpush.msra.mxu0 %v2846
        %v2848 = vand.u32 %v795, 4294901760
        %v2849 = vsub.f32 %v795, %v2848
        %v2850 = vand.u32 %v2849, 4294901760
        %2851 = vmatpush.msra.mxu0 %v2850
        %v2852 = vand.u32 %v793, 4294901760
        %v2853 = vsub.f32 %v793, %v2852
        %v2854 = vand.u32 %v2853, 4294901760
        %2855 = vmatpush.msra.mxu0 %v2854
        %v2856 = vand.u32 %v791, 4294901760
        %v2857 = vsub.f32 %v791, %v2856
        %v2858 = vand.u32 %v2857, 4294901760
        %2859 = vmatpush.msra.mxu0 %v2858
        %v2860 = vand.u32 %v789, 4294901760
        %v2861 = vsub.f32 %v789, %v2860
        %v2862 = vand.u32 %v2861, 4294901760
        %2863 = vmatpush.msra.mxu0 %v2862
        %v2864 = vand.u32 %v787, 4294901760
        %v2865 = vsub.f32 %v787, %v2864
        %v2866 = vand.u32 %v2865, 4294901760
        %2867 = vmatpush.msra.mxu0 %v2866
        %v2868 = vand.u32 %v785, 4294901760
        %v2869 = vsub.f32 %v785, %v2868
        %v2870 = vand.u32 %v2869, 4294901760
        %2871 = vmatpush.msra.mxu0 %v2870
        %v2872 = vand.u32 %v783, 4294901760
        %v2873 = vsub.f32 %v783, %v2872
        %v2874 = vand.u32 %v2873, 4294901760
        %2875 = vmatpush.msra.mxu0 %v2874
        %v2876 = vand.u32 %v781, 4294901760
        %v2877 = vsub.f32 %v781, %v2876
        %v2878 = vand.u32 %v2877, 4294901760
        %2879 = vmatpush.msra.mxu0 %v2878
        %v2880 = vand.u32 %v729, 4294901760
        %2881 = vmatmul.f32.gmra.mxu0 %v2880
        %v2882 = vpop.f32.mrf.mxu0
        %v2883 = vadd.f32 %v2814, %v2882
        %2884 = vdwg.mxu0
        %v2885 = vand.u32 %v811, 4294901760
        %2886 = vmatpush.msra.mxu0 %v2885
        %v2887 = vand.u32 %v809, 4294901760
        %2888 = vmatpush.msra.mxu0 %v2887
        %v2889 = vand.u32 %v807, 4294901760
        %2890 = vmatpush.msra.mxu0 %v2889
        %v2891 = vand.u32 %v805, 4294901760
        %2892 = vmatpush.msra.mxu0 %v2891
        %v2893 = vand.u32 %v803, 4294901760
        %2894 = vmatpush.msra.mxu0 %v2893
        %v2895 = vand.u32 %v801, 4294901760
        %2896 = vmatpush.msra.mxu0 %v2895
        %v2897 = vand.u32 %v799, 4294901760
        %2898 = vmatpush.msra.mxu0 %v2897
        %v2899 = vand.u32 %v797, 4294901760
        %2900 = vmatpush.msra.mxu0 %v2899
        %v2901 = vand.u32 %v795, 4294901760
        %2902 = vmatpush.msra.mxu0 %v2901
        %v2903 = vand.u32 %v793, 4294901760
        %2904 = vmatpush.msra.mxu0 %v2903
        %v2905 = vand.u32 %v791, 4294901760
        %2906 = vmatpush.msra.mxu0 %v2905
        %v2907 = vand.u32 %v789, 4294901760
        %2908 = vmatpush.msra.mxu0 %v2907
        %v2909 = vand.u32 %v787, 4294901760
        %2910 = vmatpush.msra.mxu0 %v2909
        %v2911 = vand.u32 %v785, 4294901760
        %2912 = vmatpush.msra.mxu0 %v2911
        %v2913 = vand.u32 %v783, 4294901760
        %2914 = vmatpush.msra.mxu0 %v2913
        %v2915 = vand.u32 %v781, 4294901760
        %2916 = vmatpush.msra.mxu0 %v2915
        %v2917 = vand.u32 %v729, 4294901760
        %2918 = vmatmul.f32.gmra.mxu0 %v2917
        %v2919 = vpop.f32.mrf.mxu0
        %v2920 = vadd.f32 %v2883, %v2919
        %2921 = vdwg.mxu0
        %v2922 = vand.u32 %v843, 4294901760
        %2923 = vmatpush.msra.mxu0 %v2922
        %v2924 = vand.u32 %v841, 4294901760
        %2925 = vmatpush.msra.mxu0 %v2924
        %v2926 = vand.u32 %v839, 4294901760
        %2927 = vmatpush.msra.mxu0 %v2926
        %v2928 = vand.u32 %v837, 4294901760
        %2929 = vmatpush.msra.mxu0 %v2928
        %v2930 = vand.u32 %v835, 4294901760
        %2931 = vmatpush.msra.mxu0 %v2930
        %v2932 = vand.u32 %v833, 4294901760
        %2933 = vmatpush.msra.mxu0 %v2932
        %v2934 = vand.u32 %v831, 4294901760
        %2935 = vmatpush.msra.mxu0 %v2934
        %v2936 = vand.u32 %v829, 4294901760
        %2937 = vmatpush.msra.mxu0 %v2936
        %v2938 = vand.u32 %v827, 4294901760
        %2939 = vmatpush.msra.mxu0 %v2938
        %v2940 = vand.u32 %v825, 4294901760
        %2941 = vmatpush.msra.mxu0 %v2940
        %v2942 = vand.u32 %v823, 4294901760
        %2943 = vmatpush.msra.mxu0 %v2942
        %v2944 = vand.u32 %v821, 4294901760
        %2945 = vmatpush.msra.mxu0 %v2944
        %v2946 = vand.u32 %v819, 4294901760
        %2947 = vmatpush.msra.mxu0 %v2946
        %v2948 = vand.u32 %v817, 4294901760
        %2949 = vmatpush.msra.mxu0 %v2948
        %v2950 = vand.u32 %v815, 4294901760
        %2951 = vmatpush.msra.mxu0 %v2950
        %v2952 = vand.u32 %v813, 4294901760
        %2953 = vmatpush.msra.mxu0 %v2952
        %v2954 = vand.u32 %v738, 4294901760
        %v2955 = vsub.f32 %v738, %v2954
        %v2956 = vand.u32 %v2955, 4294901760
        %v2957 = vsub.f32 %v2955, %v2956
        %v2958 = vand.u32 %v2957, 4294901760
        %2959 = vmatmul.f32.gmra.mxu0 %v2958
        %v2960 = vpop.f32.mrf.mxu0
        %v2961 = vadd.f32 %v2920, %v2960
        %2962 = vdwg.mxu0
        %v2963 = vand.u32 %v843, 4294901760
        %v2964 = vsub.f32 %v843, %v2963
        %v2965 = vand.u32 %v2964, 4294901760
        %v2966 = vsub.f32 %v2964, %v2965
        %v2967 = vand.u32 %v2966, 4294901760
        %2968 = vmatpush.msra.mxu0 %v2967
        %v2969 = vand.u32 %v841, 4294901760
        %v2970 = vsub.f32 %v841, %v2969
        %v2971 = vand.u32 %v2970, 4294901760
        %v2972 = vsub.f32 %v2970, %v2971
        %v2973 = vand.u32 %v2972, 4294901760
        %2974 = vmatpush.msra.mxu0 %v2973
        %v2975 = vand.u32 %v839, 4294901760
        %v2976 = vsub.f32 %v839, %v2975
        %v2977 = vand.u32 %v2976, 4294901760
        %v2978 = vsub.f32 %v2976, %v2977
        %v2979 = vand.u32 %v2978, 4294901760
        %2980 = vmatpush.msra.mxu0 %v2979
        %v2981 = vand.u32 %v837, 4294901760
        %v2982 = vsub.f32 %v837, %v2981
        %v2983 = vand.u32 %v2982, 4294901760
        %v2984 = vsub.f32 %v2982, %v2983
        %v2985 = vand.u32 %v2984, 4294901760
        %2986 = vmatpush.msra.mxu0 %v2985
        %v2987 = vand.u32 %v835, 4294901760
        %v2988 = vsub.f32 %v835, %v2987
        %v2989 = vand.u32 %v2988, 4294901760
        %v2990 = vsub.f32 %v2988, %v2989
        %v2991 = vand.u32 %v2990, 4294901760
        %2992 = vmatpush.msra.mxu0 %v2991
        %v2993 = vand.u32 %v833, 4294901760
        %v2994 = vsub.f32 %v833, %v2993
        %v2995 = vand.u32 %v2994, 4294901760
        %v2996 = vsub.f32 %v2994, %v2995
        %v2997 = vand.u32 %v2996, 4294901760
        %2998 = vmatpush.msra.mxu0 %v2997
        %v2999 = vand.u32 %v831, 4294901760
        %v3000 = vsub.f32 %v831, %v2999
        %v3001 = vand.u32 %v3000, 4294901760
        %v3002 = vsub.f32 %v3000, %v3001
        %v3003 = vand.u32 %v3002, 4294901760
        %3004 = vmatpush.msra.mxu0 %v3003
        %v3005 = vand.u32 %v829, 4294901760
        %v3006 = vsub.f32 %v829, %v3005
        %v3007 = vand.u32 %v3006, 4294901760
        %v3008 = vsub.f32 %v3006, %v3007
        %v3009 = vand.u32 %v3008, 4294901760
        %3010 = vmatpush.msra.mxu0 %v3009
        %v3011 = vand.u32 %v827, 4294901760
        %v3012 = vsub.f32 %v827, %v3011
        %v3013 = vand.u32 %v3012, 4294901760
        %v3014 = vsub.f32 %v3012, %v3013
        %v3015 = vand.u32 %v3014, 4294901760
        %3016 = vmatpush.msra.mxu0 %v3015
        %v3017 = vand.u32 %v825, 4294901760
        %v3018 = vsub.f32 %v825, %v3017
        %v3019 = vand.u32 %v3018, 4294901760
        %v3020 = vsub.f32 %v3018, %v3019
        %v3021 = vand.u32 %v3020, 4294901760
        %3022 = vmatpush.msra.mxu0 %v3021
        %v3023 = vand.u32 %v823, 4294901760
        %v3024 = vsub.f32 %v823, %v3023
        %v3025 = vand.u32 %v3024, 4294901760
        %v3026 = vsub.f32 %v3024, %v3025
        %v3027 = vand.u32 %v3026, 4294901760
        %3028 = vmatpush.msra.mxu0 %v3027
        %v3029 = vand.u32 %v821, 4294901760
        %v3030 = vsub.f32 %v821, %v3029
        %v3031 = vand.u32 %v3030, 4294901760
        %v3032 = vsub.f32 %v3030, %v3031
        %v3033 = vand.u32 %v3032, 4294901760
        %3034 = vmatpush.msra.mxu0 %v3033
        %v3035 = vand.u32 %v819, 4294901760
        %v3036 = vsub.f32 %v819, %v3035
        %v3037 = vand.u32 %v3036, 4294901760
        %v3038 = vsub.f32 %v3036, %v3037
        %v3039 = vand.u32 %v3038, 4294901760
        %3040 = vmatpush.msra.mxu0 %v3039
        %v3041 = vand.u32 %v817, 4294901760
        %v3042 = vsub.f32 %v817, %v3041
        %v3043 = vand.u32 %v3042, 4294901760
        %v3044 = vsub.f32 %v3042, %v3043
        %v3045 = vand.u32 %v3044, 4294901760
        %3046 = vmatpush.msra.mxu0 %v3045
        %v3047 = vand.u32 %v815, 4294901760
        %v3048 = vsub.f32 %v815, %v3047
        %v3049 = vand.u32 %v3048, 4294901760
        %v3050 = vsub.f32 %v3048, %v3049
        %v3051 = vand.u32 %v3050, 4294901760
        %3052 = vmatpush.msra.mxu0 %v3051
        %v3053 = vand.u32 %v813, 4294901760
        %v3054 = vsub.f32 %v813, %v3053
        %v3055 = vand.u32 %v3054, 4294901760
        %v3056 = vsub.f32 %v3054, %v3055
        %v3057 = vand.u32 %v3056, 4294901760
        %3058 = vmatpush.msra.mxu0 %v3057
        %v3059 = vand.u32 %v738, 4294901760
        %3060 = vmatmul.f32.gmra.mxu0 %v3059
        %v3061 = vpop.f32.mrf.mxu0
        %v3062 = vadd.f32 %v2961, %v3061
        %3063 = vdwg.mxu0
        %v3064 = vand.u32 %v843, 4294901760
        %v3065 = vsub.f32 %v843, %v3064
        %3066 = vmatpush.msra.mxu0 %v3065
        %v3067 = vand.u32 %v841, 4294901760
        %v3068 = vsub.f32 %v841, %v3067
        %3069 = vmatpush.msra.mxu0 %v3068
        %v3070 = vand.u32 %v839, 4294901760
        %v3071 = vsub.f32 %v839, %v3070
        %3072 = vmatpush.msra.mxu0 %v3071
        %v3073 = vand.u32 %v837, 4294901760
        %v3074 = vsub.f32 %v837, %v3073
        %3075 = vmatpush.msra.mxu0 %v3074
        %v3076 = vand.u32 %v835, 4294901760
        %v3077 = vsub.f32 %v835, %v3076
        %3078 = vmatpush.msra.mxu0 %v3077
        %v3079 = vand.u32 %v833, 4294901760
        %v3080 = vsub.f32 %v833, %v3079
        %3081 = vmatpush.msra.mxu0 %v3080
        %v3082 = vand.u32 %v831, 4294901760
        %v3083 = vsub.f32 %v831, %v3082
        %3084 = vmatpush.msra.mxu0 %v3083
        %v3085 = vand.u32 %v829, 4294901760
        %v3086 = vsub.f32 %v829, %v3085
        %3087 = vmatpush.msra.mxu0 %v3086
        %v3088 = vand.u32 %v827, 4294901760
        %v3089 = vsub.f32 %v827, %v3088
        %3090 = vmatpush.msra.mxu0 %v3089
        %v3091 = vand.u32 %v825, 4294901760
        %v3092 = vsub.f32 %v825, %v3091
        %3093 = vmatpush.msra.mxu0 %v3092
        %v3094 = vand.u32 %v823, 4294901760
        %v3095 = vsub.f32 %v823, %v3094
        %3096 = vmatpush.msra.mxu0 %v3095
        %v3097 = vand.u32 %v821, 4294901760
        %v3098 = vsub.f32 %v821, %v3097
        %3099 = vmatpush.msra.mxu0 %v3098
        %v3100 = vand.u32 %v819, 4294901760
        %v3101 = vsub.f32 %v819, %v3100
        %3102 = vmatpush.msra.mxu0 %v3101
        %v3103 = vand.u32 %v817, 4294901760
        %v3104 = vsub.f32 %v817, %v3103
        %3105 = vmatpush.msra.mxu0 %v3104
        %v3106 = vand.u32 %v815, 4294901760
        %v3107 = vsub.f32 %v815, %v3106
        %3108 = vmatpush.msra.mxu0 %v3107
        %v3109 = vand.u32 %v813, 4294901760
        %v3110 = vsub.f32 %v813, %v3109
        %3111 = vmatpush.msra.mxu0 %v3110
        %v3112 = vand.u32 %v738, 4294901760
        %v3113 = vsub.f32 %v738, %v3112
        %3114 = vmatmul.f32.gmra.mxu0 %v3113
        %v3115 = vpop.f32.mrf.mxu0
        %v3116 = vadd.f32 %v3062, %v3115
        %3117 = vdwg.mxu0
        %v3118 = vand.u32 %v843, 4294901760
        %3119 = vmatpush.msra.mxu0 %v3118
        %v3120 = vand.u32 %v841, 4294901760
        %3121 = vmatpush.msra.mxu0 %v3120
        %v3122 = vand.u32 %v839, 4294901760
        %3123 = vmatpush.msra.mxu0 %v3122
        %v3124 = vand.u32 %v837, 4294901760
        %3125 = vmatpush.msra.mxu0 %v3124
        %v3126 = vand.u32 %v835, 4294901760
        %3127 = vmatpush.msra.mxu0 %v3126
        %v3128 = vand.u32 %v833, 4294901760
        %3129 = vmatpush.msra.mxu0 %v3128
        %v3130 = vand.u32 %v831, 4294901760
        %3131 = vmatpush.msra.mxu0 %v3130
        %v3132 = vand.u32 %v829, 4294901760
        %3133 = vmatpush.msra.mxu0 %v3132
        %v3134 = vand.u32 %v827, 4294901760
        %3135 = vmatpush.msra.mxu0 %v3134
        %v3136 = vand.u32 %v825, 4294901760
        %3137 = vmatpush.msra.mxu0 %v3136
        %v3138 = vand.u32 %v823, 4294901760
        %3139 = vmatpush.msra.mxu0 %v3138
        %v3140 = vand.u32 %v821, 4294901760
        %3141 = vmatpush.msra.mxu0 %v3140
        %v3142 = vand.u32 %v819, 4294901760
        %3143 = vmatpush.msra.mxu0 %v3142
        %v3144 = vand.u32 %v817, 4294901760
        %3145 = vmatpush.msra.mxu0 %v3144
        %v3146 = vand.u32 %v815, 4294901760
        %3147 = vmatpush.msra.mxu0 %v3146
        %v3148 = vand.u32 %v813, 4294901760
        %3149 = vmatpush.msra.mxu0 %v3148
        %v3150 = vand.u32 %v738, 4294901760
        %v3151 = vsub.f32 %v738, %v3150
        %v3152 = vand.u32 %v3151, 4294901760
        %3153 = vmatmul.f32.gmra.mxu0 %v3152
        %v3154 = vpop.f32.mrf.mxu0
        %v3155 = vadd.f32 %v3116, %v3154
        %3156 = vdwg.mxu0
        %v3157 = vand.u32 %v843, 4294901760
        %v3158 = vsub.f32 %v843, %v3157
        %v3159 = vand.u32 %v3158, 4294901760
        %3160 = vmatpush.msra.mxu0 %v3159
        %v3161 = vand.u32 %v841, 4294901760
        %v3162 = vsub.f32 %v841, %v3161
        %v3163 = vand.u32 %v3162, 4294901760
        %3164 = vmatpush.msra.mxu0 %v3163
        %v3165 = vand.u32 %v839, 4294901760
        %v3166 = vsub.f32 %v839, %v3165
        %v3167 = vand.u32 %v3166, 4294901760
        %3168 = vmatpush.msra.mxu0 %v3167
        %v3169 = vand.u32 %v837, 4294901760
        %v3170 = vsub.f32 %v837, %v3169
        %v3171 = vand.u32 %v3170, 4294901760
        %3172 = vmatpush.msra.mxu0 %v3171
        %v3173 = vand.u32 %v835, 4294901760
        %v3174 = vsub.f32 %v835, %v3173
        %v3175 = vand.u32 %v3174, 4294901760
        %3176 = vmatpush.msra.mxu0 %v3175
        %v3177 = vand.u32 %v833, 4294901760
        %v3178 = vsub.f32 %v833, %v3177
        %v3179 = vand.u32 %v3178, 4294901760
        %3180 = vmatpush.msra.mxu0 %v3179
        %v3181 = vand.u32 %v831, 4294901760
        %v3182 = vsub.f32 %v831, %v3181
        %v3183 = vand.u32 %v3182, 4294901760
        %3184 = vmatpush.msra.mxu0 %v3183
        %v3185 = vand.u32 %v829, 4294901760
        %v3186 = vsub.f32 %v829, %v3185
        %v3187 = vand.u32 %v3186, 4294901760
        %3188 = vmatpush.msra.mxu0 %v3187
        %v3189 = vand.u32 %v827, 4294901760
        %v3190 = vsub.f32 %v827, %v3189
        %v3191 = vand.u32 %v3190, 4294901760
        %3192 = vmatpush.msra.mxu0 %v3191
        %v3193 = vand.u32 %v825, 4294901760
        %v3194 = vsub.f32 %v825, %v3193
        %v3195 = vand.u32 %v3194, 4294901760
        %3196 = vmatpush.msra.mxu0 %v3195
        %v3197 = vand.u32 %v823, 4294901760
        %v3198 = vsub.f32 %v823, %v3197
        %v3199 = vand.u32 %v3198, 4294901760
        %3200 = vmatpush.msra.mxu0 %v3199
        %v3201 = vand.u32 %v821, 4294901760
        %v3202 = vsub.f32 %v821, %v3201
        %v3203 = vand.u32 %v3202, 4294901760
        %3204 = vmatpush.msra.mxu0 %v3203
        %v3205 = vand.u32 %v819, 4294901760
        %v3206 = vsub.f32 %v819, %v3205
        %v3207 = vand.u32 %v3206, 4294901760
        %3208 = vmatpush.msra.mxu0 %v3207
        %v3209 = vand.u32 %v817, 4294901760
        %v3210 = vsub.f32 %v817, %v3209
        %v3211 = vand.u32 %v3210, 4294901760
        %3212 = vmatpush.msra.mxu0 %v3211
        %v3213 = vand.u32 %v815, 4294901760
        %v3214 = vsub.f32 %v815, %v3213
        %v3215 = vand.u32 %v3214, 4294901760
        %3216 = vmatpush.msra.mxu0 %v3215
        %v3217 = vand.u32 %v813, 4294901760
        %v3218 = vsub.f32 %v813, %v3217
        %v3219 = vand.u32 %v3218, 4294901760
        %3220 = vmatpush.msra.mxu0 %v3219
        %v3221 = vand.u32 %v738, 4294901760
        %3222 = vmatmul.f32.gmra.mxu0 %v3221
        %v3223 = vpop.f32.mrf.mxu0
        %v3224 = vadd.f32 %v3155, %v3223
        %3225 = vdwg.mxu0
        %v3226 = vand.u32 %v843, 4294901760
        %3227 = vmatpush.msra.mxu0 %v3226
        %v3228 = vand.u32 %v841, 4294901760
        %3229 = vmatpush.msra.mxu0 %v3228
        %v3230 = vand.u32 %v839, 4294901760
        %3231 = vmatpush.msra.mxu0 %v3230
        %v3232 = vand.u32 %v837, 4294901760
        %3233 = vmatpush.msra.mxu0 %v3232
        %v3234 = vand.u32 %v835, 4294901760
        %3235 = vmatpush.msra.mxu0 %v3234
        %v3236 = vand.u32 %v833, 4294901760
        %3237 = vmatpush.msra.mxu0 %v3236
        %v3238 = vand.u32 %v831, 4294901760
        %3239 = vmatpush.msra.mxu0 %v3238
        %v3240 = vand.u32 %v829, 4294901760
        %3241 = vmatpush.msra.mxu0 %v3240
        %v3242 = vand.u32 %v827, 4294901760
        %3243 = vmatpush.msra.mxu0 %v3242
        %v3244 = vand.u32 %v825, 4294901760
        %3245 = vmatpush.msra.mxu0 %v3244
        %v3246 = vand.u32 %v823, 4294901760
        %3247 = vmatpush.msra.mxu0 %v3246
        %v3248 = vand.u32 %v821, 4294901760
        %3249 = vmatpush.msra.mxu0 %v3248
        %v3250 = vand.u32 %v819, 4294901760
        %3251 = vmatpush.msra.mxu0 %v3250
        %v3252 = vand.u32 %v817, 4294901760
        %3253 = vmatpush.msra.mxu0 %v3252
        %v3254 = vand.u32 %v815, 4294901760
        %3255 = vmatpush.msra.mxu0 %v3254
        %v3256 = vand.u32 %v813, 4294901760
        %3257 = vmatpush.msra.mxu0 %v3256
        %v3258 = vand.u32 %v738, 4294901760
        %3259 = vmatmul.f32.gmra.mxu0 %v3258
        %v3260 = vpop.f32.mrf.mxu0
        %v3261 = vadd.f32 %v3224, %v3260
        %3262 = vdwg.mxu0
        %v3263 = vand.u32 %v875, 4294901760
        %3264 = vmatpush.msra.mxu0 %v3263
        %v3265 = vand.u32 %v873, 4294901760
        %3266 = vmatpush.msra.mxu0 %v3265
        %v3267 = vand.u32 %v871, 4294901760
        %3268 = vmatpush.msra.mxu0 %v3267
        %v3269 = vand.u32 %v869, 4294901760
        %3270 = vmatpush.msra.mxu0 %v3269
        %v3271 = vand.u32 %v867, 4294901760
        %3272 = vmatpush.msra.mxu0 %v3271
        %v3273 = vand.u32 %v865, 4294901760
        %3274 = vmatpush.msra.mxu0 %v3273
        %v3275 = vand.u32 %v863, 4294901760
        %3276 = vmatpush.msra.mxu0 %v3275
        %v3277 = vand.u32 %v861, 4294901760
        %3278 = vmatpush.msra.mxu0 %v3277
        %v3279 = vand.u32 %v859, 4294901760
        %3280 = vmatpush.msra.mxu0 %v3279
        %v3281 = vand.u32 %v857, 4294901760
        %3282 = vmatpush.msra.mxu0 %v3281
        %v3283 = vand.u32 %v855, 4294901760
        %3284 = vmatpush.msra.mxu0 %v3283
        %v3285 = vand.u32 %v853, 4294901760
        %3286 = vmatpush.msra.mxu0 %v3285
        %v3287 = vand.u32 %v851, 4294901760
        %3288 = vmatpush.msra.mxu0 %v3287
        %v3289 = vand.u32 %v849, 4294901760
        %3290 = vmatpush.msra.mxu0 %v3289
        %v3291 = vand.u32 %v847, 4294901760
        %3292 = vmatpush.msra.mxu0 %v3291
        %v3293 = vand.u32 %v845, 4294901760
        %3294 = vmatpush.msra.mxu0 %v3293
        %v3295 = vand.u32 %v747, 4294901760
        %v3296 = vsub.f32 %v747, %v3295
        %v3297 = vand.u32 %v3296, 4294901760
        %v3298 = vsub.f32 %v3296, %v3297
        %v3299 = vand.u32 %v3298, 4294901760
        %3300 = vmatmul.f32.gmra.mxu0 %v3299
        %v3301 = vpop.f32.mrf.mxu0
        %v3302 = vadd.f32 %v3261, %v3301
        %3303 = vdwg.mxu0
        %v3304 = vand.u32 %v875, 4294901760
        %v3305 = vsub.f32 %v875, %v3304
        %v3306 = vand.u32 %v3305, 4294901760
        %v3307 = vsub.f32 %v3305, %v3306
        %v3308 = vand.u32 %v3307, 4294901760
        %3309 = vmatpush.msra.mxu0 %v3308
        %v3310 = vand.u32 %v873, 4294901760
        %v3311 = vsub.f32 %v873, %v3310
        %v3312 = vand.u32 %v3311, 4294901760
        %v3313 = vsub.f32 %v3311, %v3312
        %v3314 = vand.u32 %v3313, 4294901760
        %3315 = vmatpush.msra.mxu0 %v3314
        %v3316 = vand.u32 %v871, 4294901760
        %v3317 = vsub.f32 %v871, %v3316
        %v3318 = vand.u32 %v3317, 4294901760
        %v3319 = vsub.f32 %v3317, %v3318
        %v3320 = vand.u32 %v3319, 4294901760
        %3321 = vmatpush.msra.mxu0 %v3320
        %v3322 = vand.u32 %v869, 4294901760
        %v3323 = vsub.f32 %v869, %v3322
        %v3324 = vand.u32 %v3323, 4294901760
        %v3325 = vsub.f32 %v3323, %v3324
        %v3326 = vand.u32 %v3325, 4294901760
        %3327 = vmatpush.msra.mxu0 %v3326
        %v3328 = vand.u32 %v867, 4294901760
        %v3329 = vsub.f32 %v867, %v3328
        %v3330 = vand.u32 %v3329, 4294901760
        %v3331 = vsub.f32 %v3329, %v3330
        %v3332 = vand.u32 %v3331, 4294901760
        %3333 = vmatpush.msra.mxu0 %v3332
        %v3334 = vand.u32 %v865, 4294901760
        %v3335 = vsub.f32 %v865, %v3334
        %v3336 = vand.u32 %v3335, 4294901760
        %v3337 = vsub.f32 %v3335, %v3336
        %v3338 = vand.u32 %v3337, 4294901760
        %3339 = vmatpush.msra.mxu0 %v3338
        %v3340 = vand.u32 %v863, 4294901760
        %v3341 = vsub.f32 %v863, %v3340
        %v3342 = vand.u32 %v3341, 4294901760
        %v3343 = vsub.f32 %v3341, %v3342
        %v3344 = vand.u32 %v3343, 4294901760
        %3345 = vmatpush.msra.mxu0 %v3344
        %v3346 = vand.u32 %v861, 4294901760
        %v3347 = vsub.f32 %v861, %v3346
        %v3348 = vand.u32 %v3347, 4294901760
        %v3349 = vsub.f32 %v3347, %v3348
        %v3350 = vand.u32 %v3349, 4294901760
        %3351 = vmatpush.msra.mxu0 %v3350
        %v3352 = vand.u32 %v859, 4294901760
        %v3353 = vsub.f32 %v859, %v3352
        %v3354 = vand.u32 %v3353, 4294901760
        %v3355 = vsub.f32 %v3353, %v3354
        %v3356 = vand.u32 %v3355, 4294901760
        %3357 = vmatpush.msra.mxu0 %v3356
        %v3358 = vand.u32 %v857, 4294901760
        %v3359 = vsub.f32 %v857, %v3358
        %v3360 = vand.u32 %v3359, 4294901760
        %v3361 = vsub.f32 %v3359, %v3360
        %v3362 = vand.u32 %v3361, 4294901760
        %3363 = vmatpush.msra.mxu0 %v3362
        %v3364 = vand.u32 %v855, 4294901760
        %v3365 = vsub.f32 %v855, %v3364
        %v3366 = vand.u32 %v3365, 4294901760
        %v3367 = vsub.f32 %v3365, %v3366
        %v3368 = vand.u32 %v3367, 4294901760
        %3369 = vmatpush.msra.mxu0 %v3368
        %v3370 = vand.u32 %v853, 4294901760
        %v3371 = vsub.f32 %v853, %v3370
        %v3372 = vand.u32 %v3371, 4294901760
        %v3373 = vsub.f32 %v3371, %v3372
        %v3374 = vand.u32 %v3373, 4294901760
        %3375 = vmatpush.msra.mxu0 %v3374
        %v3376 = vand.u32 %v851, 4294901760
        %v3377 = vsub.f32 %v851, %v3376
        %v3378 = vand.u32 %v3377, 4294901760
        %v3379 = vsub.f32 %v3377, %v3378
        %v3380 = vand.u32 %v3379, 4294901760
        %3381 = vmatpush.msra.mxu0 %v3380
        %v3382 = vand.u32 %v849, 4294901760
        %v3383 = vsub.f32 %v849, %v3382
        %v3384 = vand.u32 %v3383, 4294901760
        %v3385 = vsub.f32 %v3383, %v3384
        %v3386 = vand.u32 %v3385, 4294901760
        %3387 = vmatpush.msra.mxu0 %v3386
        %v3388 = vand.u32 %v847, 4294901760
        %v3389 = vsub.f32 %v847, %v3388
        %v3390 = vand.u32 %v3389, 4294901760
        %v3391 = vsub.f32 %v3389, %v3390
        %v3392 = vand.u32 %v3391, 4294901760
        %3393 = vmatpush.msra.mxu0 %v3392
        %v3394 = vand.u32 %v845, 4294901760
        %v3395 = vsub.f32 %v845, %v3394
        %v3396 = vand.u32 %v3395, 4294901760
        %v3397 = vsub.f32 %v3395, %v3396
        %v3398 = vand.u32 %v3397, 4294901760
        %3399 = vmatpush.msra.mxu0 %v3398
        %v3400 = vand.u32 %v747, 4294901760
        %3401 = vmatmul.f32.gmra.mxu0 %v3400
        %v3402 = vpop.f32.mrf.mxu0
        %v3403 = vadd.f32 %v3302, %v3402
        %3404 = vdwg.mxu0
        %v3405 = vand.u32 %v875, 4294901760
        %v3406 = vsub.f32 %v875, %v3405
        %3407 = vmatpush.msra.mxu0 %v3406
        %v3408 = vand.u32 %v873, 4294901760
        %v3409 = vsub.f32 %v873, %v3408
        %3410 = vmatpush.msra.mxu0 %v3409
        %v3411 = vand.u32 %v871, 4294901760
        %v3412 = vsub.f32 %v871, %v3411
        %3413 = vmatpush.msra.mxu0 %v3412
        %v3414 = vand.u32 %v869, 4294901760
        %v3415 = vsub.f32 %v869, %v3414
        %3416 = vmatpush.msra.mxu0 %v3415
        %v3417 = vand.u32 %v867, 4294901760
        %v3418 = vsub.f32 %v867, %v3417
        %3419 = vmatpush.msra.mxu0 %v3418
        %v3420 = vand.u32 %v865, 4294901760
        %v3421 = vsub.f32 %v865, %v3420
        %3422 = vmatpush.msra.mxu0 %v3421
        %v3423 = vand.u32 %v863, 4294901760
        %v3424 = vsub.f32 %v863, %v3423
        %3425 = vmatpush.msra.mxu0 %v3424
        %v3426 = vand.u32 %v861, 4294901760
        %v3427 = vsub.f32 %v861, %v3426
        %3428 = vmatpush.msra.mxu0 %v3427
        %v3429 = vand.u32 %v859, 4294901760
        %v3430 = vsub.f32 %v859, %v3429
        %3431 = vmatpush.msra.mxu0 %v3430
        %v3432 = vand.u32 %v857, 4294901760
        %v3433 = vsub.f32 %v857, %v3432
        %3434 = vmatpush.msra.mxu0 %v3433
        %v3435 = vand.u32 %v855, 4294901760
        %v3436 = vsub.f32 %v855, %v3435
        %3437 = vmatpush.msra.mxu0 %v3436
        %v3438 = vand.u32 %v853, 4294901760
        %v3439 = vsub.f32 %v853, %v3438
        %3440 = vmatpush.msra.mxu0 %v3439
        %v3441 = vand.u32 %v851, 4294901760
        %v3442 = vsub.f32 %v851, %v3441
        %3443 = vmatpush.msra.mxu0 %v3442
        %v3444 = vand.u32 %v849, 4294901760
        %v3445 = vsub.f32 %v849, %v3444
        %3446 = vmatpush.msra.mxu0 %v3445
        %v3447 = vand.u32 %v847, 4294901760
        %v3448 = vsub.f32 %v847, %v3447
        %3449 = vmatpush.msra.mxu0 %v3448
        %v3450 = vand.u32 %v845, 4294901760
        %v3451 = vsub.f32 %v845, %v3450
        %3452 = vmatpush.msra.mxu0 %v3451
        %v3453 = vand.u32 %v747, 4294901760
        %v3454 = vsub.f32 %v747, %v3453
        %3455 = vmatmul.f32.gmra.mxu0 %v3454
        %v3456 = vpop.f32.mrf.mxu0
        %v3457 = vadd.f32 %v3403, %v3456
        %3458 = vdwg.mxu0
        %v3459 = vand.u32 %v875, 4294901760
        %3460 = vmatpush.msra.mxu0 %v3459
        %v3461 = vand.u32 %v873, 4294901760
        %3462 = vmatpush.msra.mxu0 %v3461
        %v3463 = vand.u32 %v871, 4294901760
        %3464 = vmatpush.msra.mxu0 %v3463
        %v3465 = vand.u32 %v869, 4294901760
        %3466 = vmatpush.msra.mxu0 %v3465
        %v3467 = vand.u32 %v867, 4294901760
        %3468 = vmatpush.msra.mxu0 %v3467
        %v3469 = vand.u32 %v865, 4294901760
        %3470 = vmatpush.msra.mxu0 %v3469
        %v3471 = vand.u32 %v863, 4294901760
        %3472 = vmatpush.msra.mxu0 %v3471
        %v3473 = vand.u32 %v861, 4294901760
        %3474 = vmatpush.msra.mxu0 %v3473
        %v3475 = vand.u32 %v859, 4294901760
        %3476 = vmatpush.msra.mxu0 %v3475
        %v3477 = vand.u32 %v857, 4294901760
        %3478 = vmatpush.msra.mxu0 %v3477
        %v3479 = vand.u32 %v855, 4294901760
        %3480 = vmatpush.msra.mxu0 %v3479
        %v3481 = vand.u32 %v853, 4294901760
        %3482 = vmatpush.msra.mxu0 %v3481
        %v3483 = vand.u32 %v851, 4294901760
        %3484 = vmatpush.msra.mxu0 %v3483
        %v3485 = vand.u32 %v849, 4294901760
        %3486 = vmatpush.msra.mxu0 %v3485
        %v3487 = vand.u32 %v847, 4294901760
        %3488 = vmatpush.msra.mxu0 %v3487
        %v3489 = vand.u32 %v845, 4294901760
        %3490 = vmatpush.msra.mxu0 %v3489
        %v3491 = vand.u32 %v747, 4294901760
        %v3492 = vsub.f32 %v747, %v3491
        %v3493 = vand.u32 %v3492, 4294901760
        %3494 = vmatmul.f32.gmra.mxu0 %v3493
        %v3495 = vpop.f32.mrf.mxu0
        %v3496 = vadd.f32 %v3457, %v3495
        %3497 = vdwg.mxu0
        %v3498 = vand.u32 %v875, 4294901760
        %v3499 = vsub.f32 %v875, %v3498
        %v3500 = vand.u32 %v3499, 4294901760
        %3501 = vmatpush.msra.mxu0 %v3500
        %v3502 = vand.u32 %v873, 4294901760
        %v3503 = vsub.f32 %v873, %v3502
        %v3504 = vand.u32 %v3503, 4294901760
        %3505 = vmatpush.msra.mxu0 %v3504
        %v3506 = vand.u32 %v871, 4294901760
        %v3507 = vsub.f32 %v871, %v3506
        %v3508 = vand.u32 %v3507, 4294901760
        %3509 = vmatpush.msra.mxu0 %v3508
        %v3510 = vand.u32 %v869, 4294901760
        %v3511 = vsub.f32 %v869, %v3510
        %v3512 = vand.u32 %v3511, 4294901760
        %3513 = vmatpush.msra.mxu0 %v3512
        %v3514 = vand.u32 %v867, 4294901760
        %v3515 = vsub.f32 %v867, %v3514
        %v3516 = vand.u32 %v3515, 4294901760
        %3517 = vmatpush.msra.mxu0 %v3516
        %v3518 = vand.u32 %v865, 4294901760
        %v3519 = vsub.f32 %v865, %v3518
        %v3520 = vand.u32 %v3519, 4294901760
        %3521 = vmatpush.msra.mxu0 %v3520
        %v3522 = vand.u32 %v863, 4294901760
        %v3523 = vsub.f32 %v863, %v3522
        %v3524 = vand.u32 %v3523, 4294901760
        %3525 = vmatpush.msra.mxu0 %v3524
        %v3526 = vand.u32 %v861, 4294901760
        %v3527 = vsub.f32 %v861, %v3526
        %v3528 = vand.u32 %v3527, 4294901760
        %3529 = vmatpush.msra.mxu0 %v3528
        %v3530 = vand.u32 %v859, 4294901760
        %v3531 = vsub.f32 %v859, %v3530
        %v3532 = vand.u32 %v3531, 4294901760
        %3533 = vmatpush.msra.mxu0 %v3532
        %v3534 = vand.u32 %v857, 4294901760
        %v3535 = vsub.f32 %v857, %v3534
        %v3536 = vand.u32 %v3535, 4294901760
        %3537 = vmatpush.msra.mxu0 %v3536
        %v3538 = vand.u32 %v855, 4294901760
        %v3539 = vsub.f32 %v855, %v3538
        %v3540 = vand.u32 %v3539, 4294901760
        %3541 = vmatpush.msra.mxu0 %v3540
        %v3542 = vand.u32 %v853, 4294901760
        %v3543 = vsub.f32 %v853, %v3542
        %v3544 = vand.u32 %v3543, 4294901760
        %3545 = vmatpush.msra.mxu0 %v3544
        %v3546 = vand.u32 %v851, 4294901760
        %v3547 = vsub.f32 %v851, %v3546
        %v3548 = vand.u32 %v3547, 4294901760
        %3549 = vmatpush.msra.mxu0 %v3548
        %v3550 = vand.u32 %v849, 4294901760
        %v3551 = vsub.f32 %v849, %v3550
        %v3552 = vand.u32 %v3551, 4294901760
        %3553 = vmatpush.msra.mxu0 %v3552
        %v3554 = vand.u32 %v847, 4294901760
        %v3555 = vsub.f32 %v847, %v3554
        %v3556 = vand.u32 %v3555, 4294901760
        %3557 = vmatpush.msra.mxu0 %v3556
        %v3558 = vand.u32 %v845, 4294901760
        %v3559 = vsub.f32 %v845, %v3558
        %v3560 = vand.u32 %v3559, 4294901760
        %3561 = vmatpush.msra.mxu0 %v3560
        %v3562 = vand.u32 %v747, 4294901760
        %3563 = vmatmul.f32.gmra.mxu0 %v3562
        %v3564 = vpop.f32.mrf.mxu0
        %v3565 = vadd.f32 %v3496, %v3564
        %3566 = vdwg.mxu0
        %v3567 = vand.u32 %v875, 4294901760
        %3568 = vmatpush.msra.mxu0 %v3567
        %v3569 = vand.u32 %v873, 4294901760
        %3570 = vmatpush.msra.mxu0 %v3569
        %v3571 = vand.u32 %v871, 4294901760
        %3572 = vmatpush.msra.mxu0 %v3571
        %v3573 = vand.u32 %v869, 4294901760
        %3574 = vmatpush.msra.mxu0 %v3573
        %v3575 = vand.u32 %v867, 4294901760
        %3576 = vmatpush.msra.mxu0 %v3575
        %v3577 = vand.u32 %v865, 4294901760
        %3578 = vmatpush.msra.mxu0 %v3577
        %v3579 = vand.u32 %v863, 4294901760
        %3580 = vmatpush.msra.mxu0 %v3579
        %v3581 = vand.u32 %v861, 4294901760
        %3582 = vmatpush.msra.mxu0 %v3581
        %v3583 = vand.u32 %v859, 4294901760
        %3584 = vmatpush.msra.mxu0 %v3583
        %v3585 = vand.u32 %v857, 4294901760
        %3586 = vmatpush.msra.mxu0 %v3585
        %v3587 = vand.u32 %v855, 4294901760
        %3588 = vmatpush.msra.mxu0 %v3587
        %v3589 = vand.u32 %v853, 4294901760
        %3590 = vmatpush.msra.mxu0 %v3589
        %v3591 = vand.u32 %v851, 4294901760
        %3592 = vmatpush.msra.mxu0 %v3591
        %v3593 = vand.u32 %v849, 4294901760
        %3594 = vmatpush.msra.mxu0 %v3593
        %v3595 = vand.u32 %v847, 4294901760
        %3596 = vmatpush.msra.mxu0 %v3595
        %v3597 = vand.u32 %v845, 4294901760
        %3598 = vmatpush.msra.mxu0 %v3597
        %v3599 = vand.u32 %v747, 4294901760
        %3600 = vmatmul.f32.gmra.mxu0 %v3599
        %v3601 = vpop.f32.mrf.mxu0
        %v3602 = vadd.f32 %v3565, %v3601
        %3603 = vdwg.mxu0
        %v3604 = vxor.u32 %v2238, 2147483648
        %v3605 = vxor.u32 %v3602, 2147483648
        %v3606 = vmul.f32 %v3604, 1.442695
        %v3607 = vpow.pop %v3606
        %v3608 = vmul.f32 %v3605, 1.442695
        %v3609 = vpow.pop %v3608
        %v3610 = vadd.f32 %v3607, 1.0
        %v3611 = vadd.f32 %v3609, 1.0
        %v3612 = vrcp.pop %v3610
        %v3613 = vmul.f32 %v3610, %v3612
        %v3614 = vsub.f32 1.0, %v3613
        %v3615 = vmul.f32 %v3612, %v3614
        %v3616 = vadd.f32 %v3612, %v3615
        %vm3617 = vweird.f32 %v3610
        %vm3618 = vweird.f32 %v3612
        %vm3619 = vmor %vm3617, %vm3618
        %v3620 = vsel %vm3619, %v3612, %v3616
        %v3621 = vand.u32 2147483647, %v3610
        %vm3622 = vcmp.eq.f32.partialorder %v3621, 8.507059e+37
        %v3623 = vand.u32 %v3610, 2147483648
        %v3624 = vor.u32 1.1754944e-38, %v3623
        %v3625 = vsel %vm3622, %v3624, %v3620
        %v3626 = vmul.f32 1.0, %v3625
        %v3627 = vrcp.pop %v3611
        %v3628 = vmul.f32 %v3611, %v3627
        %v3629 = vsub.f32 1.0, %v3628
        %v3630 = vmul.f32 %v3627, %v3629
        %v3631 = vadd.f32 %v3627, %v3630
        %vm3632 = vweird.f32 %v3611
        %vm3633 = vweird.f32 %v3627
        %vm3634 = vmor %vm3632, %vm3633
        %v3635 = vsel %vm3634, %v3627, %v3631
        %v3636 = vand.u32 2147483647, %v3611
        %vm3637 = vcmp.eq.f32.partialorder %v3636, 8.507059e+37
        %v3638 = vand.u32 %v3611, 2147483648
        %v3639 = vor.u32 1.1754944e-38, %v3638
        %v3640 = vsel %vm3637, %v3639, %v3635
        %v3641 = vmul.f32 1.0, %v3640
        %v3642 = vperm.slane %v3626, 0
        %v3643 = vperm.slane %v3641, 0
        %v3644 = vmul.f32 %v702, %v3642
        %v3645 = vmul.f32 %v703, %v3643
        %v3646 = vmul.f32 %v704, %v3642
        %v3647 = vmul.f32 %v705, %v3643
        %v3648 = vmul.f32 %v706, %v3642
        %v3649 = vmul.f32 %v707, %v3643
        %v3650 = vmul.f32 %v708, %v3642
        %v3651 = vmul.f32 %v709, %v3643
        %3652 = vst [vmem:[%s234] sm:$0xff] %v3644
        %3653 = vst [vmem:[%s234 + $0x8] sm:$0xff] %v3645
        %3654 = vst [vmem:[%s234 + $0x10] sm:$0xff] %v3646
        %3655 = vst [vmem:[%s234 + $0x18] sm:$0xff] %v3647
        %3656 = vst [vmem:[%s234 + $0x20] sm:$0xff] %v3648
        %3657 = vst [vmem:[%s234 + $0x28] sm:$0xff] %v3649
        %3658 = vst [vmem:[%s234 + $0x30] sm:$0xff] %v3650
        %3659 = vst [vmem:[%s234 + $0x38] sm:$0xff] %v3651
        %s3660 = sand.u32 %s119, 1
        %s3661 = scalar_lea.sflag [#allocation4], %s3660
        %s3662 = sand.u32 %s119, 1
        %s3663 = smul.addr %s3662, 64
        %s3664 = scalar_lea.vmem [#allocation7], %s3663
        // Predicated region
        $region45: #{tpu_custom_call.1} parent=35 // pred_check
          %p3665 = pneg %p129
        $region46: #{tpu_custom_call.1} parent=35 // pred_check_branch
          %3667 = sbr.rel (%p3665) target = $region48
        $region47: #{tpu_custom_call.1} parent=35 // pred_region
          %3669 = vsyncadd %s3661, 0
          %s3670 = smul.addr %s22, 8
          %s3671 = smul.addr %s3670, 8
          %s3672 = scalar_lea.hbm %s4, %s3671
          %s3673 = sshll.u32 %s3664, 4
          %s3674 = int_to_ptr.vmem [resolvable:$true] %s3673
          %s3675 = sshll.u32 %s3672, 4
          %s3676 = int_to_ptr.hbm [resolvable:$true] %s3675
          %3681 = dma.vmem_to_hbm [thread:$0]  %s3674, 1024, %s3676, %s3661, 256, 256, 16
        $region48: #{tpu_custom_call.1} parent=35 // pred_fallthru
          _
      $region36: #{tpu_custom_call.1} parent=5 // pred_fallthru
        _
      %p3682 = scmp.le.s32.totalorder 2, %s17
      // Predicated region
      $region49: #{tpu_custom_call.1} parent=5 // pred_check
        %p3683 = pneg %p3682
      $region50: #{tpu_custom_call.1} parent=5 // pred_check_branch
        %3685 = sbr.rel (%p3683) target = $region52
      $region51: #{tpu_custom_call.1} parent=5 // pred_region
        %s3686 = ssub.s32 %s17, 2
        // Predicated region
        $region53: #{tpu_custom_call.1} parent=51 // pred_check
          %p3687 = pneg %p135
        $region54: #{tpu_custom_call.1} parent=51 // pred_check_branch
          %3689 = sbr.rel (%p3687) target = $region56
        $region55: #{tpu_custom_call.1} parent=51 // pred_region
          %s3690 = sand.u32 %s120, 1
          %s3691 = scalar_lea.sflag [#allocation4], %s3690
          %s3692 = sand.u32 %s120, 1
          %s3693 = smul.addr %s3692, 64
          %s3694 = scalar_lea.vmem [#allocation7], %s3693
          %3696 = dma.done %s3691, 1024
        $region56: #{tpu_custom_call.1} parent=51 // pred_fallthru
          _
      $region52: #{tpu_custom_call.1} parent=5 // pred_fallthru
        _
    $region6: #{tpu_custom_call.1} parent=1 // loop_footer
      %s21 = sadd.s32 1, %s17
    $region7: #{tpu_custom_call.1} parent=1 // loop_footer_branch
      %16 = sbr.rel target = $region3
    $region8: #{tpu_custom_call.1} parent=1 // loop_exit
      _
    %3697 = vsyncpa [#allocation3], 1
    %s3698 = scalar_lea.sflag [#allocation3], 1
    %3699 = vsyncpa %s3698, 1
    %3700 = vsyncpa [#allocation6], 1
    %3701 = vsyncpa [#allocation4], 1
    %s3702 = scalar_lea.sflag [#allocation4], 1
    %3703 = vsyncpa %s3702, 1

</llo_original>
